<compile_context>
chip_gen: v7x
topology: tpu7x:2x2x1
jax: 0.10.0
libtpu: 0.0.40
codegen_flags: <defaults>
</compile_context>

<pallas_src>
import functools
import math

import jax
import jax.numpy as jnp
from jax.experimental import pallas as pl
from jax.experimental.pallas import tpu as pltpu


def _round_up(x, m):
    return (x + m - 1) // m * m


# ---------------- Pallas kernel: fused embedding-gather + 4-layer MLP ----------------
def mlp_kernel(ids_ref, emb_ref,
               w1_ref, b1_ref, w2_ref, b2_ref, w3_ref, b3_ref, w4_ref, b4_ref,
               o_ref):
    L = ids_ref.shape[0]          # sequence length
    TM = ids_ref.shape[1]         # batch tile (rows)
    V = emb_ref.shape[0]          # padded vocab
    E = emb_ref.shape[1]          # embedding dim

    emb_tbl = emb_ref[...]                                        # (V, E) bf16, VMEM-resident
    token_iota = jax.lax.broadcasted_iota(jnp.int32, (TM, V), 1)  # lane iota over vocab

    # fc1 fused with the embedding gather:
    #   flatten(embed(ids)) @ W1 == sum_l onehot(ids[:, l]) @ emb @ W1[l*E:(l+1)*E, :]
    h = None
    for l in range(L):                                            # static unroll, L is small
        ids_l = ids_ref[l]                                        # (TM, 1) int32
        onehot = (token_iota == ids_l).astype(jnp.bfloat16)       # (TM, V)
        gath = jnp.dot(onehot, emb_tbl,                           # exact bf16 row selection
                       preferred_element_type=jnp.float32)        # (TM, E) f32
        part = jnp.dot(gath.astype(jnp.bfloat16),
                       w1_ref[l * E:(l + 1) * E, :],
                       preferred_element_type=jnp.float32)        # (TM, 512) f32
        h = part if h is None else h + part
    h = jnp.maximum(h + b1_ref[...], 0.0)                         # f32 epilogue

    # fc2 + ReLU
    h = jnp.dot(h.astype(jnp.bfloat16), w2_ref[...],
                preferred_element_type=jnp.float32)
    h = jnp.maximum(h + b2_ref[...], 0.0)

    # fc3 + ReLU
    h = jnp.dot(h.astype(jnp.bfloat16), w3_ref[...],
                preferred_element_type=jnp.float32)
    h = jnp.maximum(h + b3_ref[...], 0.0)

    # fc4 (lane-padded to 128, no activation)
    h = jnp.dot(h.astype(jnp.bfloat16), w4_ref[...],
                preferred_element_type=jnp.float32) + b4_ref[...]
    o_ref[...] = h.astype(o_ref.dtype)                            # (TM, 128) lane-dense store


# ---------------- Parameter init (matches module __init__ semantics) ----------------
def xavier_uniform(key, fan_in, fan_out):
    # torch.nn.init.xavier_uniform_ on (out, in); sampled directly in (in, out) layout.
    bound = math.sqrt(6.0 / (fan_in + fan_out))
    return jax.random.uniform(key, (fan_in, fan_out), jnp.float32, -bound, bound)


def init_params(key, seq_len, vocab_size, embedding_dim, output_dim):
    d_in = embedding_dim * seq_len
    k = jax.random.split(key, 5)
    return {
        "emb": jax.random.normal(k[0], (vocab_size, embedding_dim), jnp.float32),
        "w1": xavier_uniform(k[1], d_in, 512), "b1": jnp.zeros((1, 512), jnp.float32),
        "w2": xavier_uniform(k[2], 512, 256),  "b2": jnp.zeros((1, 256), jnp.float32),
        "w3": xavier_uniform(k[3], 256, 128),  "b3": jnp.zeros((1, 128), jnp.float32),
        "w4": xavier_uniform(k[4], 128, output_dim),
        "b4": jnp.zeros((1, output_dim), jnp.float32),
    }


def pack_params(params):
    """Kernel-facing packing: bf16 weights, vocab padded to 128, fc4 padded to 128 lanes."""
    V, E = params["emb"].shape
    V_pad = _round_up(V, 128)
    emb = jnp.zeros((V_pad, E), jnp.bfloat16).at[:V].set(params["emb"].astype(jnp.bfloat16))

    out_dim = params["w4"].shape[1]
    out_pad = _round_up(max(out_dim, 128), 128)
    w4 = jnp.zeros((params["w4"].shape[0], out_pad), jnp.bfloat16)
    w4 = w4.at[:, :out_dim].set(params["w4"].astype(jnp.bfloat16))
    b4 = jnp.zeros((1, out_pad), jnp.float32).at[:, :out_dim].set(params["b4"])

    return {
        "emb": emb,
        "w1": params["w1"].astype(jnp.bfloat16), "b1": params["b1"],
        "w2": params["w2"].astype(jnp.bfloat16), "b2": params["b2"],
        "w3": params["w3"].astype(jnp.bfloat16), "b3": params["b3"],
        "w4": w4, "b4": b4,
    }


# ---------------- Forward wrapper ----------------
@functools.partial(jax.jit, static_argnames=("out_dim",))
def mlp_classifier_forward(input_ids, packed, out_dim):
    B, L = input_ids.shape
    TM = 256 if B >= 256 else _round_up(B, 8)          # >=8 rows for sublane-aligned M
    B_pad = _round_up(B, TM)

    ids = jnp.pad(input_ids.astype(jnp.int32), ((0, B_pad - B), (0, 0)))
    ids_k = jnp.transpose(ids, (1, 0))[:, :, None]     # (L, B_pad, 1) -> ids_ref[l] loads

    emb = packed["emb"]
    V_pad, E = emb.shape
    D_in, H1 = packed["w1"].shape
    H2 = packed["w2"].shape[1]
    H3 = packed["w3"].shape[1]
    OUT_PAD = packed["w4"].shape[1]

    operands = (ids_k, emb,
                packed["w1"], packed["b1"], packed["w2"], packed["b2"],
                packed["w3"], packed["b3"], packed["w4"], packed["b4"])
    flops = 2 * B_pad * (L * (V_pad * E + E * H1) + H1 * H2 + H2 * H3 + H3 * OUT_PAD)
    bytes_accessed = sum(x.size * x.dtype.itemsize for x in operands) + B_pad * OUT_PAD * 4

    out = pl.pallas_call(
        mlp_kernel,
        out_shape=jax.ShapeDtypeStruct((B_pad, OUT_PAD), jnp.float32),
        grid=(B_pad // TM,),
        in_specs=[
            pl.BlockSpec((L, TM, 1), lambda i: (0, i, 0)),    # token ids (batch-tiled)
            pl.BlockSpec((V_pad, E), lambda i: (0, 0)),       # embedding table (resident)
            pl.BlockSpec((D_in, H1), lambda i: (0, 0)),       # w1
            pl.BlockSpec((1, H1), lambda i: (0, 0)),          # b1
            pl.BlockSpec((H1, H2), lambda i: (0, 0)),         # w2
            pl.BlockSpec((1, H2), lambda i: (0, 0)),          # b2
            pl.BlockSpec((H2, H3), lambda i: (0, 0)),         # w3
            pl.BlockSpec((1, H3), lambda i: (0, 0)),          # b3
            pl.BlockSpec((H3, OUT_PAD), lambda i: (0, 0)),    # w4 (lane-padded)
            pl.BlockSpec((1, OUT_PAD), lambda i: (0, 0)),     # b4 (lane-padded)
        ],
        out_specs=pl.BlockSpec((TM, OUT_PAD), lambda i: (i, 0)),
        compiler_params=pltpu.CompilerParams(
            dimension_semantics=("parallel",)),               # batch tiles shard across TCs
        cost_estimate=pl.CostEstimate(flops=flops, transcendentals=0,
                                      bytes_accessed=bytes_accessed),
    )(*operands)
    return out[:B, :out_dim]


if __name__ == "__main__":
    # Small shapes consistent with the module's forward:
    #   batch=2, seq (MAX_LENGTH)=8, embedding_dim=32, vocab=1000, output_dim=9
    # Hidden widths 512/256/128 exactly as in the PyTorch module.
    B, L, E, V, OUT = 2, 8, 32, 1000, 9

    key = jax.random.PRNGKey(0)
    pkey, dkey = jax.random.split(key)

    params = init_params(pkey, seq_len=L, vocab_size=V,
                         embedding_dim=E, output_dim=OUT)
    packed = pack_params(params)
    input_ids = jax.random.randint(dkey, (B, L), 0, V, dtype=jnp.int32)
    # Note: like the kernel, ids are assumed in-range [0, V) (nn.Embedding would raise on OOB).

    logits = mlp_classifier_forward(input_ids, packed, out_dim=OUT)
    jax.block_until_ready(logits)

    # Reference with identical numerics (bf16 weights, f32 accumulation, f32 epilogue).
    def dense(x, w, b, relu):
        y = jnp.dot(x.astype(jnp.bfloat16), w.astype(jnp.bfloat16),
                    preferred_element_type=jnp.float32) + b
        return jnp.maximum(y, 0.0) if relu else y

    emb_bf = params["emb"].astype(jnp.bfloat16)
    x_ref = jnp.take(emb_bf, input_ids, axis=0).reshape(B, -1)
    h = dense(x_ref, params["w1"], params["b1"], True)
    h = dense(h, params["w2"], params["b2"], True)
    h = dense(h, params["w3"], params["b3"], True)
    ref = dense(h, params["w4"], params["b4"], False)

    assert logits.shape == (B, OUT)
    assert jnp.allclose(logits, ref, atol=2e-3, rtol=2e-3)

    print("KERNEL_OK")
</pallas_src>

<mosaic_0001>
module attributes {stable_mosaic.version = 11 : i64} {
  func.func @mlp_kernel(%arg0: i32, %arg1: memref<8x8x1xi32, #tpu.memory_space<vmem>>, %arg2: memref<1024x32xbf16, #tpu.memory_space<vmem>>, %arg3: memref<256x512xbf16, #tpu.memory_space<vmem>>, %arg4: memref<1x512xf32, #tpu.memory_space<vmem>>, %arg5: memref<512x256xbf16, #tpu.memory_space<vmem>>, %arg6: memref<1x256xf32, #tpu.memory_space<vmem>>, %arg7: memref<256x128xbf16, #tpu.memory_space<vmem>>, %arg8: memref<1x128xf32, #tpu.memory_space<vmem>>, %arg9: memref<128x128xbf16, #tpu.memory_space<vmem>>, %arg10: memref<1x128xf32, #tpu.memory_space<vmem>>, %arg11: memref<8x128xf32, #tpu.memory_space<vmem>>) attributes {dimension_semantics = [#tpu.dimension_semantics<parallel>], iteration_bounds = array<i64: 1>, scalar_prefetch = 0 : i64, scratch_operands = 0 : i64, tpu.core_type = #tpu.core_type<tc>, window_params = [{transform_indices = @transform_0, window_bounds = array<i64: 8, 8, 1>}, {pipeline_mode = #tpu.pipeline_mode<synchronous>, transform_indices = @transform_1, window_bounds = array<i64: 1024, 32>}, {pipeline_mode = #tpu.pipeline_mode<synchronous>, transform_indices = @transform_2, window_bounds = array<i64: 256, 512>}, {pipeline_mode = #tpu.pipeline_mode<synchronous>, transform_indices = @transform_3, window_bounds = array<i64: 1, 512>}, {pipeline_mode = #tpu.pipeline_mode<synchronous>, transform_indices = @transform_4, window_bounds = array<i64: 512, 256>}, {pipeline_mode = #tpu.pipeline_mode<synchronous>, transform_indices = @transform_5, window_bounds = array<i64: 1, 256>}, {pipeline_mode = #tpu.pipeline_mode<synchronous>, transform_indices = @transform_6, window_bounds = array<i64: 256, 128>}, {pipeline_mode = #tpu.pipeline_mode<synchronous>, transform_indices = @transform_7, window_bounds = array<i64: 1, 128>}, {pipeline_mode = #tpu.pipeline_mode<synchronous>, transform_indices = @transform_8, window_bounds = array<i64: 128, 128>}, {pipeline_mode = #tpu.pipeline_mode<synchronous>, transform_indices = @transform_9, window_bounds = array<i64: 1, 128>}, {transform_indices = @transform_10, window_bounds = array<i64: 8, 128>}]} {
    %c0 = arith.constant 0 : index
    %c0_0 = arith.constant 0 : index
    %0 = vector.load %arg2[%c0, %c0_0] : memref<1024x32xbf16, #tpu.memory_space<vmem>>, vector<1024x32xbf16>
    %1 = tpu.iota {dimensions = array<i32: 1>} : vector<8x1024xi32>
    %c0_1 = arith.constant 0 : index
    %c0_2 = arith.constant 0 : index
    %c0_3 = arith.constant 0 : index
    %2 = vector.load %arg1[%c0_1, %c0_2, %c0_3] : memref<8x8x1xi32, #tpu.memory_space<vmem>>, vector<1x8x1xi32>
    %3 = vector.shape_cast %2 : vector<1x8x1xi32> to vector<8x1xi32>
    %4 = vector.broadcast %3 : vector<8x1xi32> to vector<8x1024xi32>
    %5 = arith.cmpi eq, %1, %4 : vector<8x1024xi32>
    %6 = arith.extui %5 : vector<8x1024xi1> to vector<8x1024xi32>
    %7 = arith.sitofp %6 : vector<8x1024xi32> to vector<8x1024xf32>
    %8 = arith.truncf %7 : vector<8x1024xf32> to vector<8x1024xbf16>
    %cst = arith.constant dense<0.000000e+00> : vector<8x32xf32>
    %9 = tpu.matmul %8, %0, %cst {dimension_numbers = #tpu.dot_dimension_numbers<[1], [0], [0], [1], [0, 0, 1, 1], [], []>} : vector<8x1024xbf16>, vector<1024x32xbf16>, vector<8x32xf32> -> vector<8x32xf32>
    %10 = arith.truncf %9 : vector<8x32xf32> to vector<8x32xbf16>
    %c0_4 = arith.constant 0 : index
    %c0_5 = arith.constant 0 : index
    %11 = vector.load %arg3[%c0_4, %c0_5] : memref<256x512xbf16, #tpu.memory_space<vmem>>, vector<32x512xbf16>
    %cst_6 = arith.constant dense<0.000000e+00> : vector<8x512xf32>
    %12 = tpu.matmul %10, %11, %cst_6 {dimension_numbers = #tpu.dot_dimension_numbers<[1], [0], [0], [1], [0, 0, 1, 1], [], []>} : vector<8x32xbf16>, vector<32x512xbf16>, vector<8x512xf32> -> vector<8x512xf32>
    %c1 = arith.constant 1 : index
    %c0_7 = arith.constant 0 : index
    %c0_8 = arith.constant 0 : index
    %13 = vector.load %arg1[%c1, %c0_7, %c0_8] : memref<8x8x1xi32, #tpu.memory_space<vmem>>, vector<1x8x1xi32>
    %14 = vector.shape_cast %13 : vector<1x8x1xi32> to vector<8x1xi32>
    %15 = vector.broadcast %14 : vector<8x1xi32> to vector<8x1024xi32>
    %16 = arith.cmpi eq, %1, %15 : vector<8x1024xi32>
    %17 = arith.extui %16 : vector<8x1024xi1> to vector<8x1024xi32>
    %18 = arith.sitofp %17 : vector<8x1024xi32> to vector<8x1024xf32>
    %19 = arith.truncf %18 : vector<8x1024xf32> to vector<8x1024xbf16>
    %cst_9 = arith.constant dense<0.000000e+00> : vector<8x32xf32>
    %20 = tpu.matmul %19, %0, %cst_9 {dimension_numbers = #tpu.dot_dimension_numbers<[1], [0], [0], [1], [0, 0, 1, 1], [], []>} : vector<8x1024xbf16>, vector<1024x32xbf16>, vector<8x32xf32> -> vector<8x32xf32>
    %21 = arith.truncf %20 : vector<8x32xf32> to vector<8x32xbf16>
    %c32 = arith.constant 32 : index
    %c0_10 = arith.constant 0 : index
    %22 = vector.load %arg3[%c32, %c0_10] : memref<256x512xbf16, #tpu.memory_space<vmem>>, vector<32x512xbf16>
    %cst_11 = arith.constant dense<0.000000e+00> : vector<8x512xf32>
    %23 = tpu.matmul %21, %22, %cst_11 {dimension_numbers = #tpu.dot_dimension_numbers<[1], [0], [0], [1], [0, 0, 1, 1], [], []>} : vector<8x32xbf16>, vector<32x512xbf16>, vector<8x512xf32> -> vector<8x512xf32>
    %24 = arith.addf %12, %23 : vector<8x512xf32>
    %c2 = arith.constant 2 : index
    %c0_12 = arith.constant 0 : index
    %c0_13 = arith.constant 0 : index
    %25 = vector.load %arg1[%c2, %c0_12, %c0_13] : memref<8x8x1xi32, #tpu.memory_space<vmem>>, vector<1x8x1xi32>
    %26 = vector.shape_cast %25 : vector<1x8x1xi32> to vector<8x1xi32>
    %27 = vector.broadcast %26 : vector<8x1xi32> to vector<8x1024xi32>
    %28 = arith.cmpi eq, %1, %27 : vector<8x1024xi32>
    %29 = arith.extui %28 : vector<8x1024xi1> to vector<8x1024xi32>
    %30 = arith.sitofp %29 : vector<8x1024xi32> to vector<8x1024xf32>
    %31 = arith.truncf %30 : vector<8x1024xf32> to vector<8x1024xbf16>
    %cst_14 = arith.constant dense<0.000000e+00> : vector<8x32xf32>
    %32 = tpu.matmul %31, %0, %cst_14 {dimension_numbers = #tpu.dot_dimension_numbers<[1], [0], [0], [1], [0, 0, 1, 1], [], []>} : vector<8x1024xbf16>, vector<1024x32xbf16>, vector<8x32xf32> -> vector<8x32xf32>
    %33 = arith.truncf %32 : vector<8x32xf32> to vector<8x32xbf16>
    %c64 = arith.constant 64 : index
    %c0_15 = arith.constant 0 : index
    %34 = vector.load %arg3[%c64, %c0_15] : memref<256x512xbf16, #tpu.memory_space<vmem>>, vector<32x512xbf16>
    %cst_16 = arith.constant dense<0.000000e+00> : vector<8x512xf32>
    %35 = tpu.matmul %33, %34, %cst_16 {dimension_numbers = #tpu.dot_dimension_numbers<[1], [0], [0], [1], [0, 0, 1, 1], [], []>} : vector<8x32xbf16>, vector<32x512xbf16>, vector<8x512xf32> -> vector<8x512xf32>
    %36 = arith.addf %24, %35 : vector<8x512xf32>
    %c3 = arith.constant 3 : index
    %c0_17 = arith.constant 0 : index
    %c0_18 = arith.constant 0 : index
    %37 = vector.load %arg1[%c3, %c0_17, %c0_18] : memref<8x8x1xi32, #tpu.memory_space<vmem>>, vector<1x8x1xi32>
    %38 = vector.shape_cast %37 : vector<1x8x1xi32> to vector<8x1xi32>
    %39 = vector.broadcast %38 : vector<8x1xi32> to vector<8x1024xi32>
    %40 = arith.cmpi eq, %1, %39 : vector<8x1024xi32>
    %41 = arith.extui %40 : vector<8x1024xi1> to vector<8x1024xi32>
    %42 = arith.sitofp %41 : vector<8x1024xi32> to vector<8x1024xf32>
    %43 = arith.truncf %42 : vector<8x1024xf32> to vector<8x1024xbf16>
    %cst_19 = arith.constant dense<0.000000e+00> : vector<8x32xf32>
    %44 = tpu.matmul %43, %0, %cst_19 {dimension_numbers = #tpu.dot_dimension_numbers<[1], [0], [0], [1], [0, 0, 1, 1], [], []>} : vector<8x1024xbf16>, vector<1024x32xbf16>, vector<8x32xf32> -> vector<8x32xf32>
    %45 = arith.truncf %44 : vector<8x32xf32> to vector<8x32xbf16>
    %c96 = arith.constant 96 : index
    %c0_20 = arith.constant 0 : index
    %46 = vector.load %arg3[%c96, %c0_20] : memref<256x512xbf16, #tpu.memory_space<vmem>>, vector<32x512xbf16>
    %cst_21 = arith.constant dense<0.000000e+00> : vector<8x512xf32>
    %47 = tpu.matmul %45, %46, %cst_21 {dimension_numbers = #tpu.dot_dimension_numbers<[1], [0], [0], [1], [0, 0, 1, 1], [], []>} : vector<8x32xbf16>, vector<32x512xbf16>, vector<8x512xf32> -> vector<8x512xf32>
    %48 = arith.addf %36, %47 : vector<8x512xf32>
    %c4 = arith.constant 4 : index
    %c0_22 = arith.constant 0 : index
    %c0_23 = arith.constant 0 : index
    %49 = vector.load %arg1[%c4, %c0_22, %c0_23] : memref<8x8x1xi32, #tpu.memory_space<vmem>>, vector<1x8x1xi32>
    %50 = vector.shape_cast %49 : vector<1x8x1xi32> to vector<8x1xi32>
    %51 = vector.broadcast %50 : vector<8x1xi32> to vector<8x1024xi32>
    %52 = arith.cmpi eq, %1, %51 : vector<8x1024xi32>
    %53 = arith.extui %52 : vector<8x1024xi1> to vector<8x1024xi32>
    %54 = arith.sitofp %53 : vector<8x1024xi32> to vector<8x1024xf32>
    %55 = arith.truncf %54 : vector<8x1024xf32> to vector<8x1024xbf16>
    %cst_24 = arith.constant dense<0.000000e+00> : vector<8x32xf32>
    %56 = tpu.matmul %55, %0, %cst_24 {dimension_numbers = #tpu.dot_dimension_numbers<[1], [0], [0], [1], [0, 0, 1, 1], [], []>} : vector<8x1024xbf16>, vector<1024x32xbf16>, vector<8x32xf32> -> vector<8x32xf32>
    %57 = arith.truncf %56 : vector<8x32xf32> to vector<8x32xbf16>
    %c128 = arith.constant 128 : index
    %c0_25 = arith.constant 0 : index
    %58 = vector.load %arg3[%c128, %c0_25] : memref<256x512xbf16, #tpu.memory_space<vmem>>, vector<32x512xbf16>
    %cst_26 = arith.constant dense<0.000000e+00> : vector<8x512xf32>
    %59 = tpu.matmul %57, %58, %cst_26 {dimension_numbers = #tpu.dot_dimension_numbers<[1], [0], [0], [1], [0, 0, 1, 1], [], []>} : vector<8x32xbf16>, vector<32x512xbf16>, vector<8x512xf32> -> vector<8x512xf32>
    %60 = arith.addf %48, %59 : vector<8x512xf32>
    %c5 = arith.constant 5 : index
    %c0_27 = arith.constant 0 : index
    %c0_28 = arith.constant 0 : index
    %61 = vector.load %arg1[%c5, %c0_27, %c0_28] : memref<8x8x1xi32, #tpu.memory_space<vmem>>, vector<1x8x1xi32>
    %62 = vector.shape_cast %61 : vector<1x8x1xi32> to vector<8x1xi32>
    %63 = vector.broadcast %62 : vector<8x1xi32> to vector<8x1024xi32>
    %64 = arith.cmpi eq, %1, %63 : vector<8x1024xi32>
    %65 = arith.extui %64 : vector<8x1024xi1> to vector<8x1024xi32>
    %66 = arith.sitofp %65 : vector<8x1024xi32> to vector<8x1024xf32>
    %67 = arith.truncf %66 : vector<8x1024xf32> to vector<8x1024xbf16>
    %cst_29 = arith.constant dense<0.000000e+00> : vector<8x32xf32>
    %68 = tpu.matmul %67, %0, %cst_29 {dimension_numbers = #tpu.dot_dimension_numbers<[1], [0], [0], [1], [0, 0, 1, 1], [], []>} : vector<8x1024xbf16>, vector<1024x32xbf16>, vector<8x32xf32> -> vector<8x32xf32>
    %69 = arith.truncf %68 : vector<8x32xf32> to vector<8x32xbf16>
    %c160 = arith.constant 160 : index
    %c0_30 = arith.constant 0 : index
    %70 = vector.load %arg3[%c160, %c0_30] : memref<256x512xbf16, #tpu.memory_space<vmem>>, vector<32x512xbf16>
    %cst_31 = arith.constant dense<0.000000e+00> : vector<8x512xf32>
    %71 = tpu.matmul %69, %70, %cst_31 {dimension_numbers = #tpu.dot_dimension_numbers<[1], [0], [0], [1], [0, 0, 1, 1], [], []>} : vector<8x32xbf16>, vector<32x512xbf16>, vector<8x512xf32> -> vector<8x512xf32>
    %72 = arith.addf %60, %71 : vector<8x512xf32>
    %c6 = arith.constant 6 : index
    %c0_32 = arith.constant 0 : index
    %c0_33 = arith.constant 0 : index
    %73 = vector.load %arg1[%c6, %c0_32, %c0_33] : memref<8x8x1xi32, #tpu.memory_space<vmem>>, vector<1x8x1xi32>
    %74 = vector.shape_cast %73 : vector<1x8x1xi32> to vector<8x1xi32>
    %75 = vector.broadcast %74 : vector<8x1xi32> to vector<8x1024xi32>
    %76 = arith.cmpi eq, %1, %75 : vector<8x1024xi32>
    %77 = arith.extui %76 : vector<8x1024xi1> to vector<8x1024xi32>
    %78 = arith.sitofp %77 : vector<8x1024xi32> to vector<8x1024xf32>
    %79 = arith.truncf %78 : vector<8x1024xf32> to vector<8x1024xbf16>
    %cst_34 = arith.constant dense<0.000000e+00> : vector<8x32xf32>
    %80 = tpu.matmul %79, %0, %cst_34 {dimension_numbers = #tpu.dot_dimension_numbers<[1], [0], [0], [1], [0, 0, 1, 1], [], []>} : vector<8x1024xbf16>, vector<1024x32xbf16>, vector<8x32xf32> -> vector<8x32xf32>
    %81 = arith.truncf %80 : vector<8x32xf32> to vector<8x32xbf16>
    %c192 = arith.constant 192 : index
    %c0_35 = arith.constant 0 : index
    %82 = vector.load %arg3[%c192, %c0_35] : memref<256x512xbf16, #tpu.memory_space<vmem>>, vector<32x512xbf16>
    %cst_36 = arith.constant dense<0.000000e+00> : vector<8x512xf32>
    %83 = tpu.matmul %81, %82, %cst_36 {dimension_numbers = #tpu.dot_dimension_numbers<[1], [0], [0], [1], [0, 0, 1, 1], [], []>} : vector<8x32xbf16>, vector<32x512xbf16>, vector<8x512xf32> -> vector<8x512xf32>
    %84 = arith.addf %72, %83 : vector<8x512xf32>
    %c7 = arith.constant 7 : index
    %c0_37 = arith.constant 0 : index
    %c0_38 = arith.constant 0 : index
    %85 = vector.load %arg1[%c7, %c0_37, %c0_38] : memref<8x8x1xi32, #tpu.memory_space<vmem>>, vector<1x8x1xi32>
    %86 = vector.shape_cast %85 : vector<1x8x1xi32> to vector<8x1xi32>
    %87 = vector.broadcast %86 : vector<8x1xi32> to vector<8x1024xi32>
    %88 = arith.cmpi eq, %1, %87 : vector<8x1024xi32>
    %89 = arith.extui %88 : vector<8x1024xi1> to vector<8x1024xi32>
    %90 = arith.sitofp %89 : vector<8x1024xi32> to vector<8x1024xf32>
    %91 = arith.truncf %90 : vector<8x1024xf32> to vector<8x1024xbf16>
    %cst_39 = arith.constant dense<0.000000e+00> : vector<8x32xf32>
    %92 = tpu.matmul %91, %0, %cst_39 {dimension_numbers = #tpu.dot_dimension_numbers<[1], [0], [0], [1], [0, 0, 1, 1], [], []>} : vector<8x1024xbf16>, vector<1024x32xbf16>, vector<8x32xf32> -> vector<8x32xf32>
    %93 = arith.truncf %92 : vector<8x32xf32> to vector<8x32xbf16>
    %c224 = arith.constant 224 : index
    %c0_40 = arith.constant 0 : index
    %94 = vector.load %arg3[%c224, %c0_40] : memref<256x512xbf16, #tpu.memory_space<vmem>>, vector<32x512xbf16>
    %cst_41 = arith.constant dense<0.000000e+00> : vector<8x512xf32>
    %95 = tpu.matmul %93, %94, %cst_41 {dimension_numbers = #tpu.dot_dimension_numbers<[1], [0], [0], [1], [0, 0, 1, 1], [], []>} : vector<8x32xbf16>, vector<32x512xbf16>, vector<8x512xf32> -> vector<8x512xf32>
    %96 = arith.addf %84, %95 : vector<8x512xf32>
    %c0_42 = arith.constant 0 : index
    %c0_43 = arith.constant 0 : index
    %97 = vector.load %arg4[%c0_42, %c0_43] : memref<1x512xf32, #tpu.memory_space<vmem>>, vector<1x512xf32>
    %98 = vector.broadcast %97 : vector<1x512xf32> to vector<8x512xf32>
    %99 = arith.addf %96, %98 : vector<8x512xf32>
    %cst_44 = arith.constant 0.000000e+00 : f32
    %100 = vector.broadcast %cst_44 : f32 to vector<8x512xf32>
    %101 = arith.maximumf %99, %100 : vector<8x512xf32>
    %102 = arith.truncf %101 : vector<8x512xf32> to vector<8x512xbf16>
    %c0_45 = arith.constant 0 : index
    %c0_46 = arith.constant 0 : index
    %103 = vector.load %arg5[%c0_45, %c0_46] : memref<512x256xbf16, #tpu.memory_space<vmem>>, vector<512x256xbf16>
    %cst_47 = arith.constant dense<0.000000e+00> : vector<8x256xf32>
    %104 = tpu.matmul %102, %103, %cst_47 {dimension_numbers = #tpu.dot_dimension_numbers<[1], [0], [0], [1], [0, 0, 1, 1], [], []>} : vector<8x512xbf16>, vector<512x256xbf16>, vector<8x256xf32> -> vector<8x256xf32>
    %c0_48 = arith.constant 0 : index
    %c0_49 = arith.constant 0 : index
    %105 = vector.load %arg6[%c0_48, %c0_49] : memref<1x256xf32, #tpu.memory_space<vmem>>, vector<1x256xf32>
    %106 = vector.broadcast %105 : vector<1x256xf32> to vector<8x256xf32>
    %107 = arith.addf %104, %106 : vector<8x256xf32>
    %cst_50 = arith.constant 0.000000e+00 : f32
    %108 = vector.broadcast %cst_50 : f32 to vector<8x256xf32>
    %109 = arith.maximumf %107, %108 : vector<8x256xf32>
    %110 = arith.truncf %109 : vector<8x256xf32> to vector<8x256xbf16>
    %c0_51 = arith.constant 0 : index
    %c0_52 = arith.constant 0 : index
    %111 = vector.load %arg7[%c0_51, %c0_52] : memref<256x128xbf16, #tpu.memory_space<vmem>>, vector<256x128xbf16>
    %cst_53 = arith.constant dense<0.000000e+00> : vector<8x128xf32>
    %112 = tpu.matmul %110, %111, %cst_53 {dimension_numbers = #tpu.dot_dimension_numbers<[1], [0], [0], [1], [0, 0, 1, 1], [], []>} : vector<8x256xbf16>, vector<256x128xbf16>, vector<8x128xf32> -> vector<8x128xf32>
    %c0_54 = arith.constant 0 : index
    %c0_55 = arith.constant 0 : index
    %113 = vector.load %arg8[%c0_54, %c0_55] : memref<1x128xf32, #tpu.memory_space<vmem>>, vector<1x128xf32>
    %114 = vector.broadcast %113 : vector<1x128xf32> to vector<8x128xf32>
    %115 = arith.addf %112, %114 : vector<8x128xf32>
    %cst_56 = arith.constant 0.000000e+00 : f32
    %116 = vector.broadcast %cst_56 : f32 to vector<8x128xf32>
    %117 = arith.maximumf %115, %116 : vector<8x128xf32>
    %118 = arith.truncf %117 : vector<8x128xf32> to vector<8x128xbf16>
    %c0_57 = arith.constant 0 : index
    %c0_58 = arith.constant 0 : index
    %119 = vector.load %arg9[%c0_57, %c0_58] : memref<128x128xbf16, #tpu.memory_space<vmem>>, vector<128x128xbf16>
    %cst_59 = arith.constant dense<0.000000e+00> : vector<8x128xf32>
    %120 = tpu.matmul %118, %119, %cst_59 {dimension_numbers = #tpu.dot_dimension_numbers<[1], [0], [0], [1], [0, 0, 1, 1], [], []>} : vector<8x128xbf16>, vector<128x128xbf16>, vector<8x128xf32> -> vector<8x128xf32>
    %c0_60 = arith.constant 0 : index
    %c0_61 = arith.constant 0 : index
    %121 = vector.load %arg10[%c0_60, %c0_61] : memref<1x128xf32, #tpu.memory_space<vmem>>, vector<1x128xf32>
    %122 = vector.broadcast %121 : vector<1x128xf32> to vector<8x128xf32>
    %123 = arith.addf %120, %122 : vector<8x128xf32>
    %c0_62 = arith.constant 0 : index
    %c0_63 = arith.constant 0 : index
    %124 = vector.load %arg11[%c0_62, %c0_63] : memref<8x128xf32, #tpu.memory_space<vmem>>, vector<8x128xf32>
    tpu.vector_store %arg11[%c0_62, %c0_63], %123 {strides = array<i32>} : memref<8x128xf32, #tpu.memory_space<vmem>>, vector<8x128xf32>,
    return
  }
  func.func @transform_0(%arg0: i32) -> (i32, i32, i32) {
    %c0_i32 = arith.constant 0 : i32
    %c0_i32_0 = arith.constant 0 : i32
    %c0_i32_1 = arith.constant 0 : i32
    return %c0_i32, %arg0, %c0_i32_0 : i32, i32, i32
  }
  func.func @transform_1(%arg0: i32) -> (i32, i32) {
    %c0_i32 = arith.constant 0 : i32
    %c0_i32_0 = arith.constant 0 : i32
    %c0_i32_1 = arith.constant 0 : i32
    return %c0_i32, %c0_i32_0 : i32, i32
  }
  func.func @transform_2(%arg0: i32) -> (i32, i32) {
    %c0_i32 = arith.constant 0 : i32
    %c0_i32_0 = arith.constant 0 : i32
    %c0_i32_1 = arith.constant 0 : i32
    return %c0_i32, %c0_i32_0 : i32, i32
  }
  func.func @transform_3(%arg0: i32) -> (i32, i32) {
    %c0_i32 = arith.constant 0 : i32
    %c0_i32_0 = arith.constant 0 : i32
    %c0_i32_1 = arith.constant 0 : i32
    return %c0_i32, %c0_i32_0 : i32, i32
  }
  func.func @transform_4(%arg0: i32) -> (i32, i32) {
    %c0_i32 = arith.constant 0 : i32
    %c0_i32_0 = arith.constant 0 : i32
    %c0_i32_1 = arith.constant 0 : i32
    return %c0_i32, %c0_i32_0 : i32, i32
  }
  func.func @transform_5(%arg0: i32) -> (i32, i32) {
    %c0_i32 = arith.constant 0 : i32
    %c0_i32_0 = arith.constant 0 : i32
    %c0_i32_1 = arith.constant 0 : i32
    return %c0_i32, %c0_i32_0 : i32, i32
  }
  func.func @transform_6(%arg0: i32) -> (i32, i32) {
    %c0_i32 = arith.constant 0 : i32
    %c0_i32_0 = arith.constant 0 : i32
    %c0_i32_1 = arith.constant 0 : i32
    return %c0_i32, %c0_i32_0 : i32, i32
  }
  func.func @transform_7(%arg0: i32) -> (i32, i32) {
    %c0_i32 = arith.constant 0 : i32
    %c0_i32_0 = arith.constant 0 : i32
    %c0_i32_1 = arith.constant 0 : i32
    return %c0_i32, %c0_i32_0 : i32, i32
  }
  func.func @transform_8(%arg0: i32) -> (i32, i32) {
    %c0_i32 = arith.constant 0 : i32
    %c0_i32_0 = arith.constant 0 : i32
    %c0_i32_1 = arith.constant 0 : i32
    return %c0_i32, %c0_i32_0 : i32, i32
  }
  func.func @transform_9(%arg0: i32) -> (i32, i32) {
    %c0_i32 = arith.constant 0 : i32
    %c0_i32_0 = arith.constant 0 : i32
    %c0_i32_1 = arith.constant 0 : i32
    return %c0_i32, %c0_i32_0 : i32, i32
  }
  func.func @transform_10(%arg0: i32) -> (i32, i32) {
    %c0_i32 = arith.constant 0 : i32
    %c0_i32_0 = arith.constant 0 : i32
    return %arg0, %c0_i32 : i32, i32
  }
}

</mosaic_0001>

<llo_original>
// kernel: mlp_classifier_forward.1
$region0: #{mlp_classifier_forward.1}
  #allocation0 [shape = 'u32[]', space=smem, size = 0x4, offset = 0x4, fixed_abs, tag = 'smem constant byte address 0x4 - core index']
  #allocation1 [shape = 'u32[144,128]{1,0:T(1,128)}', space=vmem, size = 0x12000, scoped, tag = 'internal scratch']
  %s0 = inlined_call_operand.vmem [shape: s32[8,8,1], index: 0, kind: input, shape index: {}]
  %s1 = inlined_call_operand.vmem [shape: bf16[1024,32], index: 1, kind: input, shape index: {}]
  %s2 = inlined_call_operand.vmem [shape: bf16[256,512], index: 2, kind: input, shape index: {}]
  %s3 = inlined_call_operand.vmem [shape: f32[1,512], index: 3, kind: input, shape index: {}]
  %s4 = inlined_call_operand.hbm [shape: bf16[512,256], index: 4, kind: input, shape index: {}]
  %s5 = inlined_call_operand.vmem [shape: f32[1,256], index: 5, kind: input, shape index: {}]
  %s6 = inlined_call_operand.vmem [shape: bf16[256,128], index: 6, kind: input, shape index: {}]
  %s7 = inlined_call_operand.vmem [shape: f32[1,128], index: 7, kind: input, shape index: {}]
  %s8 = inlined_call_operand.vmem [shape: bf16[128,128], index: 8, kind: input, shape index: {}]
  %s9 = inlined_call_operand.vmem [shape: f32[1,128], index: 9, kind: input, shape index: {}]
  %s10 = inlined_call_operand.vmem [shape: f32[8,128], index: 10, kind: output, shape index: {}]
  %s11 = sld [smem:[#allocation0]]
  $region54: #{mlp_classifier_forward.1} parent=0
    _
  %s13 = ssub.s32 1, %s11
  %s14 = scalar_select 0, %s13, %s11
  $region1: #{mlp_classifier_forward.1} parent=0
    #allocation2 [shape = 'u8[262144]{0}', space=vmem, size = 0x40000, scoped, tag = 'input window, operand 4, single buffered']
    #allocation3 [shape = 's32[1]{0}', space=sflag, size = 0x4, scoped, tag = 'scoped memory for mlp_classifier_forward.1']
    %15 = vsyncpa [#allocation3], 0
    // Predicated region
    $region2: #{mlp_classifier_forward.1} parent=1 // pred_check
      _
    $region3: #{mlp_classifier_forward.1} parent=1 // pred_check_branch
      %17 = sbr.rel (0) target = $region5
    $region4: #{mlp_classifier_forward.1} parent=1 // pred_region
      _
    $region5: #{mlp_classifier_forward.1} parent=1 // pred_fallthru
      _
    // Predicated region
    $region6: #{mlp_classifier_forward.1} parent=1 // pred_check
      _
    $region7: #{mlp_classifier_forward.1} parent=1 // pred_check_branch
      %19 = sbr.rel (0) target = $region9
    $region8: #{mlp_classifier_forward.1} parent=1 // pred_region
      _
    $region9: #{mlp_classifier_forward.1} parent=1 // pred_fallthru
      _
    // Predicated region
    $region10: #{mlp_classifier_forward.1} parent=1 // pred_check
      _
    $region11: #{mlp_classifier_forward.1} parent=1 // pred_check_branch
      %21 = sbr.rel (0) target = $region13
    $region12: #{mlp_classifier_forward.1} parent=1 // pred_region
      _
    $region13: #{mlp_classifier_forward.1} parent=1 // pred_fallthru
      _
    // Predicated region
    $region14: #{mlp_classifier_forward.1} parent=1 // pred_check
      _
    $region15: #{mlp_classifier_forward.1} parent=1 // pred_check_branch
      %23 = sbr.rel (0) target = $region17
    $region16: #{mlp_classifier_forward.1} parent=1 // pred_region
      _
    $region17: #{mlp_classifier_forward.1} parent=1 // pred_fallthru
      _
    // Predicated region
    $region18: #{mlp_classifier_forward.1} parent=1 // pred_check
      _
    $region19: #{mlp_classifier_forward.1} parent=1 // pred_check_branch
      %25 = sbr.rel (0) target = $region21
    $region20: #{mlp_classifier_forward.1} parent=1 // pred_region
      %s27 = ssub.s32 8192, 8192
      %28 = vsyncadd [#allocation3], %s27
      %s29 = sshll.u32 [#allocation2], 4
      %s30 = int_to_ptr.vmem [resolvable:$true] %s29
      %35 = dma.hbm_to_vmem [thread:$0]  %s4, 8192, %s30, [#allocation3], 128, 128, 8
    $region21: #{mlp_classifier_forward.1} parent=1 // pred_fallthru
      _
    // Predicated region
    $region22: #{mlp_classifier_forward.1} parent=1 // pred_check
      _
    $region23: #{mlp_classifier_forward.1} parent=1 // pred_check_branch
      %37 = sbr.rel (0) target = $region25
    $region24: #{mlp_classifier_forward.1} parent=1 // pred_region
      _
    $region25: #{mlp_classifier_forward.1} parent=1 // pred_fallthru
      _
    // Predicated region
    $region26: #{mlp_classifier_forward.1} parent=1 // pred_check
      _
    $region27: #{mlp_classifier_forward.1} parent=1 // pred_check_branch
      %39 = sbr.rel (0) target = $region29
    $region28: #{mlp_classifier_forward.1} parent=1 // pred_region
      _
    $region29: #{mlp_classifier_forward.1} parent=1 // pred_fallthru
      _
    // Predicated region
    $region30: #{mlp_classifier_forward.1} parent=1 // pred_check
      _
    $region31: #{mlp_classifier_forward.1} parent=1 // pred_check_branch
      %41 = sbr.rel (0) target = $region33
    $region32: #{mlp_classifier_forward.1} parent=1 // pred_region
      _
    $region33: #{mlp_classifier_forward.1} parent=1 // pred_fallthru
      _
    // Predicated region
    $region34: #{mlp_classifier_forward.1} parent=1 // pred_check
      _
    $region35: #{mlp_classifier_forward.1} parent=1 // pred_check_branch
      %43 = sbr.rel (0) target = $region37
    $region36: #{mlp_classifier_forward.1} parent=1 // pred_region
      _
    $region37: #{mlp_classifier_forward.1} parent=1 // pred_fallthru
      _
    // Predicated region
    $region38: #{mlp_classifier_forward.1} parent=1 // pred_check
      _
    $region39: #{mlp_classifier_forward.1} parent=1 // pred_check_branch
      %45 = sbr.rel (0) target = $region41
    $region40: #{mlp_classifier_forward.1} parent=1 // pred_region
      _
    $region41: #{mlp_classifier_forward.1} parent=1 // pred_fallthru
      _
    // Predicated region
    $region42: #{mlp_classifier_forward.1} parent=1 // pred_check
      _
    $region43: #{mlp_classifier_forward.1} parent=1 // pred_check_branch
      %47 = sbr.rel (0) target = $region45
    $region44: #{mlp_classifier_forward.1} parent=1 // pred_region
      %48 = dma.done [#allocation3], 8192
    $region45: #{mlp_classifier_forward.1} parent=1 // pred_fallthru
      _
    %v50 = vld [vmem:[%s1] sm:$0xf]
    %v51 = vld [vmem:[%s1 + $0x4] sm:$0xf]
    %v52 = vld [vmem:[%s1 + $0x8] sm:$0xf]
    %v53 = vld [vmem:[%s1 + $0xc] sm:$0xf]
    %v54 = vld [vmem:[%s1 + $0x10] sm:$0xf]
    %v55 = vld [vmem:[%s1 + $0x14] sm:$0xf]
    %v56 = vld [vmem:[%s1 + $0x18] sm:$0xf]
    %v57 = vld [vmem:[%s1 + $0x1c] sm:$0xf]
    %v58 = vld [vmem:[%s1 + $0x20] sm:$0xf]
    %v59 = vld [vmem:[%s1 + $0x24] sm:$0xf]
    %v60 = vld [vmem:[%s1 + $0x28] sm:$0xf]
    %v61 = vld [vmem:[%s1 + $0x2c] sm:$0xf]
    %v62 = vld [vmem:[%s1 + $0x30] sm:$0xf]
    %v63 = vld [vmem:[%s1 + $0x34] sm:$0xf]
    %v64 = vld [vmem:[%s1 + $0x38] sm:$0xf]
    %v65 = vld [vmem:[%s1 + $0x3c] sm:$0xf]
    %v66 = vld [vmem:[%s1 + $0x40] sm:$0xf]
    %v67 = vld [vmem:[%s1 + $0x44] sm:$0xf]
    %v68 = vld [vmem:[%s1 + $0x48] sm:$0xf]
    %v69 = vld [vmem:[%s1 + $0x4c] sm:$0xf]
    %v70 = vld [vmem:[%s1 + $0x50] sm:$0xf]
    %v71 = vld [vmem:[%s1 + $0x54] sm:$0xf]
    %v72 = vld [vmem:[%s1 + $0x58] sm:$0xf]
    %v73 = vld [vmem:[%s1 + $0x5c] sm:$0xf]
    %v74 = vld [vmem:[%s1 + $0x60] sm:$0xf]
    %v75 = vld [vmem:[%s1 + $0x64] sm:$0xf]
    %v76 = vld [vmem:[%s1 + $0x68] sm:$0xf]
    %v77 = vld [vmem:[%s1 + $0x6c] sm:$0xf]
    %v78 = vld [vmem:[%s1 + $0x70] sm:$0xf]
    %v79 = vld [vmem:[%s1 + $0x74] sm:$0xf]
    %v80 = vld [vmem:[%s1 + $0x78] sm:$0xf]
    %v81 = vld [vmem:[%s1 + $0x7c] sm:$0xf]
    %v82 = vld [vmem:[%s1 + $0x80] sm:$0xf]
    %v83 = vld [vmem:[%s1 + $0x84] sm:$0xf]
    %v84 = vld [vmem:[%s1 + $0x88] sm:$0xf]
    %v85 = vld [vmem:[%s1 + $0x8c] sm:$0xf]
    %v86 = vld [vmem:[%s1 + $0x90] sm:$0xf]
    %v87 = vld [vmem:[%s1 + $0x94] sm:$0xf]
    %v88 = vld [vmem:[%s1 + $0x98] sm:$0xf]
    %v89 = vld [vmem:[%s1 + $0x9c] sm:$0xf]
    %v90 = vld [vmem:[%s1 + $0xa0] sm:$0xf]
    %v91 = vld [vmem:[%s1 + $0xa4] sm:$0xf]
    %v92 = vld [vmem:[%s1 + $0xa8] sm:$0xf]
    %v93 = vld [vmem:[%s1 + $0xac] sm:$0xf]
    %v94 = vld [vmem:[%s1 + $0xb0] sm:$0xf]
    %v95 = vld [vmem:[%s1 + $0xb4] sm:$0xf]
    %v96 = vld [vmem:[%s1 + $0xb8] sm:$0xf]
    %v97 = vld [vmem:[%s1 + $0xbc] sm:$0xf]
    %v98 = vld [vmem:[%s1 + $0xc0] sm:$0xf]
    %v99 = vld [vmem:[%s1 + $0xc4] sm:$0xf]
    %v100 = vld [vmem:[%s1 + $0xc8] sm:$0xf]
    %v101 = vld [vmem:[%s1 + $0xcc] sm:$0xf]
    %v102 = vld [vmem:[%s1 + $0xd0] sm:$0xf]
    %v103 = vld [vmem:[%s1 + $0xd4] sm:$0xf]
    %v104 = vld [vmem:[%s1 + $0xd8] sm:$0xf]
    %v105 = vld [vmem:[%s1 + $0xdc] sm:$0xf]
    %v106 = vld [vmem:[%s1 + $0xe0] sm:$0xf]
    %v107 = vld [vmem:[%s1 + $0xe4] sm:$0xf]
    %v108 = vld [vmem:[%s1 + $0xe8] sm:$0xf]
    %v109 = vld [vmem:[%s1 + $0xec] sm:$0xf]
    %v110 = vld [vmem:[%s1 + $0xf0] sm:$0xf]
    %v111 = vld [vmem:[%s1 + $0xf4] sm:$0xf]
    %v112 = vld [vmem:[%s1 + $0xf8] sm:$0xf]
    %v113 = vld [vmem:[%s1 + $0xfc] sm:$0xf]
    %v114 = vld [vmem:[%s1 + $0x100] sm:$0xf]
    %v115 = vld [vmem:[%s1 + $0x104] sm:$0xf]
    %v116 = vld [vmem:[%s1 + $0x108] sm:$0xf]
    %v117 = vld [vmem:[%s1 + $0x10c] sm:$0xf]
    %v118 = vld [vmem:[%s1 + $0x110] sm:$0xf]
    %v119 = vld [vmem:[%s1 + $0x114] sm:$0xf]
    %v120 = vld [vmem:[%s1 + $0x118] sm:$0xf]
    %v121 = vld [vmem:[%s1 + $0x11c] sm:$0xf]
    %v122 = vld [vmem:[%s1 + $0x120] sm:$0xf]
    %v123 = vld [vmem:[%s1 + $0x124] sm:$0xf]
    %v124 = vld [vmem:[%s1 + $0x128] sm:$0xf]
    %v125 = vld [vmem:[%s1 + $0x12c] sm:$0xf]
    %v126 = vld [vmem:[%s1 + $0x130] sm:$0xf]
    %v127 = vld [vmem:[%s1 + $0x134] sm:$0xf]
    %v128 = vld [vmem:[%s1 + $0x138] sm:$0xf]
    %v129 = vld [vmem:[%s1 + $0x13c] sm:$0xf]
    %v130 = vld [vmem:[%s1 + $0x140] sm:$0xf]
    %v131 = vld [vmem:[%s1 + $0x144] sm:$0xf]
    %v132 = vld [vmem:[%s1 + $0x148] sm:$0xf]
    %v133 = vld [vmem:[%s1 + $0x14c] sm:$0xf]
    %v134 = vld [vmem:[%s1 + $0x150] sm:$0xf]
    %v135 = vld [vmem:[%s1 + $0x154] sm:$0xf]
    %v136 = vld [vmem:[%s1 + $0x158] sm:$0xf]
    %v137 = vld [vmem:[%s1 + $0x15c] sm:$0xf]
    %v138 = vld [vmem:[%s1 + $0x160] sm:$0xf]
    %v139 = vld [vmem:[%s1 + $0x164] sm:$0xf]
    %v140 = vld [vmem:[%s1 + $0x168] sm:$0xf]
    %v141 = vld [vmem:[%s1 + $0x16c] sm:$0xf]
    %v142 = vld [vmem:[%s1 + $0x170] sm:$0xf]
    %v143 = vld [vmem:[%s1 + $0x174] sm:$0xf]
    %v144 = vld [vmem:[%s1 + $0x178] sm:$0xf]
    %v145 = vld [vmem:[%s1 + $0x17c] sm:$0xf]
    %v146 = vld [vmem:[%s1 + $0x180] sm:$0xf]
    %v147 = vld [vmem:[%s1 + $0x184] sm:$0xf]
    %v148 = vld [vmem:[%s1 + $0x188] sm:$0xf]
    %v149 = vld [vmem:[%s1 + $0x18c] sm:$0xf]
    %v150 = vld [vmem:[%s1 + $0x190] sm:$0xf]
    %v151 = vld [vmem:[%s1 + $0x194] sm:$0xf]
    %v152 = vld [vmem:[%s1 + $0x198] sm:$0xf]
    %v153 = vld [vmem:[%s1 + $0x19c] sm:$0xf]
    %v154 = vld [vmem:[%s1 + $0x1a0] sm:$0xf]
    %v155 = vld [vmem:[%s1 + $0x1a4] sm:$0xf]
    %v156 = vld [vmem:[%s1 + $0x1a8] sm:$0xf]
    %v157 = vld [vmem:[%s1 + $0x1ac] sm:$0xf]
    %v158 = vld [vmem:[%s1 + $0x1b0] sm:$0xf]
    %v159 = vld [vmem:[%s1 + $0x1b4] sm:$0xf]
    %v160 = vld [vmem:[%s1 + $0x1b8] sm:$0xf]
    %v161 = vld [vmem:[%s1 + $0x1bc] sm:$0xf]
    %v162 = vld [vmem:[%s1 + $0x1c0] sm:$0xf]
    %v163 = vld [vmem:[%s1 + $0x1c4] sm:$0xf]
    %v164 = vld [vmem:[%s1 + $0x1c8] sm:$0xf]
    %v165 = vld [vmem:[%s1 + $0x1cc] sm:$0xf]
    %v166 = vld [vmem:[%s1 + $0x1d0] sm:$0xf]
    %v167 = vld [vmem:[%s1 + $0x1d4] sm:$0xf]
    %v168 = vld [vmem:[%s1 + $0x1d8] sm:$0xf]
    %v169 = vld [vmem:[%s1 + $0x1dc] sm:$0xf]
    %v170 = vld [vmem:[%s1 + $0x1e0] sm:$0xf]
    %v171 = vld [vmem:[%s1 + $0x1e4] sm:$0xf]
    %v172 = vld [vmem:[%s1 + $0x1e8] sm:$0xf]
    %v173 = vld [vmem:[%s1 + $0x1ec] sm:$0xf]
    %v174 = vld [vmem:[%s1 + $0x1f0] sm:$0xf]
    %v175 = vld [vmem:[%s1 + $0x1f4] sm:$0xf]
    %v176 = vld [vmem:[%s1 + $0x1f8] sm:$0xf]
    %v177 = vld [vmem:[%s1 + $0x1fc] sm:$0xf]
    %v178 = vlaneseq
    %v179 = vand.u32 %v178, 127
    %v180 = vadd.s32 %v179, 128
    %v181 = vadd.s32 %v179, 256
    %v182 = vadd.s32 %v179, 384
    %v183 = vadd.s32 %v179, 512
    %v184 = vadd.s32 %v179, 640
    %v185 = vadd.s32 %v179, 768
    %v186 = vadd.s32 %v179, 896
    %v187 = vld [vmem:[%s0] sm:$0xff]
    %188 = vset.pattern.permute.xlu0 0
    %189 = vperm.xlu0 %188, %v187
    %v190 = vpop.permute.xlu0 %189
    %vm191 = vcmp.eq.s32.totalorder %v179, %v190
    %vm192 = vcmp.eq.s32.totalorder %v180, %v190
    %vm193 = vcmp.eq.s32.totalorder %v181, %v190
    %vm194 = vcmp.eq.s32.totalorder %v182, %v190
    %vm195 = vcmp.eq.s32.totalorder %v183, %v190
    %vm196 = vcmp.eq.s32.totalorder %v184, %v190
    %vm197 = vcmp.eq.s32.totalorder %v185, %v190
    %vm198 = vcmp.eq.s32.totalorder %v186, %v190
    %v199 = vsel %vm191, 1, 0
    %v200 = vsel %vm192, 1, 0
    %v201 = vsel %vm193, 1, 0
    %v202 = vsel %vm194, 1, 0
    %v203 = vsel %vm195, 1, 0
    %v204 = vsel %vm196, 1, 0
    %v205 = vsel %vm197, 1, 0
    %v206 = vsel %vm198, 1, 0
    %v207 = vcvt.s32.f32 %v199
    %v208 = vcvt.s32.f32 %v200
    %v209 = vcvt.s32.f32 %v201
    %v210 = vcvt.s32.f32 %v202
    %v211 = vcvt.s32.f32 %v203
    %v212 = vcvt.s32.f32 %v204
    %v213 = vcvt.s32.f32 %v205
    %v214 = vcvt.s32.f32 %v206
    %v215 = vpack.c.bf16 %v207, %v207
    %v216 = vpack.c.bf16 %v208, %v208
    %v217 = vpack.c.bf16 %v209, %v209
    %v218 = vpack.c.bf16 %v210, %v210
    %v219 = vpack.c.bf16 %v211, %v211
    %v220 = vpack.c.bf16 %v212, %v212
    %v221 = vpack.c.bf16 %v213, %v213
    %v222 = vpack.c.bf16 %v214, %v214
    %v351 = vunpack.c.l.b16 %v50
    %v352 = vunpack.c.l.b16 %v51
    %v353 = vunpack.c.l.b16 %v52
    %v354 = vunpack.c.l.b16 %v53
    %v355 = vunpack.c.l.b16 %v54
    %v356 = vunpack.c.l.b16 %v55
    %v357 = vunpack.c.l.b16 %v56
    %v358 = vunpack.c.l.b16 %v57
    %v359 = vunpack.c.l.b16 %v58
    %v360 = vunpack.c.l.b16 %v59
    %v361 = vunpack.c.l.b16 %v60
    %v362 = vunpack.c.l.b16 %v61
    %v363 = vunpack.c.l.b16 %v62
    %v364 = vunpack.c.l.b16 %v63
    %v365 = vunpack.c.l.b16 %v64
    %v366 = vunpack.c.l.b16 %v65
    %v367 = vunpack.c.l.b16 %v66
    %v368 = vunpack.c.l.b16 %v67
    %v369 = vunpack.c.l.b16 %v68
    %v370 = vunpack.c.l.b16 %v69
    %v371 = vunpack.c.l.b16 %v70
    %v372 = vunpack.c.l.b16 %v71
    %v373 = vunpack.c.l.b16 %v72
    %v374 = vunpack.c.l.b16 %v73
    %v375 = vunpack.c.l.b16 %v74
    %v376 = vunpack.c.l.b16 %v75
    %v377 = vunpack.c.l.b16 %v76
    %v378 = vunpack.c.l.b16 %v77
    %v379 = vunpack.c.l.b16 %v78
    %v380 = vunpack.c.l.b16 %v79
    %v381 = vunpack.c.l.b16 %v80
    %v382 = vunpack.c.l.b16 %v81
    %v383 = vunpack.c.l.b16 %v82
    %v384 = vunpack.c.l.b16 %v83
    %v385 = vunpack.c.l.b16 %v84
    %v386 = vunpack.c.l.b16 %v85
    %v387 = vunpack.c.l.b16 %v86
    %v388 = vunpack.c.l.b16 %v87
    %v389 = vunpack.c.l.b16 %v88
    %v390 = vunpack.c.l.b16 %v89
    %v391 = vunpack.c.l.b16 %v90
    %v392 = vunpack.c.l.b16 %v91
    %v393 = vunpack.c.l.b16 %v92
    %v394 = vunpack.c.l.b16 %v93
    %v395 = vunpack.c.l.b16 %v94
    %v396 = vunpack.c.l.b16 %v95
    %v397 = vunpack.c.l.b16 %v96
    %v398 = vunpack.c.l.b16 %v97
    %v399 = vunpack.c.l.b16 %v98
    %v400 = vunpack.c.l.b16 %v99
    %v401 = vunpack.c.l.b16 %v100
    %v402 = vunpack.c.l.b16 %v101
    %v403 = vunpack.c.l.b16 %v102
    %v404 = vunpack.c.l.b16 %v103
    %v405 = vunpack.c.l.b16 %v104
    %v406 = vunpack.c.l.b16 %v105
    %v407 = vunpack.c.l.b16 %v106
    %v408 = vunpack.c.l.b16 %v107
    %v409 = vunpack.c.l.b16 %v108
    %v410 = vunpack.c.l.b16 %v109
    %v411 = vunpack.c.l.b16 %v110
    %v412 = vunpack.c.l.b16 %v111
    %v413 = vunpack.c.l.b16 %v112
    %v414 = vunpack.c.l.b16 %v113
    %v415 = vunpack.c.l.b16 %v114
    %v416 = vunpack.c.l.b16 %v115
    %v417 = vunpack.c.l.b16 %v116
    %v418 = vunpack.c.l.b16 %v117
    %v419 = vunpack.c.l.b16 %v118
    %v420 = vunpack.c.l.b16 %v119
    %v421 = vunpack.c.l.b16 %v120
    %v422 = vunpack.c.l.b16 %v121
    %v423 = vunpack.c.l.b16 %v122
    %v424 = vunpack.c.l.b16 %v123
    %v425 = vunpack.c.l.b16 %v124
    %v426 = vunpack.c.l.b16 %v125
    %v427 = vunpack.c.l.b16 %v126
    %v428 = vunpack.c.l.b16 %v127
    %v429 = vunpack.c.l.b16 %v128
    %v430 = vunpack.c.l.b16 %v129
    %v431 = vunpack.c.l.b16 %v130
    %v432 = vunpack.c.l.b16 %v131
    %v433 = vunpack.c.l.b16 %v132
    %v434 = vunpack.c.l.b16 %v133
    %v435 = vunpack.c.l.b16 %v134
    %v436 = vunpack.c.l.b16 %v135
    %v437 = vunpack.c.l.b16 %v136
    %v438 = vunpack.c.l.b16 %v137
    %v439 = vunpack.c.l.b16 %v138
    %v440 = vunpack.c.l.b16 %v139
    %v441 = vunpack.c.l.b16 %v140
    %v442 = vunpack.c.l.b16 %v141
    %v443 = vunpack.c.l.b16 %v142
    %v444 = vunpack.c.l.b16 %v143
    %v445 = vunpack.c.l.b16 %v144
    %v446 = vunpack.c.l.b16 %v145
    %v447 = vunpack.c.l.b16 %v146
    %v448 = vunpack.c.l.b16 %v147
    %v449 = vunpack.c.l.b16 %v148
    %v450 = vunpack.c.l.b16 %v149
    %v451 = vunpack.c.l.b16 %v150
    %v452 = vunpack.c.l.b16 %v151
    %v453 = vunpack.c.l.b16 %v152
    %v454 = vunpack.c.l.b16 %v153
    %v455 = vunpack.c.l.b16 %v154
    %v456 = vunpack.c.l.b16 %v155
    %v457 = vunpack.c.l.b16 %v156
    %v458 = vunpack.c.l.b16 %v157
    %v459 = vunpack.c.l.b16 %v158
    %v460 = vunpack.c.l.b16 %v159
    %v461 = vunpack.c.l.b16 %v160
    %v462 = vunpack.c.l.b16 %v161
    %v463 = vunpack.c.l.b16 %v162
    %v464 = vunpack.c.l.b16 %v163
    %v465 = vunpack.c.l.b16 %v164
    %v466 = vunpack.c.l.b16 %v165
    %v467 = vunpack.c.l.b16 %v166
    %v468 = vunpack.c.l.b16 %v167
    %v469 = vunpack.c.l.b16 %v168
    %v470 = vunpack.c.l.b16 %v169
    %v471 = vunpack.c.l.b16 %v170
    %v472 = vunpack.c.l.b16 %v171
    %v473 = vunpack.c.l.b16 %v172
    %v474 = vunpack.c.l.b16 %v173
    %v475 = vunpack.c.l.b16 %v174
    %v476 = vunpack.c.l.b16 %v175
    %v477 = vunpack.c.l.b16 %v176
    %v478 = vunpack.c.l.b16 %v177
    %v479 = vpack.c.b16 %v352, %v351
    %v480 = vpack.c.b16 %v354, %v353
    %v481 = vpack.c.b16 %v356, %v355
    %v482 = vpack.c.b16 %v358, %v357
    %v483 = vpack.c.b16 %v360, %v359
    %v484 = vpack.c.b16 %v362, %v361
    %v485 = vpack.c.b16 %v364, %v363
    %v486 = vpack.c.b16 %v366, %v365
    %v487 = vpack.c.b16 %v368, %v367
    %v488 = vpack.c.b16 %v370, %v369
    %v489 = vpack.c.b16 %v372, %v371
    %v490 = vpack.c.b16 %v374, %v373
    %v491 = vpack.c.b16 %v376, %v375
    %v492 = vpack.c.b16 %v378, %v377
    %v493 = vpack.c.b16 %v380, %v379
    %v494 = vpack.c.b16 %v382, %v381
    %v495 = vpack.c.b16 %v384, %v383
    %v496 = vpack.c.b16 %v386, %v385
    %v497 = vpack.c.b16 %v388, %v387
    %v498 = vpack.c.b16 %v390, %v389
    %v499 = vpack.c.b16 %v392, %v391
    %v500 = vpack.c.b16 %v394, %v393
    %v501 = vpack.c.b16 %v396, %v395
    %v502 = vpack.c.b16 %v398, %v397
    %v503 = vpack.c.b16 %v400, %v399
    %v504 = vpack.c.b16 %v402, %v401
    %v505 = vpack.c.b16 %v404, %v403
    %v506 = vpack.c.b16 %v406, %v405
    %v507 = vpack.c.b16 %v408, %v407
    %v508 = vpack.c.b16 %v410, %v409
    %v509 = vpack.c.b16 %v412, %v411
    %v510 = vpack.c.b16 %v414, %v413
    %v511 = vpack.c.b16 %v416, %v415
    %v512 = vpack.c.b16 %v418, %v417
    %v513 = vpack.c.b16 %v420, %v419
    %v514 = vpack.c.b16 %v422, %v421
    %v515 = vpack.c.b16 %v424, %v423
    %v516 = vpack.c.b16 %v426, %v425
    %v517 = vpack.c.b16 %v428, %v427
    %v518 = vpack.c.b16 %v430, %v429
    %v519 = vpack.c.b16 %v432, %v431
    %v520 = vpack.c.b16 %v434, %v433
    %v521 = vpack.c.b16 %v436, %v435
    %v522 = vpack.c.b16 %v438, %v437
    %v523 = vpack.c.b16 %v440, %v439
    %v524 = vpack.c.b16 %v442, %v441
    %v525 = vpack.c.b16 %v444, %v443
    %v526 = vpack.c.b16 %v446, %v445
    %v527 = vpack.c.b16 %v448, %v447
    %v528 = vpack.c.b16 %v450, %v449
    %v529 = vpack.c.b16 %v452, %v451
    %v530 = vpack.c.b16 %v454, %v453
    %v531 = vpack.c.b16 %v456, %v455
    %v532 = vpack.c.b16 %v458, %v457
    %v533 = vpack.c.b16 %v460, %v459
    %v534 = vpack.c.b16 %v462, %v461
    %v535 = vpack.c.b16 %v464, %v463
    %v536 = vpack.c.b16 %v466, %v465
    %v537 = vpack.c.b16 %v468, %v467
    %v538 = vpack.c.b16 %v470, %v469
    %v539 = vpack.c.b16 %v472, %v471
    %v540 = vpack.c.b16 %v474, %v473
    %v541 = vpack.c.b16 %v476, %v475
    %v542 = vpack.c.b16 %v478, %v477
    %607 = vmatprep.subr.bf16.mxu0 0
    %608 = vmatpush1.bf16.msra.mxu0 %v479
    %609 = vmatprep.subr.bf16.mxu0 0
    %610 = vmatpush1.bf16.msra.mxu0 %v480
    %611 = vmatprep.subr.bf16.mxu0 0
    %612 = vmatpush1.bf16.msra.mxu0 %v481
    %613 = vmatprep.subr.bf16.mxu0 0
    %614 = vmatpush1.bf16.msra.mxu0 %v482
    %615 = vmatprep.subr.bf16.mxu0 0
    %616 = vmatpush1.bf16.msra.mxu0 %v483
    %617 = vmatprep.subr.bf16.mxu0 0
    %618 = vmatpush1.bf16.msra.mxu0 %v484
    %619 = vmatprep.subr.bf16.mxu0 0
    %620 = vmatpush1.bf16.msra.mxu0 %v485
    %621 = vmatprep.subr.bf16.mxu0 0
    %622 = vmatpush1.bf16.msra.mxu0 %v486
    %623 = vmatprep.subr.bf16.mxu0 0
    %624 = vmatpush1.bf16.msra.mxu0 %v487
    %625 = vmatprep.subr.bf16.mxu0 0
    %626 = vmatpush1.bf16.msra.mxu0 %v488
    %627 = vmatprep.subr.bf16.mxu0 0
    %628 = vmatpush1.bf16.msra.mxu0 %v489
    %629 = vmatprep.subr.bf16.mxu0 0
    %630 = vmatpush1.bf16.msra.mxu0 %v490
    %631 = vmatprep.subr.bf16.mxu0 0
    %632 = vmatpush1.bf16.msra.mxu0 %v491
    %633 = vmatprep.subr.bf16.mxu0 0
    %634 = vmatpush1.bf16.msra.mxu0 %v492
    %635 = vmatprep.subr.bf16.mxu0 0
    %636 = vmatpush1.bf16.msra.mxu0 %v493
    %637 = vmatprep.subr.bf16.mxu0 0
    %638 = vmatpush1.bf16.msra.mxu0 %v494
    %639 = vmatprep.mubr.bf16.mxu0 %v216
    %640 = vmatmul.mubr.bf16.gmra.mrb[0].mxu0 %v215
    %v641 = vpop.f32.mrb[0].mxu0
    %v642 = vadd.f32 0.0, %v641
    %v643 = vpop.f32.mrb[0].mxu0
    %v644 = vpop.f32.mrb[0].mxu0
    %v645 = vpop.f32.mrb[0].mxu0
    %646 = vdwg.mxu0
    %647 = vmatprep.subr.bf16.mxu0 0
    %648 = vmatpush1.bf16.msra.mxu0 %v495
    %649 = vmatprep.subr.bf16.mxu0 0
    %650 = vmatpush1.bf16.msra.mxu0 %v496
    %651 = vmatprep.subr.bf16.mxu0 0
    %652 = vmatpush1.bf16.msra.mxu0 %v497
    %653 = vmatprep.subr.bf16.mxu0 0
    %654 = vmatpush1.bf16.msra.mxu0 %v498
    %655 = vmatprep.subr.bf16.mxu0 0
    %656 = vmatpush1.bf16.msra.mxu0 %v499
    %657 = vmatprep.subr.bf16.mxu0 0
    %658 = vmatpush1.bf16.msra.mxu0 %v500
    %659 = vmatprep.subr.bf16.mxu0 0
    %660 = vmatpush1.bf16.msra.mxu0 %v501
    %661 = vmatprep.subr.bf16.mxu0 0
    %662 = vmatpush1.bf16.msra.mxu0 %v502
    %663 = vmatprep.subr.bf16.mxu0 0
    %664 = vmatpush1.bf16.msra.mxu0 %v503
    %665 = vmatprep.subr.bf16.mxu0 0
    %666 = vmatpush1.bf16.msra.mxu0 %v504
    %667 = vmatprep.subr.bf16.mxu0 0
    %668 = vmatpush1.bf16.msra.mxu0 %v505
    %669 = vmatprep.subr.bf16.mxu0 0
    %670 = vmatpush1.bf16.msra.mxu0 %v506
    %671 = vmatprep.subr.bf16.mxu0 0
    %672 = vmatpush1.bf16.msra.mxu0 %v507
    %673 = vmatprep.subr.bf16.mxu0 0
    %674 = vmatpush1.bf16.msra.mxu0 %v508
    %675 = vmatprep.subr.bf16.mxu0 0
    %676 = vmatpush1.bf16.msra.mxu0 %v509
    %677 = vmatprep.subr.bf16.mxu0 0
    %678 = vmatpush1.bf16.msra.mxu0 %v510
    %679 = vmatprep.mubr.bf16.mxu0 %v218
    %680 = vmatmul.mubr.bf16.gmra.mrb[0].mxu0 %v217
    %v681 = vpop.f32.mrb[0].mxu0
    %v682 = vadd.f32 %v642, %v681
    %v683 = vpop.f32.mrb[0].mxu0
    %v684 = vpop.f32.mrb[0].mxu0
    %v685 = vpop.f32.mrb[0].mxu0
    %686 = vdwg.mxu0
    %687 = vmatprep.subr.bf16.mxu0 0
    %688 = vmatpush1.bf16.msra.mxu0 %v511
    %689 = vmatprep.subr.bf16.mxu0 0
    %690 = vmatpush1.bf16.msra.mxu0 %v512
    %691 = vmatprep.subr.bf16.mxu0 0
    %692 = vmatpush1.bf16.msra.mxu0 %v513
    %693 = vmatprep.subr.bf16.mxu0 0
    %694 = vmatpush1.bf16.msra.mxu0 %v514
    %695 = vmatprep.subr.bf16.mxu0 0
    %696 = vmatpush1.bf16.msra.mxu0 %v515
    %697 = vmatprep.subr.bf16.mxu0 0
    %698 = vmatpush1.bf16.msra.mxu0 %v516
    %699 = vmatprep.subr.bf16.mxu0 0
    %700 = vmatpush1.bf16.msra.mxu0 %v517
    %701 = vmatprep.subr.bf16.mxu0 0
    %702 = vmatpush1.bf16.msra.mxu0 %v518
    %703 = vmatprep.subr.bf16.mxu0 0
    %704 = vmatpush1.bf16.msra.mxu0 %v519
    %705 = vmatprep.subr.bf16.mxu0 0
    %706 = vmatpush1.bf16.msra.mxu0 %v520
    %707 = vmatprep.subr.bf16.mxu0 0
    %708 = vmatpush1.bf16.msra.mxu0 %v521
    %709 = vmatprep.subr.bf16.mxu0 0
    %710 = vmatpush1.bf16.msra.mxu0 %v522
    %711 = vmatprep.subr.bf16.mxu0 0
    %712 = vmatpush1.bf16.msra.mxu0 %v523
    %713 = vmatprep.subr.bf16.mxu0 0
    %714 = vmatpush1.bf16.msra.mxu0 %v524
    %715 = vmatprep.subr.bf16.mxu0 0
    %716 = vmatpush1.bf16.msra.mxu0 %v525
    %717 = vmatprep.subr.bf16.mxu0 0
    %718 = vmatpush1.bf16.msra.mxu0 %v526
    %719 = vmatprep.mubr.bf16.mxu0 %v220
    %720 = vmatmul.mubr.bf16.gmra.mrb[0].mxu0 %v219
    %v721 = vpop.f32.mrb[0].mxu0
    %v722 = vadd.f32 %v682, %v721
    %v723 = vpop.f32.mrb[0].mxu0
    %v724 = vpop.f32.mrb[0].mxu0
    %v725 = vpop.f32.mrb[0].mxu0
    %726 = vdwg.mxu0
    %727 = vmatprep.subr.bf16.mxu0 0
    %728 = vmatpush1.bf16.msra.mxu0 %v527
    %729 = vmatprep.subr.bf16.mxu0 0
    %730 = vmatpush1.bf16.msra.mxu0 %v528
    %731 = vmatprep.subr.bf16.mxu0 0
    %732 = vmatpush1.bf16.msra.mxu0 %v529
    %733 = vmatprep.subr.bf16.mxu0 0
    %734 = vmatpush1.bf16.msra.mxu0 %v530
    %735 = vmatprep.subr.bf16.mxu0 0
    %736 = vmatpush1.bf16.msra.mxu0 %v531
    %737 = vmatprep.subr.bf16.mxu0 0
    %738 = vmatpush1.bf16.msra.mxu0 %v532
    %739 = vmatprep.subr.bf16.mxu0 0
    %740 = vmatpush1.bf16.msra.mxu0 %v533
    %741 = vmatprep.subr.bf16.mxu0 0
    %742 = vmatpush1.bf16.msra.mxu0 %v534
    %743 = vmatprep.subr.bf16.mxu0 0
    %744 = vmatpush1.bf16.msra.mxu0 %v535
    %745 = vmatprep.subr.bf16.mxu0 0
    %746 = vmatpush1.bf16.msra.mxu0 %v536
    %747 = vmatprep.subr.bf16.mxu0 0
    %748 = vmatpush1.bf16.msra.mxu0 %v537
    %749 = vmatprep.subr.bf16.mxu0 0
    %750 = vmatpush1.bf16.msra.mxu0 %v538
    %751 = vmatprep.subr.bf16.mxu0 0
    %752 = vmatpush1.bf16.msra.mxu0 %v539
    %753 = vmatprep.subr.bf16.mxu0 0
    %754 = vmatpush1.bf16.msra.mxu0 %v540
    %755 = vmatprep.subr.bf16.mxu0 0
    %756 = vmatpush1.bf16.msra.mxu0 %v541
    %757 = vmatprep.subr.bf16.mxu0 0
    %758 = vmatpush1.bf16.msra.mxu0 %v542
    %759 = vmatprep.mubr.bf16.mxu0 %v222
    %760 = vmatmul.mubr.bf16.gmra.mrb[0].mxu0 %v221
    %v761 = vpop.f32.mrb[0].mxu0
    %v762 = vadd.f32 %v722, %v761
    %v763 = vpop.f32.mrb[0].mxu0
    %v764 = vpop.f32.mrb[0].mxu0
    %v765 = vpop.f32.mrb[0].mxu0
    %766 = vdwg.mxu0
    %v767 = vpack.c.bf16 %v762, %v762
    %v768 = vld [vmem:[%s2] sm:$0xff]
    %v769 = vld [vmem:[%s2 + $0x8] sm:$0xff]
    %v770 = vld [vmem:[%s2 + $0x10] sm:$0xff]
    %v771 = vld [vmem:[%s2 + $0x18] sm:$0xff]
    %v772 = vld [vmem:[%s2 + $0x20] sm:$0xff]
    %v773 = vld [vmem:[%s2 + $0x28] sm:$0xff]
    %v774 = vld [vmem:[%s2 + $0x30] sm:$0xff]
    %v775 = vld [vmem:[%s2 + $0x38] sm:$0xff]
    %s776 = scalar_lea.vmem %s0, 8
    %v777 = vld [vmem:[%s776] sm:$0xff]
    %778 = vset.pattern.permute.xlu0 0
    %779 = vperm.xlu0 %778, %v777
    %v780 = vpop.permute.xlu0 %779
    %vm781 = vcmp.eq.s32.totalorder %v179, %v780
    %vm782 = vcmp.eq.s32.totalorder %v180, %v780
    %vm783 = vcmp.eq.s32.totalorder %v181, %v780
    %vm784 = vcmp.eq.s32.totalorder %v182, %v780
    %vm785 = vcmp.eq.s32.totalorder %v183, %v780
    %vm786 = vcmp.eq.s32.totalorder %v184, %v780
    %vm787 = vcmp.eq.s32.totalorder %v185, %v780
    %vm788 = vcmp.eq.s32.totalorder %v186, %v780
    %v789 = vsel %vm781, 1, 0
    %v790 = vsel %vm782, 1, 0
    %v791 = vsel %vm783, 1, 0
    %v792 = vsel %vm784, 1, 0
    %v793 = vsel %vm785, 1, 0
    %v794 = vsel %vm786, 1, 0
    %v795 = vsel %vm787, 1, 0
    %v796 = vsel %vm788, 1, 0
    %v797 = vcvt.s32.f32 %v789
    %v798 = vcvt.s32.f32 %v790
    %v799 = vcvt.s32.f32 %v791
    %v800 = vcvt.s32.f32 %v792
    %v801 = vcvt.s32.f32 %v793
    %v802 = vcvt.s32.f32 %v794
    %v803 = vcvt.s32.f32 %v795
    %v804 = vcvt.s32.f32 %v796
    %v805 = vpack.c.bf16 %v797, %v797
    %v806 = vpack.c.bf16 %v798, %v798
    %v807 = vpack.c.bf16 %v799, %v799
    %v808 = vpack.c.bf16 %v800, %v800
    %v809 = vpack.c.bf16 %v801, %v801
    %v810 = vpack.c.bf16 %v802, %v802
    %v811 = vpack.c.bf16 %v803, %v803
    %v812 = vpack.c.bf16 %v804, %v804
    %813 = vmatprep.subr.bf16.mxu0 0
    %814 = vmatpush1.bf16.msra.mxu0 %v479
    %815 = vmatprep.subr.bf16.mxu0 0
    %816 = vmatpush1.bf16.msra.mxu0 %v480
    %817 = vmatprep.subr.bf16.mxu0 0
    %818 = vmatpush1.bf16.msra.mxu0 %v481
    %819 = vmatprep.subr.bf16.mxu0 0
    %820 = vmatpush1.bf16.msra.mxu0 %v482
    %821 = vmatprep.subr.bf16.mxu0 0
    %822 = vmatpush1.bf16.msra.mxu0 %v483
    %823 = vmatprep.subr.bf16.mxu0 0
    %824 = vmatpush1.bf16.msra.mxu0 %v484
    %825 = vmatprep.subr.bf16.mxu0 0
    %826 = vmatpush1.bf16.msra.mxu0 %v485
    %827 = vmatprep.subr.bf16.mxu0 0
    %828 = vmatpush1.bf16.msra.mxu0 %v486
    %829 = vmatprep.subr.bf16.mxu0 0
    %830 = vmatpush1.bf16.msra.mxu0 %v487
    %831 = vmatprep.subr.bf16.mxu0 0
    %832 = vmatpush1.bf16.msra.mxu0 %v488
    %833 = vmatprep.subr.bf16.mxu0 0
    %834 = vmatpush1.bf16.msra.mxu0 %v489
    %835 = vmatprep.subr.bf16.mxu0 0
    %836 = vmatpush1.bf16.msra.mxu0 %v490
    %837 = vmatprep.subr.bf16.mxu0 0
    %838 = vmatpush1.bf16.msra.mxu0 %v491
    %839 = vmatprep.subr.bf16.mxu0 0
    %840 = vmatpush1.bf16.msra.mxu0 %v492
    %841 = vmatprep.subr.bf16.mxu0 0
    %842 = vmatpush1.bf16.msra.mxu0 %v493
    %843 = vmatprep.subr.bf16.mxu0 0
    %844 = vmatpush1.bf16.msra.mxu0 %v494
    %845 = vmatprep.mubr.bf16.mxu0 %v806
    %846 = vmatmul.mubr.bf16.gmra.mrb[0].mxu0 %v805
    %v847 = vpop.f32.mrb[0].mxu0
    %v848 = vadd.f32 0.0, %v847
    %v849 = vpop.f32.mrb[0].mxu0
    %v850 = vpop.f32.mrb[0].mxu0
    %v851 = vpop.f32.mrb[0].mxu0
    %852 = vdwg.mxu0
    %853 = vmatprep.subr.bf16.mxu0 0
    %854 = vmatpush1.bf16.msra.mxu0 %v495
    %855 = vmatprep.subr.bf16.mxu0 0
    %856 = vmatpush1.bf16.msra.mxu0 %v496
    %857 = vmatprep.subr.bf16.mxu0 0
    %858 = vmatpush1.bf16.msra.mxu0 %v497
    %859 = vmatprep.subr.bf16.mxu0 0
    %860 = vmatpush1.bf16.msra.mxu0 %v498
    %861 = vmatprep.subr.bf16.mxu0 0
    %862 = vmatpush1.bf16.msra.mxu0 %v499
    %863 = vmatprep.subr.bf16.mxu0 0
    %864 = vmatpush1.bf16.msra.mxu0 %v500
    %865 = vmatprep.subr.bf16.mxu0 0
    %866 = vmatpush1.bf16.msra.mxu0 %v501
    %867 = vmatprep.subr.bf16.mxu0 0
    %868 = vmatpush1.bf16.msra.mxu0 %v502
    %869 = vmatprep.subr.bf16.mxu0 0
    %870 = vmatpush1.bf16.msra.mxu0 %v503
    %871 = vmatprep.subr.bf16.mxu0 0
    %872 = vmatpush1.bf16.msra.mxu0 %v504
    %873 = vmatprep.subr.bf16.mxu0 0
    %874 = vmatpush1.bf16.msra.mxu0 %v505
    %875 = vmatprep.subr.bf16.mxu0 0
    %876 = vmatpush1.bf16.msra.mxu0 %v506
    %877 = vmatprep.subr.bf16.mxu0 0
    %878 = vmatpush1.bf16.msra.mxu0 %v507
    %879 = vmatprep.subr.bf16.mxu0 0
    %880 = vmatpush1.bf16.msra.mxu0 %v508
    %881 = vmatprep.subr.bf16.mxu0 0
    %882 = vmatpush1.bf16.msra.mxu0 %v509
    %883 = vmatprep.subr.bf16.mxu0 0
    %884 = vmatpush1.bf16.msra.mxu0 %v510
    %885 = vmatprep.mubr.bf16.mxu0 %v808
    %886 = vmatmul.mubr.bf16.gmra.mrb[0].mxu0 %v807
    %v887 = vpop.f32.mrb[0].mxu0
    %v888 = vadd.f32 %v848, %v887
    %v889 = vpop.f32.mrb[0].mxu0
    %v890 = vpop.f32.mrb[0].mxu0
    %v891 = vpop.f32.mrb[0].mxu0
    %892 = vdwg.mxu0
    %893 = vmatprep.subr.bf16.mxu0 0
    %894 = vmatpush1.bf16.msra.mxu0 %v511
    %895 = vmatprep.subr.bf16.mxu0 0
    %896 = vmatpush1.bf16.msra.mxu0 %v512
    %897 = vmatprep.subr.bf16.mxu0 0
    %898 = vmatpush1.bf16.msra.mxu0 %v513
    %899 = vmatprep.subr.bf16.mxu0 0
    %900 = vmatpush1.bf16.msra.mxu0 %v514
    %901 = vmatprep.subr.bf16.mxu0 0
    %902 = vmatpush1.bf16.msra.mxu0 %v515
    %903 = vmatprep.subr.bf16.mxu0 0
    %904 = vmatpush1.bf16.msra.mxu0 %v516
    %905 = vmatprep.subr.bf16.mxu0 0
    %906 = vmatpush1.bf16.msra.mxu0 %v517
    %907 = vmatprep.subr.bf16.mxu0 0
    %908 = vmatpush1.bf16.msra.mxu0 %v518
    %909 = vmatprep.subr.bf16.mxu0 0
    %910 = vmatpush1.bf16.msra.mxu0 %v519
    %911 = vmatprep.subr.bf16.mxu0 0
    %912 = vmatpush1.bf16.msra.mxu0 %v520
    %913 = vmatprep.subr.bf16.mxu0 0
    %914 = vmatpush1.bf16.msra.mxu0 %v521
    %915 = vmatprep.subr.bf16.mxu0 0
    %916 = vmatpush1.bf16.msra.mxu0 %v522
    %917 = vmatprep.subr.bf16.mxu0 0
    %918 = vmatpush1.bf16.msra.mxu0 %v523
    %919 = vmatprep.subr.bf16.mxu0 0
    %920 = vmatpush1.bf16.msra.mxu0 %v524
    %921 = vmatprep.subr.bf16.mxu0 0
    %922 = vmatpush1.bf16.msra.mxu0 %v525
    %923 = vmatprep.subr.bf16.mxu0 0
    %924 = vmatpush1.bf16.msra.mxu0 %v526
    %925 = vmatprep.mubr.bf16.mxu0 %v810
    %926 = vmatmul.mubr.bf16.gmra.mrb[0].mxu0 %v809
    %v927 = vpop.f32.mrb[0].mxu0
    %v928 = vadd.f32 %v888, %v927
    %v929 = vpop.f32.mrb[0].mxu0
    %v930 = vpop.f32.mrb[0].mxu0
    %v931 = vpop.f32.mrb[0].mxu0
    %932 = vdwg.mxu0
    %933 = vmatprep.subr.bf16.mxu0 0
    %934 = vmatpush1.bf16.msra.mxu0 %v527
    %935 = vmatprep.subr.bf16.mxu0 0
    %936 = vmatpush1.bf16.msra.mxu0 %v528
    %937 = vmatprep.subr.bf16.mxu0 0
    %938 = vmatpush1.bf16.msra.mxu0 %v529
    %939 = vmatprep.subr.bf16.mxu0 0
    %940 = vmatpush1.bf16.msra.mxu0 %v530
    %941 = vmatprep.subr.bf16.mxu0 0
    %942 = vmatpush1.bf16.msra.mxu0 %v531
    %943 = vmatprep.subr.bf16.mxu0 0
    %944 = vmatpush1.bf16.msra.mxu0 %v532
    %945 = vmatprep.subr.bf16.mxu0 0
    %946 = vmatpush1.bf16.msra.mxu0 %v533
    %947 = vmatprep.subr.bf16.mxu0 0
    %948 = vmatpush1.bf16.msra.mxu0 %v534
    %949 = vmatprep.subr.bf16.mxu0 0
    %950 = vmatpush1.bf16.msra.mxu0 %v535
    %951 = vmatprep.subr.bf16.mxu0 0
    %952 = vmatpush1.bf16.msra.mxu0 %v536
    %953 = vmatprep.subr.bf16.mxu0 0
    %954 = vmatpush1.bf16.msra.mxu0 %v537
    %955 = vmatprep.subr.bf16.mxu0 0
    %956 = vmatpush1.bf16.msra.mxu0 %v538
    %957 = vmatprep.subr.bf16.mxu0 0
    %958 = vmatpush1.bf16.msra.mxu0 %v539
    %959 = vmatprep.subr.bf16.mxu0 0
    %960 = vmatpush1.bf16.msra.mxu0 %v540
    %961 = vmatprep.subr.bf16.mxu0 0
    %962 = vmatpush1.bf16.msra.mxu0 %v541
    %963 = vmatprep.subr.bf16.mxu0 0
    %964 = vmatpush1.bf16.msra.mxu0 %v542
    %965 = vmatprep.mubr.bf16.mxu0 %v812
    %966 = vmatmul.mubr.bf16.gmra.mrb[0].mxu0 %v811
    %v967 = vpop.f32.mrb[0].mxu0
    %v968 = vadd.f32 %v928, %v967
    %v969 = vpop.f32.mrb[0].mxu0
    %v970 = vpop.f32.mrb[0].mxu0
    %v971 = vpop.f32.mrb[0].mxu0
    %972 = vdwg.mxu0
    %v973 = vpack.c.bf16 %v968, %v968
    %v974 = vld [vmem:[%s2 + $0x40] sm:$0xff]
    %v975 = vld [vmem:[%s2 + $0x48] sm:$0xff]
    %v976 = vld [vmem:[%s2 + $0x50] sm:$0xff]
    %v977 = vld [vmem:[%s2 + $0x58] sm:$0xff]
    %v978 = vld [vmem:[%s2 + $0x60] sm:$0xff]
    %v979 = vld [vmem:[%s2 + $0x68] sm:$0xff]
    %v980 = vld [vmem:[%s2 + $0x70] sm:$0xff]
    %v981 = vld [vmem:[%s2 + $0x78] sm:$0xff]
    %v990 = vunpack.c.l.b16 %v974
    %v991 = vunpack.c.h.b16 %v974
    %v992 = vunpack.c.l.b16 %v975
    %v993 = vunpack.c.h.b16 %v975
    %v994 = vunpack.c.l.b16 %v976
    %v995 = vunpack.c.h.b16 %v976
    %v996 = vunpack.c.l.b16 %v977
    %v997 = vunpack.c.h.b16 %v977
    %v998 = vunpack.c.l.b16 %v978
    %v999 = vunpack.c.h.b16 %v978
    %v1000 = vunpack.c.l.b16 %v979
    %v1001 = vunpack.c.h.b16 %v979
    %v1002 = vunpack.c.l.b16 %v980
    %v1003 = vunpack.c.h.b16 %v980
    %v1004 = vunpack.c.l.b16 %v981
    %v1005 = vunpack.c.h.b16 %v981
    %v1006 = vpack.c.b16 %v994, %v990
    %v1007 = vpack.c.b16 %v995, %v991
    %v1008 = vpack.c.b16 %v996, %v992
    %v1009 = vpack.c.b16 %v997, %v993
    %v1010 = vpack.c.b16 %v1002, %v998
    %v1011 = vpack.c.b16 %v1003, %v999
    %v1012 = vpack.c.b16 %v1004, %v1000
    %v1013 = vpack.c.b16 %v1005, %v1001
    %vm1022 = vcmask 261120
    %v1024 = vsel %vm1022, %v973, 0
    %1026 = vmatprep.subr.bf16.mxu0 %v1007
    %1027 = vmatpush1.bf16.msra.mxu0 %v1006
    %1028 = vmatprep.subr.bf16.mxu0 %v1011
    %1029 = vmatpush1.bf16.msra.mxu0 %v1010
    %1030 = vmatprep.subr.bf16.mxu0 0
    %1031 = vmatpush1.bf16.msra.mxu0 0
    %1032 = vmatprep.subr.bf16.mxu0 0
    %1033 = vmatpush1.bf16.msra.mxu0 0
    %1034 = vmatprep.subr.bf16.mxu0 0
    %1035 = vmatpush1.bf16.msra.mxu0 0
    %1036 = vmatprep.subr.bf16.mxu0 0
    %1037 = vmatpush1.bf16.msra.mxu0 0
    %1038 = vmatprep.subr.bf16.mxu0 0
    %1039 = vmatpush1.bf16.msra.mxu0 0
    %1040 = vmatprep.subr.bf16.mxu0 0
    %1041 = vmatpush1.bf16.msra.mxu0 0
    %1042 = vmatprep.subr.bf16.mxu0 0
    %1043 = vmatpush1.bf16.msra.mxu0 0
    %1044 = vmatprep.subr.bf16.mxu0 0
    %1045 = vmatpush1.bf16.msra.mxu0 0
    %1046 = vmatprep.subr.bf16.mxu0 0
    %1047 = vmatpush1.bf16.msra.mxu0 0
    %1048 = vmatprep.subr.bf16.mxu0 0
    %1049 = vmatpush1.bf16.msra.mxu0 0
    %1050 = vmatprep.subr.bf16.mxu0 0
    %1051 = vmatpush1.bf16.msra.mxu0 0
    %1052 = vmatprep.subr.bf16.mxu0 0
    %1053 = vmatpush1.bf16.msra.mxu0 0
    %1054 = vmatprep.subr.bf16.mxu0 0
    %1055 = vmatpush1.bf16.msra.mxu0 0
    %1056 = vmatprep.subr.bf16.mxu0 0
    %1057 = vmatpush1.bf16.msra.mxu0 0
    %1058 = vmatprep.mubr.bf16.mxu0 0
    %1059 = vmatmul.mubr.bf16.gmra.mrb[0].mxu0 %v1024
    %v1060 = vpop.f32.mrb[0].mxu0
    %v1061 = vadd.f32 0.0, %v1060
    %v1062 = vpop.f32.mrb[0].mxu0
    %v1063 = vadd.f32 0.0, %v1062
    %v1064 = vpop.f32.mrb[0].mxu0
    %v1065 = vpop.f32.mrb[0].mxu0
    %1066 = vdwg.mxu0
    %1067 = vmatprep.subr.bf16.mxu0 %v1009
    %1068 = vmatpush1.bf16.msra.mxu0 %v1008
    %1069 = vmatprep.subr.bf16.mxu0 %v1013
    %1070 = vmatpush1.bf16.msra.mxu0 %v1012
    %1071 = vmatprep.subr.bf16.mxu0 0
    %1072 = vmatpush1.bf16.msra.mxu0 0
    %1073 = vmatprep.subr.bf16.mxu0 0
    %1074 = vmatpush1.bf16.msra.mxu0 0
    %1075 = vmatprep.subr.bf16.mxu0 0
    %1076 = vmatpush1.bf16.msra.mxu0 0
    %1077 = vmatprep.subr.bf16.mxu0 0
    %1078 = vmatpush1.bf16.msra.mxu0 0
    %1079 = vmatprep.subr.bf16.mxu0 0
    %1080 = vmatpush1.bf16.msra.mxu0 0
    %1081 = vmatprep.subr.bf16.mxu0 0
    %1082 = vmatpush1.bf16.msra.mxu0 0
    %1083 = vmatprep.subr.bf16.mxu0 0
    %1084 = vmatpush1.bf16.msra.mxu0 0
    %1085 = vmatprep.subr.bf16.mxu0 0
    %1086 = vmatpush1.bf16.msra.mxu0 0
    %1087 = vmatprep.subr.bf16.mxu0 0
    %1088 = vmatpush1.bf16.msra.mxu0 0
    %1089 = vmatprep.subr.bf16.mxu0 0
    %1090 = vmatpush1.bf16.msra.mxu0 0
    %1091 = vmatprep.subr.bf16.mxu0 0
    %1092 = vmatpush1.bf16.msra.mxu0 0
    %1093 = vmatprep.subr.bf16.mxu0 0
    %1094 = vmatpush1.bf16.msra.mxu0 0
    %1095 = vmatprep.subr.bf16.mxu0 0
    %1096 = vmatpush1.bf16.msra.mxu0 0
    %1097 = vmatprep.subr.bf16.mxu0 0
    %1098 = vmatpush1.bf16.msra.mxu0 0
    %1099 = vmatprep.mubr.bf16.mxu0 0
    %1100 = vmatmul.mubr.bf16.gmra.mrb[0].mxu0 %v1024
    %v1101 = vpop.f32.mrb[0].mxu0
    %v1102 = vadd.f32 0.0, %v1101
    %v1103 = vpop.f32.mrb[0].mxu0
    %v1104 = vadd.f32 0.0, %v1103
    %v1105 = vpop.f32.mrb[0].mxu0
    %v1106 = vpop.f32.mrb[0].mxu0
    %1107 = vdwg.mxu0
    %v1116 = vunpack.c.l.b16 %v768
    %v1117 = vunpack.c.h.b16 %v768
    %v1118 = vunpack.c.l.b16 %v769
    %v1119 = vunpack.c.h.b16 %v769
    %v1120 = vunpack.c.l.b16 %v770
    %v1121 = vunpack.c.h.b16 %v770
    %v1122 = vunpack.c.l.b16 %v771
    %v1123 = vunpack.c.h.b16 %v771
    %v1124 = vunpack.c.l.b16 %v772
    %v1125 = vunpack.c.h.b16 %v772
    %v1126 = vunpack.c.l.b16 %v773
    %v1127 = vunpack.c.h.b16 %v773
    %v1128 = vunpack.c.l.b16 %v774
    %v1129 = vunpack.c.h.b16 %v774
    %v1130 = vunpack.c.l.b16 %v775
    %v1131 = vunpack.c.h.b16 %v775
    %v1132 = vpack.c.b16 %v1120, %v1116
    %v1133 = vpack.c.b16 %v1121, %v1117
    %v1134 = vpack.c.b16 %v1122, %v1118
    %v1135 = vpack.c.b16 %v1123, %v1119
    %v1136 = vpack.c.b16 %v1128, %v1124
    %v1137 = vpack.c.b16 %v1129, %v1125
    %v1138 = vpack.c.b16 %v1130, %v1126
    %v1139 = vpack.c.b16 %v1131, %v1127
    %v1149 = vsel %vm1022, %v767, 0
    %1151 = vmatprep.subr.bf16.mxu0 %v1133
    %1152 = vmatpush1.bf16.msra.mxu0 %v1132
    %1153 = vmatprep.subr.bf16.mxu0 %v1137
    %1154 = vmatpush1.bf16.msra.mxu0 %v1136
    %1155 = vmatprep.subr.bf16.mxu0 0
    %1156 = vmatpush1.bf16.msra.mxu0 0
    %1157 = vmatprep.subr.bf16.mxu0 0
    %1158 = vmatpush1.bf16.msra.mxu0 0
    %1159 = vmatprep.subr.bf16.mxu0 0
    %1160 = vmatpush1.bf16.msra.mxu0 0
    %1161 = vmatprep.subr.bf16.mxu0 0
    %1162 = vmatpush1.bf16.msra.mxu0 0
    %1163 = vmatprep.subr.bf16.mxu0 0
    %1164 = vmatpush1.bf16.msra.mxu0 0
    %1165 = vmatprep.subr.bf16.mxu0 0
    %1166 = vmatpush1.bf16.msra.mxu0 0
    %1167 = vmatprep.subr.bf16.mxu0 0
    %1168 = vmatpush1.bf16.msra.mxu0 0
    %1169 = vmatprep.subr.bf16.mxu0 0
    %1170 = vmatpush1.bf16.msra.mxu0 0
    %1171 = vmatprep.subr.bf16.mxu0 0
    %1172 = vmatpush1.bf16.msra.mxu0 0
    %1173 = vmatprep.subr.bf16.mxu0 0
    %1174 = vmatpush1.bf16.msra.mxu0 0
    %1175 = vmatprep.subr.bf16.mxu0 0
    %1176 = vmatpush1.bf16.msra.mxu0 0
    %1177 = vmatprep.subr.bf16.mxu0 0
    %1178 = vmatpush1.bf16.msra.mxu0 0
    %1179 = vmatprep.subr.bf16.mxu0 0
    %1180 = vmatpush1.bf16.msra.mxu0 0
    %1181 = vmatprep.subr.bf16.mxu0 0
    %1182 = vmatpush1.bf16.msra.mxu0 0
    %1183 = vmatprep.mubr.bf16.mxu0 0
    %1184 = vmatmul.mubr.bf16.gmra.mrb[0].mxu0 %v1149
    %v1185 = vpop.f32.mrb[0].mxu0
    %v1186 = vadd.f32 %v1061, %v1185
    %v1187 = vpop.f32.mrb[0].mxu0
    %v1188 = vadd.f32 %v1063, %v1187
    %v1189 = vpop.f32.mrb[0].mxu0
    %v1190 = vpop.f32.mrb[0].mxu0
    %1191 = vdwg.mxu0
    %1192 = vmatprep.subr.bf16.mxu0 %v1135
    %1193 = vmatpush1.bf16.msra.mxu0 %v1134
    %1194 = vmatprep.subr.bf16.mxu0 %v1139
    %1195 = vmatpush1.bf16.msra.mxu0 %v1138
    %1196 = vmatprep.subr.bf16.mxu0 0
    %1197 = vmatpush1.bf16.msra.mxu0 0
    %1198 = vmatprep.subr.bf16.mxu0 0
    %1199 = vmatpush1.bf16.msra.mxu0 0
    %1200 = vmatprep.subr.bf16.mxu0 0
    %1201 = vmatpush1.bf16.msra.mxu0 0
    %1202 = vmatprep.subr.bf16.mxu0 0
    %1203 = vmatpush1.bf16.msra.mxu0 0
    %1204 = vmatprep.subr.bf16.mxu0 0
    %1205 = vmatpush1.bf16.msra.mxu0 0
    %1206 = vmatprep.subr.bf16.mxu0 0
    %1207 = vmatpush1.bf16.msra.mxu0 0
    %1208 = vmatprep.subr.bf16.mxu0 0
    %1209 = vmatpush1.bf16.msra.mxu0 0
    %1210 = vmatprep.subr.bf16.mxu0 0
    %1211 = vmatpush1.bf16.msra.mxu0 0
    %1212 = vmatprep.subr.bf16.mxu0 0
    %1213 = vmatpush1.bf16.msra.mxu0 0
    %1214 = vmatprep.subr.bf16.mxu0 0
    %1215 = vmatpush1.bf16.msra.mxu0 0
    %1216 = vmatprep.subr.bf16.mxu0 0
    %1217 = vmatpush1.bf16.msra.mxu0 0
    %1218 = vmatprep.subr.bf16.mxu0 0
    %1219 = vmatpush1.bf16.msra.mxu0 0
    %1220 = vmatprep.subr.bf16.mxu0 0
    %1221 = vmatpush1.bf16.msra.mxu0 0
    %1222 = vmatprep.subr.bf16.mxu0 0
    %1223 = vmatpush1.bf16.msra.mxu0 0
    %1224 = vmatprep.mubr.bf16.mxu0 0
    %1225 = vmatmul.mubr.bf16.gmra.mrb[0].mxu0 %v1149
    %v1226 = vpop.f32.mrb[0].mxu0
    %v1227 = vadd.f32 %v1102, %v1226
    %v1228 = vpop.f32.mrb[0].mxu0
    %v1229 = vadd.f32 %v1104, %v1228
    %v1230 = vpop.f32.mrb[0].mxu0
    %v1231 = vpop.f32.mrb[0].mxu0
    %1232 = vdwg.mxu0
    %s1233 = scalar_lea.vmem %s0, 16
    %v1234 = vld [vmem:[%s1233] sm:$0xff]
    %1235 = vset.pattern.permute.xlu0 0
    %1236 = vperm.xlu0 %1235, %v1234
    %v1237 = vpop.permute.xlu0 %1236
    %vm1238 = vcmp.eq.s32.totalorder %v179, %v1237
    %vm1239 = vcmp.eq.s32.totalorder %v180, %v1237
    %vm1240 = vcmp.eq.s32.totalorder %v181, %v1237
    %vm1241 = vcmp.eq.s32.totalorder %v182, %v1237
    %vm1242 = vcmp.eq.s32.totalorder %v183, %v1237
    %vm1243 = vcmp.eq.s32.totalorder %v184, %v1237
    %vm1244 = vcmp.eq.s32.totalorder %v185, %v1237
    %vm1245 = vcmp.eq.s32.totalorder %v186, %v1237
    %v1246 = vsel %vm1238, 1, 0
    %v1247 = vsel %vm1239, 1, 0
    %v1248 = vsel %vm1240, 1, 0
    %v1249 = vsel %vm1241, 1, 0
    %v1250 = vsel %vm1242, 1, 0
    %v1251 = vsel %vm1243, 1, 0
    %v1252 = vsel %vm1244, 1, 0
    %v1253 = vsel %vm1245, 1, 0
    %v1254 = vcvt.s32.f32 %v1246
    %v1255 = vcvt.s32.f32 %v1247
    %v1256 = vcvt.s32.f32 %v1248
    %v1257 = vcvt.s32.f32 %v1249
    %v1258 = vcvt.s32.f32 %v1250
    %v1259 = vcvt.s32.f32 %v1251
    %v1260 = vcvt.s32.f32 %v1252
    %v1261 = vcvt.s32.f32 %v1253
    %v1262 = vpack.c.bf16 %v1254, %v1254
    %v1263 = vpack.c.bf16 %v1255, %v1255
    %v1264 = vpack.c.bf16 %v1256, %v1256
    %v1265 = vpack.c.bf16 %v1257, %v1257
    %v1266 = vpack.c.bf16 %v1258, %v1258
    %v1267 = vpack.c.bf16 %v1259, %v1259
    %v1268 = vpack.c.bf16 %v1260, %v1260
    %v1269 = vpack.c.bf16 %v1261, %v1261
    %1270 = vmatprep.subr.bf16.mxu0 0
    %1271 = vmatpush1.bf16.msra.mxu0 %v479
    %1272 = vmatprep.subr.bf16.mxu0 0
    %1273 = vmatpush1.bf16.msra.mxu0 %v480
    %1274 = vmatprep.subr.bf16.mxu0 0
    %1275 = vmatpush1.bf16.msra.mxu0 %v481
    %1276 = vmatprep.subr.bf16.mxu0 0
    %1277 = vmatpush1.bf16.msra.mxu0 %v482
    %1278 = vmatprep.subr.bf16.mxu0 0
    %1279 = vmatpush1.bf16.msra.mxu0 %v483
    %1280 = vmatprep.subr.bf16.mxu0 0
    %1281 = vmatpush1.bf16.msra.mxu0 %v484
    %1282 = vmatprep.subr.bf16.mxu0 0
    %1283 = vmatpush1.bf16.msra.mxu0 %v485
    %1284 = vmatprep.subr.bf16.mxu0 0
    %1285 = vmatpush1.bf16.msra.mxu0 %v486
    %1286 = vmatprep.subr.bf16.mxu0 0
    %1287 = vmatpush1.bf16.msra.mxu0 %v487
    %1288 = vmatprep.subr.bf16.mxu0 0
    %1289 = vmatpush1.bf16.msra.mxu0 %v488
    %1290 = vmatprep.subr.bf16.mxu0 0
    %1291 = vmatpush1.bf16.msra.mxu0 %v489
    %1292 = vmatprep.subr.bf16.mxu0 0
    %1293 = vmatpush1.bf16.msra.mxu0 %v490
    %1294 = vmatprep.subr.bf16.mxu0 0
    %1295 = vmatpush1.bf16.msra.mxu0 %v491
    %1296 = vmatprep.subr.bf16.mxu0 0
    %1297 = vmatpush1.bf16.msra.mxu0 %v492
    %1298 = vmatprep.subr.bf16.mxu0 0
    %1299 = vmatpush1.bf16.msra.mxu0 %v493
    %1300 = vmatprep.subr.bf16.mxu0 0
    %1301 = vmatpush1.bf16.msra.mxu0 %v494
    %1302 = vmatprep.mubr.bf16.mxu0 %v1263
    %1303 = vmatmul.mubr.bf16.gmra.mrb[0].mxu0 %v1262
    %v1304 = vpop.f32.mrb[0].mxu0
    %v1305 = vadd.f32 0.0, %v1304
    %v1306 = vpop.f32.mrb[0].mxu0
    %v1307 = vpop.f32.mrb[0].mxu0
    %v1308 = vpop.f32.mrb[0].mxu0
    %1309 = vdwg.mxu0
    %1310 = vmatprep.subr.bf16.mxu0 0
    %1311 = vmatpush1.bf16.msra.mxu0 %v495
    %1312 = vmatprep.subr.bf16.mxu0 0
    %1313 = vmatpush1.bf16.msra.mxu0 %v496
    %1314 = vmatprep.subr.bf16.mxu0 0
    %1315 = vmatpush1.bf16.msra.mxu0 %v497
    %1316 = vmatprep.subr.bf16.mxu0 0
    %1317 = vmatpush1.bf16.msra.mxu0 %v498
    %1318 = vmatprep.subr.bf16.mxu0 0
    %1319 = vmatpush1.bf16.msra.mxu0 %v499
    %1320 = vmatprep.subr.bf16.mxu0 0
    %1321 = vmatpush1.bf16.msra.mxu0 %v500
    %1322 = vmatprep.subr.bf16.mxu0 0
    %1323 = vmatpush1.bf16.msra.mxu0 %v501
    %1324 = vmatprep.subr.bf16.mxu0 0
    %1325 = vmatpush1.bf16.msra.mxu0 %v502
    %1326 = vmatprep.subr.bf16.mxu0 0
    %1327 = vmatpush1.bf16.msra.mxu0 %v503
    %1328 = vmatprep.subr.bf16.mxu0 0
    %1329 = vmatpush1.bf16.msra.mxu0 %v504
    %1330 = vmatprep.subr.bf16.mxu0 0
    %1331 = vmatpush1.bf16.msra.mxu0 %v505
    %1332 = vmatprep.subr.bf16.mxu0 0
    %1333 = vmatpush1.bf16.msra.mxu0 %v506
    %1334 = vmatprep.subr.bf16.mxu0 0
    %1335 = vmatpush1.bf16.msra.mxu0 %v507
    %1336 = vmatprep.subr.bf16.mxu0 0
    %1337 = vmatpush1.bf16.msra.mxu0 %v508
    %1338 = vmatprep.subr.bf16.mxu0 0
    %1339 = vmatpush1.bf16.msra.mxu0 %v509
    %1340 = vmatprep.subr.bf16.mxu0 0
    %1341 = vmatpush1.bf16.msra.mxu0 %v510
    %1342 = vmatprep.mubr.bf16.mxu0 %v1265
    %1343 = vmatmul.mubr.bf16.gmra.mrb[0].mxu0 %v1264
    %v1344 = vpop.f32.mrb[0].mxu0
    %v1345 = vadd.f32 %v1305, %v1344
    %v1346 = vpop.f32.mrb[0].mxu0
    %v1347 = vpop.f32.mrb[0].mxu0
    %v1348 = vpop.f32.mrb[0].mxu0
    %1349 = vdwg.mxu0
    %1350 = vmatprep.subr.bf16.mxu0 0
    %1351 = vmatpush1.bf16.msra.mxu0 %v511
    %1352 = vmatprep.subr.bf16.mxu0 0
    %1353 = vmatpush1.bf16.msra.mxu0 %v512
    %1354 = vmatprep.subr.bf16.mxu0 0
    %1355 = vmatpush1.bf16.msra.mxu0 %v513
    %1356 = vmatprep.subr.bf16.mxu0 0
    %1357 = vmatpush1.bf16.msra.mxu0 %v514
    %1358 = vmatprep.subr.bf16.mxu0 0
    %1359 = vmatpush1.bf16.msra.mxu0 %v515
    %1360 = vmatprep.subr.bf16.mxu0 0
    %1361 = vmatpush1.bf16.msra.mxu0 %v516
    %1362 = vmatprep.subr.bf16.mxu0 0
    %1363 = vmatpush1.bf16.msra.mxu0 %v517
    %1364 = vmatprep.subr.bf16.mxu0 0
    %1365 = vmatpush1.bf16.msra.mxu0 %v518
    %1366 = vmatprep.subr.bf16.mxu0 0
    %1367 = vmatpush1.bf16.msra.mxu0 %v519
    %1368 = vmatprep.subr.bf16.mxu0 0
    %1369 = vmatpush1.bf16.msra.mxu0 %v520
    %1370 = vmatprep.subr.bf16.mxu0 0
    %1371 = vmatpush1.bf16.msra.mxu0 %v521
    %1372 = vmatprep.subr.bf16.mxu0 0
    %1373 = vmatpush1.bf16.msra.mxu0 %v522
    %1374 = vmatprep.subr.bf16.mxu0 0
    %1375 = vmatpush1.bf16.msra.mxu0 %v523
    %1376 = vmatprep.subr.bf16.mxu0 0
    %1377 = vmatpush1.bf16.msra.mxu0 %v524
    %1378 = vmatprep.subr.bf16.mxu0 0
    %1379 = vmatpush1.bf16.msra.mxu0 %v525
    %1380 = vmatprep.subr.bf16.mxu0 0
    %1381 = vmatpush1.bf16.msra.mxu0 %v526
    %1382 = vmatprep.mubr.bf16.mxu0 %v1267
    %1383 = vmatmul.mubr.bf16.gmra.mrb[0].mxu0 %v1266
    %v1384 = vpop.f32.mrb[0].mxu0
    %v1385 = vadd.f32 %v1345, %v1384
    %v1386 = vpop.f32.mrb[0].mxu0
    %v1387 = vpop.f32.mrb[0].mxu0
    %v1388 = vpop.f32.mrb[0].mxu0
    %1389 = vdwg.mxu0
    %1390 = vmatprep.subr.bf16.mxu0 0
    %1391 = vmatpush1.bf16.msra.mxu0 %v527
    %1392 = vmatprep.subr.bf16.mxu0 0
    %1393 = vmatpush1.bf16.msra.mxu0 %v528
    %1394 = vmatprep.subr.bf16.mxu0 0
    %1395 = vmatpush1.bf16.msra.mxu0 %v529
    %1396 = vmatprep.subr.bf16.mxu0 0
    %1397 = vmatpush1.bf16.msra.mxu0 %v530
    %1398 = vmatprep.subr.bf16.mxu0 0
    %1399 = vmatpush1.bf16.msra.mxu0 %v531
    %1400 = vmatprep.subr.bf16.mxu0 0
    %1401 = vmatpush1.bf16.msra.mxu0 %v532
    %1402 = vmatprep.subr.bf16.mxu0 0
    %1403 = vmatpush1.bf16.msra.mxu0 %v533
    %1404 = vmatprep.subr.bf16.mxu0 0
    %1405 = vmatpush1.bf16.msra.mxu0 %v534
    %1406 = vmatprep.subr.bf16.mxu0 0
    %1407 = vmatpush1.bf16.msra.mxu0 %v535
    %1408 = vmatprep.subr.bf16.mxu0 0
    %1409 = vmatpush1.bf16.msra.mxu0 %v536
    %1410 = vmatprep.subr.bf16.mxu0 0
    %1411 = vmatpush1.bf16.msra.mxu0 %v537
    %1412 = vmatprep.subr.bf16.mxu0 0
    %1413 = vmatpush1.bf16.msra.mxu0 %v538
    %1414 = vmatprep.subr.bf16.mxu0 0
    %1415 = vmatpush1.bf16.msra.mxu0 %v539
    %1416 = vmatprep.subr.bf16.mxu0 0
    %1417 = vmatpush1.bf16.msra.mxu0 %v540
    %1418 = vmatprep.subr.bf16.mxu0 0
    %1419 = vmatpush1.bf16.msra.mxu0 %v541
    %1420 = vmatprep.subr.bf16.mxu0 0
    %1421 = vmatpush1.bf16.msra.mxu0 %v542
    %1422 = vmatprep.mubr.bf16.mxu0 %v1269
    %1423 = vmatmul.mubr.bf16.gmra.mrb[0].mxu0 %v1268
    %v1424 = vpop.f32.mrb[0].mxu0
    %v1425 = vadd.f32 %v1385, %v1424
    %v1426 = vpop.f32.mrb[0].mxu0
    %v1427 = vpop.f32.mrb[0].mxu0
    %v1428 = vpop.f32.mrb[0].mxu0
    %1429 = vdwg.mxu0
    %v1430 = vpack.c.bf16 %v1425, %v1425
    %v1431 = vld [vmem:[%s2 + $0x80] sm:$0xff]
    %v1432 = vld [vmem:[%s2 + $0x88] sm:$0xff]
    %v1433 = vld [vmem:[%s2 + $0x90] sm:$0xff]
    %v1434 = vld [vmem:[%s2 + $0x98] sm:$0xff]
    %v1435 = vld [vmem:[%s2 + $0xa0] sm:$0xff]
    %v1436 = vld [vmem:[%s2 + $0xa8] sm:$0xff]
    %v1437 = vld [vmem:[%s2 + $0xb0] sm:$0xff]
    %v1438 = vld [vmem:[%s2 + $0xb8] sm:$0xff]
    %v1447 = vunpack.c.l.b16 %v1431
    %v1448 = vunpack.c.h.b16 %v1431
    %v1449 = vunpack.c.l.b16 %v1432
    %v1450 = vunpack.c.h.b16 %v1432
    %v1451 = vunpack.c.l.b16 %v1433
    %v1452 = vunpack.c.h.b16 %v1433
    %v1453 = vunpack.c.l.b16 %v1434
    %v1454 = vunpack.c.h.b16 %v1434
    %v1455 = vunpack.c.l.b16 %v1435
    %v1456 = vunpack.c.h.b16 %v1435
    %v1457 = vunpack.c.l.b16 %v1436
    %v1458 = vunpack.c.h.b16 %v1436
    %v1459 = vunpack.c.l.b16 %v1437
    %v1460 = vunpack.c.h.b16 %v1437
    %v1461 = vunpack.c.l.b16 %v1438
    %v1462 = vunpack.c.h.b16 %v1438
    %v1463 = vpack.c.b16 %v1451, %v1447
    %v1464 = vpack.c.b16 %v1452, %v1448
    %v1465 = vpack.c.b16 %v1453, %v1449
    %v1466 = vpack.c.b16 %v1454, %v1450
    %v1467 = vpack.c.b16 %v1459, %v1455
    %v1468 = vpack.c.b16 %v1460, %v1456
    %v1469 = vpack.c.b16 %v1461, %v1457
    %v1470 = vpack.c.b16 %v1462, %v1458
    %v1480 = vsel %vm1022, %v1430, 0
    %1482 = vmatprep.subr.bf16.mxu0 %v1464
    %1483 = vmatpush1.bf16.msra.mxu0 %v1463
    %1484 = vmatprep.subr.bf16.mxu0 %v1468
    %1485 = vmatpush1.bf16.msra.mxu0 %v1467
    %1486 = vmatprep.subr.bf16.mxu0 0
    %1487 = vmatpush1.bf16.msra.mxu0 0
    %1488 = vmatprep.subr.bf16.mxu0 0
    %1489 = vmatpush1.bf16.msra.mxu0 0
    %1490 = vmatprep.subr.bf16.mxu0 0
    %1491 = vmatpush1.bf16.msra.mxu0 0
    %1492 = vmatprep.subr.bf16.mxu0 0
    %1493 = vmatpush1.bf16.msra.mxu0 0
    %1494 = vmatprep.subr.bf16.mxu0 0
    %1495 = vmatpush1.bf16.msra.mxu0 0
    %1496 = vmatprep.subr.bf16.mxu0 0
    %1497 = vmatpush1.bf16.msra.mxu0 0
    %1498 = vmatprep.subr.bf16.mxu0 0
    %1499 = vmatpush1.bf16.msra.mxu0 0
    %1500 = vmatprep.subr.bf16.mxu0 0
    %1501 = vmatpush1.bf16.msra.mxu0 0
    %1502 = vmatprep.subr.bf16.mxu0 0
    %1503 = vmatpush1.bf16.msra.mxu0 0
    %1504 = vmatprep.subr.bf16.mxu0 0
    %1505 = vmatpush1.bf16.msra.mxu0 0
    %1506 = vmatprep.subr.bf16.mxu0 0
    %1507 = vmatpush1.bf16.msra.mxu0 0
    %1508 = vmatprep.subr.bf16.mxu0 0
    %1509 = vmatpush1.bf16.msra.mxu0 0
    %1510 = vmatprep.subr.bf16.mxu0 0
    %1511 = vmatpush1.bf16.msra.mxu0 0
    %1512 = vmatprep.subr.bf16.mxu0 0
    %1513 = vmatpush1.bf16.msra.mxu0 0
    %1514 = vmatprep.mubr.bf16.mxu0 0
    %1515 = vmatmul.mubr.bf16.gmra.mrb[0].mxu0 %v1480
    %v1516 = vpop.f32.mrb[0].mxu0
    %v1517 = vadd.f32 0.0, %v1516
    %v1518 = vpop.f32.mrb[0].mxu0
    %v1519 = vadd.f32 0.0, %v1518
    %v1520 = vpop.f32.mrb[0].mxu0
    %v1521 = vpop.f32.mrb[0].mxu0
    %1522 = vdwg.mxu0
    %1523 = vmatprep.subr.bf16.mxu0 %v1466
    %1524 = vmatpush1.bf16.msra.mxu0 %v1465
    %1525 = vmatprep.subr.bf16.mxu0 %v1470
    %1526 = vmatpush1.bf16.msra.mxu0 %v1469
    %1527 = vmatprep.subr.bf16.mxu0 0
    %1528 = vmatpush1.bf16.msra.mxu0 0
    %1529 = vmatprep.subr.bf16.mxu0 0
    %1530 = vmatpush1.bf16.msra.mxu0 0
    %1531 = vmatprep.subr.bf16.mxu0 0
    %1532 = vmatpush1.bf16.msra.mxu0 0
    %1533 = vmatprep.subr.bf16.mxu0 0
    %1534 = vmatpush1.bf16.msra.mxu0 0
    %1535 = vmatprep.subr.bf16.mxu0 0
    %1536 = vmatpush1.bf16.msra.mxu0 0
    %1537 = vmatprep.subr.bf16.mxu0 0
    %1538 = vmatpush1.bf16.msra.mxu0 0
    %1539 = vmatprep.subr.bf16.mxu0 0
    %1540 = vmatpush1.bf16.msra.mxu0 0
    %1541 = vmatprep.subr.bf16.mxu0 0
    %1542 = vmatpush1.bf16.msra.mxu0 0
    %1543 = vmatprep.subr.bf16.mxu0 0
    %1544 = vmatpush1.bf16.msra.mxu0 0
    %1545 = vmatprep.subr.bf16.mxu0 0
    %1546 = vmatpush1.bf16.msra.mxu0 0
    %1547 = vmatprep.subr.bf16.mxu0 0
    %1548 = vmatpush1.bf16.msra.mxu0 0
    %1549 = vmatprep.subr.bf16.mxu0 0
    %1550 = vmatpush1.bf16.msra.mxu0 0
    %1551 = vmatprep.subr.bf16.mxu0 0
    %1552 = vmatpush1.bf16.msra.mxu0 0
    %1553 = vmatprep.subr.bf16.mxu0 0
    %1554 = vmatpush1.bf16.msra.mxu0 0
    %1555 = vmatprep.mubr.bf16.mxu0 0
    %1556 = vmatmul.mubr.bf16.gmra.mrb[0].mxu0 %v1480
    %v1557 = vpop.f32.mrb[0].mxu0
    %v1558 = vadd.f32 0.0, %v1557
    %v1559 = vpop.f32.mrb[0].mxu0
    %v1560 = vadd.f32 0.0, %v1559
    %v1561 = vpop.f32.mrb[0].mxu0
    %v1562 = vpop.f32.mrb[0].mxu0
    %1563 = vdwg.mxu0
    %v1564 = vadd.f32 %v1186, %v1517
    %v1565 = vadd.f32 %v1188, %v1519
    %v1566 = vadd.f32 %v1227, %v1558
    %v1567 = vadd.f32 %v1229, %v1560
    %s1568 = scalar_lea.vmem %s0, 24
    %v1569 = vld [vmem:[%s1568] sm:$0xff]
    %1570 = vset.pattern.permute.xlu0 0
    %1571 = vperm.xlu0 %1570, %v1569
    %v1572 = vpop.permute.xlu0 %1571
    %vm1573 = vcmp.eq.s32.totalorder %v179, %v1572
    %vm1574 = vcmp.eq.s32.totalorder %v180, %v1572
    %vm1575 = vcmp.eq.s32.totalorder %v181, %v1572
    %vm1576 = vcmp.eq.s32.totalorder %v182, %v1572
    %vm1577 = vcmp.eq.s32.totalorder %v183, %v1572
    %vm1578 = vcmp.eq.s32.totalorder %v184, %v1572
    %vm1579 = vcmp.eq.s32.totalorder %v185, %v1572
    %vm1580 = vcmp.eq.s32.totalorder %v186, %v1572
    %v1581 = vsel %vm1573, 1, 0
    %v1582 = vsel %vm1574, 1, 0
    %v1583 = vsel %vm1575, 1, 0
    %v1584 = vsel %vm1576, 1, 0
    %v1585 = vsel %vm1577, 1, 0
    %v1586 = vsel %vm1578, 1, 0
    %v1587 = vsel %vm1579, 1, 0
    %v1588 = vsel %vm1580, 1, 0
    %v1589 = vcvt.s32.f32 %v1581
    %v1590 = vcvt.s32.f32 %v1582
    %v1591 = vcvt.s32.f32 %v1583
    %v1592 = vcvt.s32.f32 %v1584
    %v1593 = vcvt.s32.f32 %v1585
    %v1594 = vcvt.s32.f32 %v1586
    %v1595 = vcvt.s32.f32 %v1587
    %v1596 = vcvt.s32.f32 %v1588
    %v1597 = vpack.c.bf16 %v1589, %v1589
    %v1598 = vpack.c.bf16 %v1590, %v1590
    %v1599 = vpack.c.bf16 %v1591, %v1591
    %v1600 = vpack.c.bf16 %v1592, %v1592
    %v1601 = vpack.c.bf16 %v1593, %v1593
    %v1602 = vpack.c.bf16 %v1594, %v1594
    %v1603 = vpack.c.bf16 %v1595, %v1595
    %v1604 = vpack.c.bf16 %v1596, %v1596
    %1605 = vmatprep.subr.bf16.mxu0 0
    %1606 = vmatpush1.bf16.msra.mxu0 %v479
    %1607 = vmatprep.subr.bf16.mxu0 0
    %1608 = vmatpush1.bf16.msra.mxu0 %v480
    %1609 = vmatprep.subr.bf16.mxu0 0
    %1610 = vmatpush1.bf16.msra.mxu0 %v481
    %1611 = vmatprep.subr.bf16.mxu0 0
    %1612 = vmatpush1.bf16.msra.mxu0 %v482
    %1613 = vmatprep.subr.bf16.mxu0 0
    %1614 = vmatpush1.bf16.msra.mxu0 %v483
    %1615 = vmatprep.subr.bf16.mxu0 0
    %1616 = vmatpush1.bf16.msra.mxu0 %v484
    %1617 = vmatprep.subr.bf16.mxu0 0
    %1618 = vmatpush1.bf16.msra.mxu0 %v485
    %1619 = vmatprep.subr.bf16.mxu0 0
    %1620 = vmatpush1.bf16.msra.mxu0 %v486
    %1621 = vmatprep.subr.bf16.mxu0 0
    %1622 = vmatpush1.bf16.msra.mxu0 %v487
    %1623 = vmatprep.subr.bf16.mxu0 0
    %1624 = vmatpush1.bf16.msra.mxu0 %v488
    %1625 = vmatprep.subr.bf16.mxu0 0
    %1626 = vmatpush1.bf16.msra.mxu0 %v489
    %1627 = vmatprep.subr.bf16.mxu0 0
    %1628 = vmatpush1.bf16.msra.mxu0 %v490
    %1629 = vmatprep.subr.bf16.mxu0 0
    %1630 = vmatpush1.bf16.msra.mxu0 %v491
    %1631 = vmatprep.subr.bf16.mxu0 0
    %1632 = vmatpush1.bf16.msra.mxu0 %v492
    %1633 = vmatprep.subr.bf16.mxu0 0
    %1634 = vmatpush1.bf16.msra.mxu0 %v493
    %1635 = vmatprep.subr.bf16.mxu0 0
    %1636 = vmatpush1.bf16.msra.mxu0 %v494
    %1637 = vmatprep.mubr.bf16.mxu0 %v1598
    %1638 = vmatmul.mubr.bf16.gmra.mrb[0].mxu0 %v1597
    %v1639 = vpop.f32.mrb[0].mxu0
    %v1640 = vadd.f32 0.0, %v1639
    %v1641 = vpop.f32.mrb[0].mxu0
    %v1642 = vpop.f32.mrb[0].mxu0
    %v1643 = vpop.f32.mrb[0].mxu0
    %1644 = vdwg.mxu0
    %1645 = vmatprep.subr.bf16.mxu0 0
    %1646 = vmatpush1.bf16.msra.mxu0 %v495
    %1647 = vmatprep.subr.bf16.mxu0 0
    %1648 = vmatpush1.bf16.msra.mxu0 %v496
    %1649 = vmatprep.subr.bf16.mxu0 0
    %1650 = vmatpush1.bf16.msra.mxu0 %v497
    %1651 = vmatprep.subr.bf16.mxu0 0
    %1652 = vmatpush1.bf16.msra.mxu0 %v498
    %1653 = vmatprep.subr.bf16.mxu0 0
    %1654 = vmatpush1.bf16.msra.mxu0 %v499
    %1655 = vmatprep.subr.bf16.mxu0 0
    %1656 = vmatpush1.bf16.msra.mxu0 %v500
    %1657 = vmatprep.subr.bf16.mxu0 0
    %1658 = vmatpush1.bf16.msra.mxu0 %v501
    %1659 = vmatprep.subr.bf16.mxu0 0
    %1660 = vmatpush1.bf16.msra.mxu0 %v502
    %1661 = vmatprep.subr.bf16.mxu0 0
    %1662 = vmatpush1.bf16.msra.mxu0 %v503
    %1663 = vmatprep.subr.bf16.mxu0 0
    %1664 = vmatpush1.bf16.msra.mxu0 %v504
    %1665 = vmatprep.subr.bf16.mxu0 0
    %1666 = vmatpush1.bf16.msra.mxu0 %v505
    %1667 = vmatprep.subr.bf16.mxu0 0
    %1668 = vmatpush1.bf16.msra.mxu0 %v506
    %1669 = vmatprep.subr.bf16.mxu0 0
    %1670 = vmatpush1.bf16.msra.mxu0 %v507
    %1671 = vmatprep.subr.bf16.mxu0 0
    %1672 = vmatpush1.bf16.msra.mxu0 %v508
    %1673 = vmatprep.subr.bf16.mxu0 0
    %1674 = vmatpush1.bf16.msra.mxu0 %v509
    %1675 = vmatprep.subr.bf16.mxu0 0
    %1676 = vmatpush1.bf16.msra.mxu0 %v510
    %1677 = vmatprep.mubr.bf16.mxu0 %v1600
    %1678 = vmatmul.mubr.bf16.gmra.mrb[0].mxu0 %v1599
    %v1679 = vpop.f32.mrb[0].mxu0
    %v1680 = vadd.f32 %v1640, %v1679
    %v1681 = vpop.f32.mrb[0].mxu0
    %v1682 = vpop.f32.mrb[0].mxu0
    %v1683 = vpop.f32.mrb[0].mxu0
    %1684 = vdwg.mxu0
    %1685 = vmatprep.subr.bf16.mxu0 0
    %1686 = vmatpush1.bf16.msra.mxu0 %v511
    %1687 = vmatprep.subr.bf16.mxu0 0
    %1688 = vmatpush1.bf16.msra.mxu0 %v512
    %1689 = vmatprep.subr.bf16.mxu0 0
    %1690 = vmatpush1.bf16.msra.mxu0 %v513
    %1691 = vmatprep.subr.bf16.mxu0 0
    %1692 = vmatpush1.bf16.msra.mxu0 %v514
    %1693 = vmatprep.subr.bf16.mxu0 0
    %1694 = vmatpush1.bf16.msra.mxu0 %v515
    %1695 = vmatprep.subr.bf16.mxu0 0
    %1696 = vmatpush1.bf16.msra.mxu0 %v516
    %1697 = vmatprep.subr.bf16.mxu0 0
    %1698 = vmatpush1.bf16.msra.mxu0 %v517
    %1699 = vmatprep.subr.bf16.mxu0 0
    %1700 = vmatpush1.bf16.msra.mxu0 %v518
    %1701 = vmatprep.subr.bf16.mxu0 0
    %1702 = vmatpush1.bf16.msra.mxu0 %v519
    %1703 = vmatprep.subr.bf16.mxu0 0
    %1704 = vmatpush1.bf16.msra.mxu0 %v520
    %1705 = vmatprep.subr.bf16.mxu0 0
    %1706 = vmatpush1.bf16.msra.mxu0 %v521
    %1707 = vmatprep.subr.bf16.mxu0 0
    %1708 = vmatpush1.bf16.msra.mxu0 %v522
    %1709 = vmatprep.subr.bf16.mxu0 0
    %1710 = vmatpush1.bf16.msra.mxu0 %v523
    %1711 = vmatprep.subr.bf16.mxu0 0
    %1712 = vmatpush1.bf16.msra.mxu0 %v524
    %1713 = vmatprep.subr.bf16.mxu0 0
    %1714 = vmatpush1.bf16.msra.mxu0 %v525
    %1715 = vmatprep.subr.bf16.mxu0 0
    %1716 = vmatpush1.bf16.msra.mxu0 %v526
    %1717 = vmatprep.mubr.bf16.mxu0 %v1602
    %1718 = vmatmul.mubr.bf16.gmra.mrb[0].mxu0 %v1601
    %v1719 = vpop.f32.mrb[0].mxu0
    %v1720 = vadd.f32 %v1680, %v1719
    %v1721 = vpop.f32.mrb[0].mxu0
    %v1722 = vpop.f32.mrb[0].mxu0
    %v1723 = vpop.f32.mrb[0].mxu0
    %1724 = vdwg.mxu0
    %1725 = vmatprep.subr.bf16.mxu0 0
    %1726 = vmatpush1.bf16.msra.mxu0 %v527
    %1727 = vmatprep.subr.bf16.mxu0 0
    %1728 = vmatpush1.bf16.msra.mxu0 %v528
    %1729 = vmatprep.subr.bf16.mxu0 0
    %1730 = vmatpush1.bf16.msra.mxu0 %v529
    %1731 = vmatprep.subr.bf16.mxu0 0
    %1732 = vmatpush1.bf16.msra.mxu0 %v530
    %1733 = vmatprep.subr.bf16.mxu0 0
    %1734 = vmatpush1.bf16.msra.mxu0 %v531
    %1735 = vmatprep.subr.bf16.mxu0 0
    %1736 = vmatpush1.bf16.msra.mxu0 %v532
    %1737 = vmatprep.subr.bf16.mxu0 0
    %1738 = vmatpush1.bf16.msra.mxu0 %v533
    %1739 = vmatprep.subr.bf16.mxu0 0
    %1740 = vmatpush1.bf16.msra.mxu0 %v534
    %1741 = vmatprep.subr.bf16.mxu0 0
    %1742 = vmatpush1.bf16.msra.mxu0 %v535
    %1743 = vmatprep.subr.bf16.mxu0 0
    %1744 = vmatpush1.bf16.msra.mxu0 %v536
    %1745 = vmatprep.subr.bf16.mxu0 0
    %1746 = vmatpush1.bf16.msra.mxu0 %v537
    %1747 = vmatprep.subr.bf16.mxu0 0
    %1748 = vmatpush1.bf16.msra.mxu0 %v538
    %1749 = vmatprep.subr.bf16.mxu0 0
    %1750 = vmatpush1.bf16.msra.mxu0 %v539
    %1751 = vmatprep.subr.bf16.mxu0 0
    %1752 = vmatpush1.bf16.msra.mxu0 %v540
    %1753 = vmatprep.subr.bf16.mxu0 0
    %1754 = vmatpush1.bf16.msra.mxu0 %v541
    %1755 = vmatprep.subr.bf16.mxu0 0
    %1756 = vmatpush1.bf16.msra.mxu0 %v542
    %1757 = vmatprep.mubr.bf16.mxu0 %v1604
    %1758 = vmatmul.mubr.bf16.gmra.mrb[0].mxu0 %v1603
    %v1759 = vpop.f32.mrb[0].mxu0
    %v1760 = vadd.f32 %v1720, %v1759
    %v1761 = vpop.f32.mrb[0].mxu0
    %v1762 = vpop.f32.mrb[0].mxu0
    %v1763 = vpop.f32.mrb[0].mxu0
    %1764 = vdwg.mxu0
    %v1765 = vpack.c.bf16 %v1760, %v1760
    %v1766 = vld [vmem:[%s2 + $0xc0] sm:$0xff]
    %v1767 = vld [vmem:[%s2 + $0xc8] sm:$0xff]
    %v1768 = vld [vmem:[%s2 + $0xd0] sm:$0xff]
    %v1769 = vld [vmem:[%s2 + $0xd8] sm:$0xff]
    %v1770 = vld [vmem:[%s2 + $0xe0] sm:$0xff]
    %v1771 = vld [vmem:[%s2 + $0xe8] sm:$0xff]
    %v1772 = vld [vmem:[%s2 + $0xf0] sm:$0xff]
    %v1773 = vld [vmem:[%s2 + $0xf8] sm:$0xff]
    %v1782 = vunpack.c.l.b16 %v1766
    %v1783 = vunpack.c.h.b16 %v1766
    %v1784 = vunpack.c.l.b16 %v1767
    %v1785 = vunpack.c.h.b16 %v1767
    %v1786 = vunpack.c.l.b16 %v1768
    %v1787 = vunpack.c.h.b16 %v1768
    %v1788 = vunpack.c.l.b16 %v1769
    %v1789 = vunpack.c.h.b16 %v1769
    %v1790 = vunpack.c.l.b16 %v1770
    %v1791 = vunpack.c.h.b16 %v1770
    %v1792 = vunpack.c.l.b16 %v1771
    %v1793 = vunpack.c.h.b16 %v1771
    %v1794 = vunpack.c.l.b16 %v1772
    %v1795 = vunpack.c.h.b16 %v1772
    %v1796 = vunpack.c.l.b16 %v1773
    %v1797 = vunpack.c.h.b16 %v1773
    %v1798 = vpack.c.b16 %v1786, %v1782
    %v1799 = vpack.c.b16 %v1787, %v1783
    %v1800 = vpack.c.b16 %v1788, %v1784
    %v1801 = vpack.c.b16 %v1789, %v1785
    %v1802 = vpack.c.b16 %v1794, %v1790
    %v1803 = vpack.c.b16 %v1795, %v1791
    %v1804 = vpack.c.b16 %v1796, %v1792
    %v1805 = vpack.c.b16 %v1797, %v1793
    %v1815 = vsel %vm1022, %v1765, 0
    %1817 = vmatprep.subr.bf16.mxu0 %v1799
    %1818 = vmatpush1.bf16.msra.mxu0 %v1798
    %1819 = vmatprep.subr.bf16.mxu0 %v1803
    %1820 = vmatpush1.bf16.msra.mxu0 %v1802
    %1821 = vmatprep.subr.bf16.mxu0 0
    %1822 = vmatpush1.bf16.msra.mxu0 0
    %1823 = vmatprep.subr.bf16.mxu0 0
    %1824 = vmatpush1.bf16.msra.mxu0 0
    %1825 = vmatprep.subr.bf16.mxu0 0
    %1826 = vmatpush1.bf16.msra.mxu0 0
    %1827 = vmatprep.subr.bf16.mxu0 0
    %1828 = vmatpush1.bf16.msra.mxu0 0
    %1829 = vmatprep.subr.bf16.mxu0 0
    %1830 = vmatpush1.bf16.msra.mxu0 0
    %1831 = vmatprep.subr.bf16.mxu0 0
    %1832 = vmatpush1.bf16.msra.mxu0 0
    %1833 = vmatprep.subr.bf16.mxu0 0
    %1834 = vmatpush1.bf16.msra.mxu0 0
    %1835 = vmatprep.subr.bf16.mxu0 0
    %1836 = vmatpush1.bf16.msra.mxu0 0
    %1837 = vmatprep.subr.bf16.mxu0 0
    %1838 = vmatpush1.bf16.msra.mxu0 0
    %1839 = vmatprep.subr.bf16.mxu0 0
    %1840 = vmatpush1.bf16.msra.mxu0 0
    %1841 = vmatprep.subr.bf16.mxu0 0
    %1842 = vmatpush1.bf16.msra.mxu0 0
    %1843 = vmatprep.subr.bf16.mxu0 0
    %1844 = vmatpush1.bf16.msra.mxu0 0
    %1845 = vmatprep.subr.bf16.mxu0 0
    %1846 = vmatpush1.bf16.msra.mxu0 0
    %1847 = vmatprep.subr.bf16.mxu0 0
    %1848 = vmatpush1.bf16.msra.mxu0 0
    %1849 = vmatprep.mubr.bf16.mxu0 0
    %1850 = vmatmul.mubr.bf16.gmra.mrb[0].mxu0 %v1815
    %v1851 = vpop.f32.mrb[0].mxu0
    %v1852 = vadd.f32 0.0, %v1851
    %v1853 = vpop.f32.mrb[0].mxu0
    %v1854 = vadd.f32 0.0, %v1853
    %v1855 = vpop.f32.mrb[0].mxu0
    %v1856 = vpop.f32.mrb[0].mxu0
    %1857 = vdwg.mxu0
    %1858 = vmatprep.subr.bf16.mxu0 %v1801
    %1859 = vmatpush1.bf16.msra.mxu0 %v1800
    %1860 = vmatprep.subr.bf16.mxu0 %v1805
    %1861 = vmatpush1.bf16.msra.mxu0 %v1804
    %1862 = vmatprep.subr.bf16.mxu0 0
    %1863 = vmatpush1.bf16.msra.mxu0 0
    %1864 = vmatprep.subr.bf16.mxu0 0
    %1865 = vmatpush1.bf16.msra.mxu0 0
    %1866 = vmatprep.subr.bf16.mxu0 0
    %1867 = vmatpush1.bf16.msra.mxu0 0
    %1868 = vmatprep.subr.bf16.mxu0 0
    %1869 = vmatpush1.bf16.msra.mxu0 0
    %1870 = vmatprep.subr.bf16.mxu0 0
    %1871 = vmatpush1.bf16.msra.mxu0 0
    %1872 = vmatprep.subr.bf16.mxu0 0
    %1873 = vmatpush1.bf16.msra.mxu0 0
    %1874 = vmatprep.subr.bf16.mxu0 0
    %1875 = vmatpush1.bf16.msra.mxu0 0
    %1876 = vmatprep.subr.bf16.mxu0 0
    %1877 = vmatpush1.bf16.msra.mxu0 0
    %1878 = vmatprep.subr.bf16.mxu0 0
    %1879 = vmatpush1.bf16.msra.mxu0 0
    %1880 = vmatprep.subr.bf16.mxu0 0
    %1881 = vmatpush1.bf16.msra.mxu0 0
    %1882 = vmatprep.subr.bf16.mxu0 0
    %1883 = vmatpush1.bf16.msra.mxu0 0
    %1884 = vmatprep.subr.bf16.mxu0 0
    %1885 = vmatpush1.bf16.msra.mxu0 0
    %1886 = vmatprep.subr.bf16.mxu0 0
    %1887 = vmatpush1.bf16.msra.mxu0 0
    %1888 = vmatprep.subr.bf16.mxu0 0
    %1889 = vmatpush1.bf16.msra.mxu0 0
    %1890 = vmatprep.mubr.bf16.mxu0 0
    %1891 = vmatmul.mubr.bf16.gmra.mrb[0].mxu0 %v1815
    %v1892 = vpop.f32.mrb[0].mxu0
    %v1893 = vadd.f32 0.0, %v1892
    %v1894 = vpop.f32.mrb[0].mxu0
    %v1895 = vadd.f32 0.0, %v1894
    %v1896 = vpop.f32.mrb[0].mxu0
    %v1897 = vpop.f32.mrb[0].mxu0
    %1898 = vdwg.mxu0
    %v1899 = vadd.f32 %v1564, %v1852
    %v1900 = vadd.f32 %v1565, %v1854
    %v1901 = vadd.f32 %v1566, %v1893
    %v1902 = vadd.f32 %v1567, %v1895
    %s1903 = scalar_lea.vmem %s0, 32
    %v1904 = vld [vmem:[%s1903] sm:$0xff]
    %1905 = vset.pattern.permute.xlu0 0
    %1906 = vperm.xlu0 %1905, %v1904
    %v1907 = vpop.permute.xlu0 %1906
    %vm1908 = vcmp.eq.s32.totalorder %v179, %v1907
    %vm1909 = vcmp.eq.s32.totalorder %v180, %v1907
    %vm1910 = vcmp.eq.s32.totalorder %v181, %v1907
    %vm1911 = vcmp.eq.s32.totalorder %v182, %v1907
    %vm1912 = vcmp.eq.s32.totalorder %v183, %v1907
    %vm1913 = vcmp.eq.s32.totalorder %v184, %v1907
    %vm1914 = vcmp.eq.s32.totalorder %v185, %v1907
    %vm1915 = vcmp.eq.s32.totalorder %v186, %v1907
    %v1916 = vsel %vm1908, 1, 0
    %v1917 = vsel %vm1909, 1, 0
    %v1918 = vsel %vm1910, 1, 0
    %v1919 = vsel %vm1911, 1, 0
    %v1920 = vsel %vm1912, 1, 0
    %v1921 = vsel %vm1913, 1, 0
    %v1922 = vsel %vm1914, 1, 0
    %v1923 = vsel %vm1915, 1, 0
    %v1924 = vcvt.s32.f32 %v1916
    %v1925 = vcvt.s32.f32 %v1917
    %v1926 = vcvt.s32.f32 %v1918
    %v1927 = vcvt.s32.f32 %v1919
    %v1928 = vcvt.s32.f32 %v1920
    %v1929 = vcvt.s32.f32 %v1921
    %v1930 = vcvt.s32.f32 %v1922
    %v1931 = vcvt.s32.f32 %v1923
    %v1932 = vpack.c.bf16 %v1924, %v1924
    %v1933 = vpack.c.bf16 %v1925, %v1925
    %v1934 = vpack.c.bf16 %v1926, %v1926
    %v1935 = vpack.c.bf16 %v1927, %v1927
    %v1936 = vpack.c.bf16 %v1928, %v1928
    %v1937 = vpack.c.bf16 %v1929, %v1929
    %v1938 = vpack.c.bf16 %v1930, %v1930
    %v1939 = vpack.c.bf16 %v1931, %v1931
    %1940 = vmatprep.subr.bf16.mxu0 0
    %1941 = vmatpush1.bf16.msra.mxu0 %v479
    %1942 = vmatprep.subr.bf16.mxu0 0
    %1943 = vmatpush1.bf16.msra.mxu0 %v480
    %1944 = vmatprep.subr.bf16.mxu0 0
    %1945 = vmatpush1.bf16.msra.mxu0 %v481
    %1946 = vmatprep.subr.bf16.mxu0 0
    %1947 = vmatpush1.bf16.msra.mxu0 %v482
    %1948 = vmatprep.subr.bf16.mxu0 0
    %1949 = vmatpush1.bf16.msra.mxu0 %v483
    %1950 = vmatprep.subr.bf16.mxu0 0
    %1951 = vmatpush1.bf16.msra.mxu0 %v484
    %1952 = vmatprep.subr.bf16.mxu0 0
    %1953 = vmatpush1.bf16.msra.mxu0 %v485
    %1954 = vmatprep.subr.bf16.mxu0 0
    %1955 = vmatpush1.bf16.msra.mxu0 %v486
    %1956 = vmatprep.subr.bf16.mxu0 0
    %1957 = vmatpush1.bf16.msra.mxu0 %v487
    %1958 = vmatprep.subr.bf16.mxu0 0
    %1959 = vmatpush1.bf16.msra.mxu0 %v488
    %1960 = vmatprep.subr.bf16.mxu0 0
    %1961 = vmatpush1.bf16.msra.mxu0 %v489
    %1962 = vmatprep.subr.bf16.mxu0 0
    %1963 = vmatpush1.bf16.msra.mxu0 %v490
    %1964 = vmatprep.subr.bf16.mxu0 0
    %1965 = vmatpush1.bf16.msra.mxu0 %v491
    %1966 = vmatprep.subr.bf16.mxu0 0
    %1967 = vmatpush1.bf16.msra.mxu0 %v492
    %1968 = vmatprep.subr.bf16.mxu0 0
    %1969 = vmatpush1.bf16.msra.mxu0 %v493
    %1970 = vmatprep.subr.bf16.mxu0 0
    %1971 = vmatpush1.bf16.msra.mxu0 %v494
    %1972 = vmatprep.mubr.bf16.mxu0 %v1933
    %1973 = vmatmul.mubr.bf16.gmra.mrb[0].mxu0 %v1932
    %v1974 = vpop.f32.mrb[0].mxu0
    %v1975 = vadd.f32 0.0, %v1974
    %v1976 = vpop.f32.mrb[0].mxu0
    %v1977 = vpop.f32.mrb[0].mxu0
    %v1978 = vpop.f32.mrb[0].mxu0
    %1979 = vdwg.mxu0
    %1980 = vmatprep.subr.bf16.mxu0 0
    %1981 = vmatpush1.bf16.msra.mxu0 %v495
    %1982 = vmatprep.subr.bf16.mxu0 0
    %1983 = vmatpush1.bf16.msra.mxu0 %v496
    %1984 = vmatprep.subr.bf16.mxu0 0
    %1985 = vmatpush1.bf16.msra.mxu0 %v497
    %1986 = vmatprep.subr.bf16.mxu0 0
    %1987 = vmatpush1.bf16.msra.mxu0 %v498
    %1988 = vmatprep.subr.bf16.mxu0 0
    %1989 = vmatpush1.bf16.msra.mxu0 %v499
    %1990 = vmatprep.subr.bf16.mxu0 0
    %1991 = vmatpush1.bf16.msra.mxu0 %v500
    %1992 = vmatprep.subr.bf16.mxu0 0
    %1993 = vmatpush1.bf16.msra.mxu0 %v501
    %1994 = vmatprep.subr.bf16.mxu0 0
    %1995 = vmatpush1.bf16.msra.mxu0 %v502
    %1996 = vmatprep.subr.bf16.mxu0 0
    %1997 = vmatpush1.bf16.msra.mxu0 %v503
    %1998 = vmatprep.subr.bf16.mxu0 0
    %1999 = vmatpush1.bf16.msra.mxu0 %v504
    %2000 = vmatprep.subr.bf16.mxu0 0
    %2001 = vmatpush1.bf16.msra.mxu0 %v505
    %2002 = vmatprep.subr.bf16.mxu0 0
    %2003 = vmatpush1.bf16.msra.mxu0 %v506
    %2004 = vmatprep.subr.bf16.mxu0 0
    %2005 = vmatpush1.bf16.msra.mxu0 %v507
    %2006 = vmatprep.subr.bf16.mxu0 0
    %2007 = vmatpush1.bf16.msra.mxu0 %v508
    %2008 = vmatprep.subr.bf16.mxu0 0
    %2009 = vmatpush1.bf16.msra.mxu0 %v509
    %2010 = vmatprep.subr.bf16.mxu0 0
    %2011 = vmatpush1.bf16.msra.mxu0 %v510
    %2012 = vmatprep.mubr.bf16.mxu0 %v1935
    %2013 = vmatmul.mubr.bf16.gmra.mrb[0].mxu0 %v1934
    %v2014 = vpop.f32.mrb[0].mxu0
    %v2015 = vadd.f32 %v1975, %v2014
    %v2016 = vpop.f32.mrb[0].mxu0
    %v2017 = vpop.f32.mrb[0].mxu0
    %v2018 = vpop.f32.mrb[0].mxu0
    %2019 = vdwg.mxu0
    %2020 = vmatprep.subr.bf16.mxu0 0
    %2021 = vmatpush1.bf16.msra.mxu0 %v511
    %2022 = vmatprep.subr.bf16.mxu0 0
    %2023 = vmatpush1.bf16.msra.mxu0 %v512
    %2024 = vmatprep.subr.bf16.mxu0 0
    %2025 = vmatpush1.bf16.msra.mxu0 %v513
    %2026 = vmatprep.subr.bf16.mxu0 0
    %2027 = vmatpush1.bf16.msra.mxu0 %v514
    %2028 = vmatprep.subr.bf16.mxu0 0
    %2029 = vmatpush1.bf16.msra.mxu0 %v515
    %2030 = vmatprep.subr.bf16.mxu0 0
    %2031 = vmatpush1.bf16.msra.mxu0 %v516
    %2032 = vmatprep.subr.bf16.mxu0 0
    %2033 = vmatpush1.bf16.msra.mxu0 %v517
    %2034 = vmatprep.subr.bf16.mxu0 0
    %2035 = vmatpush1.bf16.msra.mxu0 %v518
    %2036 = vmatprep.subr.bf16.mxu0 0
    %2037 = vmatpush1.bf16.msra.mxu0 %v519
    %2038 = vmatprep.subr.bf16.mxu0 0
    %2039 = vmatpush1.bf16.msra.mxu0 %v520
    %2040 = vmatprep.subr.bf16.mxu0 0
    %2041 = vmatpush1.bf16.msra.mxu0 %v521
    %2042 = vmatprep.subr.bf16.mxu0 0
    %2043 = vmatpush1.bf16.msra.mxu0 %v522
    %2044 = vmatprep.subr.bf16.mxu0 0
    %2045 = vmatpush1.bf16.msra.mxu0 %v523
    %2046 = vmatprep.subr.bf16.mxu0 0
    %2047 = vmatpush1.bf16.msra.mxu0 %v524
    %2048 = vmatprep.subr.bf16.mxu0 0
    %2049 = vmatpush1.bf16.msra.mxu0 %v525
    %2050 = vmatprep.subr.bf16.mxu0 0
    %2051 = vmatpush1.bf16.msra.mxu0 %v526
    %2052 = vmatprep.mubr.bf16.mxu0 %v1937
    %2053 = vmatmul.mubr.bf16.gmra.mrb[0].mxu0 %v1936
    %v2054 = vpop.f32.mrb[0].mxu0
    %v2055 = vadd.f32 %v2015, %v2054
    %v2056 = vpop.f32.mrb[0].mxu0
    %v2057 = vpop.f32.mrb[0].mxu0
    %v2058 = vpop.f32.mrb[0].mxu0
    %2059 = vdwg.mxu0
    %2060 = vmatprep.subr.bf16.mxu0 0
    %2061 = vmatpush1.bf16.msra.mxu0 %v527
    %2062 = vmatprep.subr.bf16.mxu0 0
    %2063 = vmatpush1.bf16.msra.mxu0 %v528
    %2064 = vmatprep.subr.bf16.mxu0 0
    %2065 = vmatpush1.bf16.msra.mxu0 %v529
    %2066 = vmatprep.subr.bf16.mxu0 0
    %2067 = vmatpush1.bf16.msra.mxu0 %v530
    %2068 = vmatprep.subr.bf16.mxu0 0
    %2069 = vmatpush1.bf16.msra.mxu0 %v531
    %2070 = vmatprep.subr.bf16.mxu0 0
    %2071 = vmatpush1.bf16.msra.mxu0 %v532
    %2072 = vmatprep.subr.bf16.mxu0 0
    %2073 = vmatpush1.bf16.msra.mxu0 %v533
    %2074 = vmatprep.subr.bf16.mxu0 0
    %2075 = vmatpush1.bf16.msra.mxu0 %v534
    %2076 = vmatprep.subr.bf16.mxu0 0
    %2077 = vmatpush1.bf16.msra.mxu0 %v535
    %2078 = vmatprep.subr.bf16.mxu0 0
    %2079 = vmatpush1.bf16.msra.mxu0 %v536
    %2080 = vmatprep.subr.bf16.mxu0 0
    %2081 = vmatpush1.bf16.msra.mxu0 %v537
    %2082 = vmatprep.subr.bf16.mxu0 0
    %2083 = vmatpush1.bf16.msra.mxu0 %v538
    %2084 = vmatprep.subr.bf16.mxu0 0
    %2085 = vmatpush1.bf16.msra.mxu0 %v539
    %2086 = vmatprep.subr.bf16.mxu0 0
    %2087 = vmatpush1.bf16.msra.mxu0 %v540
    %2088 = vmatprep.subr.bf16.mxu0 0
    %2089 = vmatpush1.bf16.msra.mxu0 %v541
    %2090 = vmatprep.subr.bf16.mxu0 0
    %2091 = vmatpush1.bf16.msra.mxu0 %v542
    %2092 = vmatprep.mubr.bf16.mxu0 %v1939
    %2093 = vmatmul.mubr.bf16.gmra.mrb[0].mxu0 %v1938
    %v2094 = vpop.f32.mrb[0].mxu0
    %v2095 = vadd.f32 %v2055, %v2094
    %v2096 = vpop.f32.mrb[0].mxu0
    %v2097 = vpop.f32.mrb[0].mxu0
    %v2098 = vpop.f32.mrb[0].mxu0
    %2099 = vdwg.mxu0
    %v2100 = vpack.c.bf16 %v2095, %v2095
    %v2101 = vld [vmem:[%s2 + $0x100] sm:$0xff]
    %v2102 = vld [vmem:[%s2 + $0x108] sm:$0xff]
    %v2103 = vld [vmem:[%s2 + $0x110] sm:$0xff]
    %v2104 = vld [vmem:[%s2 + $0x118] sm:$0xff]
    %v2105 = vld [vmem:[%s2 + $0x120] sm:$0xff]
    %v2106 = vld [vmem:[%s2 + $0x128] sm:$0xff]
    %v2107 = vld [vmem:[%s2 + $0x130] sm:$0xff]
    %v2108 = vld [vmem:[%s2 + $0x138] sm:$0xff]
    %v2117 = vunpack.c.l.b16 %v2101
    %v2118 = vunpack.c.h.b16 %v2101
    %v2119 = vunpack.c.l.b16 %v2102
    %v2120 = vunpack.c.h.b16 %v2102
    %v2121 = vunpack.c.l.b16 %v2103
    %v2122 = vunpack.c.h.b16 %v2103
    %v2123 = vunpack.c.l.b16 %v2104
    %v2124 = vunpack.c.h.b16 %v2104
    %v2125 = vunpack.c.l.b16 %v2105
    %v2126 = vunpack.c.h.b16 %v2105
    %v2127 = vunpack.c.l.b16 %v2106
    %v2128 = vunpack.c.h.b16 %v2106
    %v2129 = vunpack.c.l.b16 %v2107
    %v2130 = vunpack.c.h.b16 %v2107
    %v2131 = vunpack.c.l.b16 %v2108
    %v2132 = vunpack.c.h.b16 %v2108
    %v2133 = vpack.c.b16 %v2121, %v2117
    %v2134 = vpack.c.b16 %v2122, %v2118
    %v2135 = vpack.c.b16 %v2123, %v2119
    %v2136 = vpack.c.b16 %v2124, %v2120
    %v2137 = vpack.c.b16 %v2129, %v2125
    %v2138 = vpack.c.b16 %v2130, %v2126
    %v2139 = vpack.c.b16 %v2131, %v2127
    %v2140 = vpack.c.b16 %v2132, %v2128
    %v2150 = vsel %vm1022, %v2100, 0
    %2152 = vmatprep.subr.bf16.mxu0 %v2134
    %2153 = vmatpush1.bf16.msra.mxu0 %v2133
    %2154 = vmatprep.subr.bf16.mxu0 %v2138
    %2155 = vmatpush1.bf16.msra.mxu0 %v2137
    %2156 = vmatprep.subr.bf16.mxu0 0
    %2157 = vmatpush1.bf16.msra.mxu0 0
    %2158 = vmatprep.subr.bf16.mxu0 0
    %2159 = vmatpush1.bf16.msra.mxu0 0
    %2160 = vmatprep.subr.bf16.mxu0 0
    %2161 = vmatpush1.bf16.msra.mxu0 0
    %2162 = vmatprep.subr.bf16.mxu0 0
    %2163 = vmatpush1.bf16.msra.mxu0 0
    %2164 = vmatprep.subr.bf16.mxu0 0
    %2165 = vmatpush1.bf16.msra.mxu0 0
    %2166 = vmatprep.subr.bf16.mxu0 0
    %2167 = vmatpush1.bf16.msra.mxu0 0
    %2168 = vmatprep.subr.bf16.mxu0 0
    %2169 = vmatpush1.bf16.msra.mxu0 0
    %2170 = vmatprep.subr.bf16.mxu0 0
    %2171 = vmatpush1.bf16.msra.mxu0 0
    %2172 = vmatprep.subr.bf16.mxu0 0
    %2173 = vmatpush1.bf16.msra.mxu0 0
    %2174 = vmatprep.subr.bf16.mxu0 0
    %2175 = vmatpush1.bf16.msra.mxu0 0
    %2176 = vmatprep.subr.bf16.mxu0 0
    %2177 = vmatpush1.bf16.msra.mxu0 0
    %2178 = vmatprep.subr.bf16.mxu0 0
    %2179 = vmatpush1.bf16.msra.mxu0 0
    %2180 = vmatprep.subr.bf16.mxu0 0
    %2181 = vmatpush1.bf16.msra.mxu0 0
    %2182 = vmatprep.subr.bf16.mxu0 0
    %2183 = vmatpush1.bf16.msra.mxu0 0
    %2184 = vmatprep.mubr.bf16.mxu0 0
    %2185 = vmatmul.mubr.bf16.gmra.mrb[0].mxu0 %v2150
    %v2186 = vpop.f32.mrb[0].mxu0
    %v2187 = vadd.f32 0.0, %v2186
    %v2188 = vpop.f32.mrb[0].mxu0
    %v2189 = vadd.f32 0.0, %v2188
    %v2190 = vpop.f32.mrb[0].mxu0
    %v2191 = vpop.f32.mrb[0].mxu0
    %2192 = vdwg.mxu0
    %2193 = vmatprep.subr.bf16.mxu0 %v2136
    %2194 = vmatpush1.bf16.msra.mxu0 %v2135
    %2195 = vmatprep.subr.bf16.mxu0 %v2140
    %2196 = vmatpush1.bf16.msra.mxu0 %v2139
    %2197 = vmatprep.subr.bf16.mxu0 0
    %2198 = vmatpush1.bf16.msra.mxu0 0
    %2199 = vmatprep.subr.bf16.mxu0 0
    %2200 = vmatpush1.bf16.msra.mxu0 0
    %2201 = vmatprep.subr.bf16.mxu0 0
    %2202 = vmatpush1.bf16.msra.mxu0 0
    %2203 = vmatprep.subr.bf16.mxu0 0
    %2204 = vmatpush1.bf16.msra.mxu0 0
    %2205 = vmatprep.subr.bf16.mxu0 0
    %2206 = vmatpush1.bf16.msra.mxu0 0
    %2207 = vmatprep.subr.bf16.mxu0 0
    %2208 = vmatpush1.bf16.msra.mxu0 0
    %2209 = vmatprep.subr.bf16.mxu0 0
    %2210 = vmatpush1.bf16.msra.mxu0 0
    %2211 = vmatprep.subr.bf16.mxu0 0
    %2212 = vmatpush1.bf16.msra.mxu0 0
    %2213 = vmatprep.subr.bf16.mxu0 0
    %2214 = vmatpush1.bf16.msra.mxu0 0
    %2215 = vmatprep.subr.bf16.mxu0 0
    %2216 = vmatpush1.bf16.msra.mxu0 0
    %2217 = vmatprep.subr.bf16.mxu0 0
    %2218 = vmatpush1.bf16.msra.mxu0 0
    %2219 = vmatprep.subr.bf16.mxu0 0
    %2220 = vmatpush1.bf16.msra.mxu0 0
    %2221 = vmatprep.subr.bf16.mxu0 0
    %2222 = vmatpush1.bf16.msra.mxu0 0
    %2223 = vmatprep.subr.bf16.mxu0 0
    %2224 = vmatpush1.bf16.msra.mxu0 0
    %2225 = vmatprep.mubr.bf16.mxu0 0
    %2226 = vmatmul.mubr.bf16.gmra.mrb[0].mxu0 %v2150
    %v2227 = vpop.f32.mrb[0].mxu0
    %v2228 = vadd.f32 0.0, %v2227
    %v2229 = vpop.f32.mrb[0].mxu0
    %v2230 = vadd.f32 0.0, %v2229
    %v2231 = vpop.f32.mrb[0].mxu0
    %v2232 = vpop.f32.mrb[0].mxu0
    %2233 = vdwg.mxu0
    %v2234 = vadd.f32 %v1899, %v2187
    %v2235 = vadd.f32 %v1900, %v2189
    %v2236 = vadd.f32 %v1901, %v2228
    %v2237 = vadd.f32 %v1902, %v2230
    %s2238 = scalar_lea.vmem %s0, 40
    %v2239 = vld [vmem:[%s2238] sm:$0xff]
    %2240 = vset.pattern.permute.xlu0 0
    %2241 = vperm.xlu0 %2240, %v2239
    %v2242 = vpop.permute.xlu0 %2241
    %vm2243 = vcmp.eq.s32.totalorder %v179, %v2242
    %vm2244 = vcmp.eq.s32.totalorder %v180, %v2242
    %vm2245 = vcmp.eq.s32.totalorder %v181, %v2242
    %vm2246 = vcmp.eq.s32.totalorder %v182, %v2242
    %vm2247 = vcmp.eq.s32.totalorder %v183, %v2242
    %vm2248 = vcmp.eq.s32.totalorder %v184, %v2242
    %vm2249 = vcmp.eq.s32.totalorder %v185, %v2242
    %vm2250 = vcmp.eq.s32.totalorder %v186, %v2242
    %v2251 = vsel %vm2243, 1, 0
    %v2252 = vsel %vm2244, 1, 0
    %v2253 = vsel %vm2245, 1, 0
    %v2254 = vsel %vm2246, 1, 0
    %v2255 = vsel %vm2247, 1, 0
    %v2256 = vsel %vm2248, 1, 0
    %v2257 = vsel %vm2249, 1, 0
    %v2258 = vsel %vm2250, 1, 0
    %v2259 = vcvt.s32.f32 %v2251
    %v2260 = vcvt.s32.f32 %v2252
    %v2261 = vcvt.s32.f32 %v2253
    %v2262 = vcvt.s32.f32 %v2254
    %v2263 = vcvt.s32.f32 %v2255
    %v2264 = vcvt.s32.f32 %v2256
    %v2265 = vcvt.s32.f32 %v2257
    %v2266 = vcvt.s32.f32 %v2258
    %v2267 = vpack.c.bf16 %v2259, %v2259
    %v2268 = vpack.c.bf16 %v2260, %v2260
    %v2269 = vpack.c.bf16 %v2261, %v2261
    %v2270 = vpack.c.bf16 %v2262, %v2262
    %v2271 = vpack.c.bf16 %v2263, %v2263
    %v2272 = vpack.c.bf16 %v2264, %v2264
    %v2273 = vpack.c.bf16 %v2265, %v2265
    %v2274 = vpack.c.bf16 %v2266, %v2266
    %2275 = vmatprep.subr.bf16.mxu0 0
    %2276 = vmatpush1.bf16.msra.mxu0 %v479
    %2277 = vmatprep.subr.bf16.mxu0 0
    %2278 = vmatpush1.bf16.msra.mxu0 %v480
    %2279 = vmatprep.subr.bf16.mxu0 0
    %2280 = vmatpush1.bf16.msra.mxu0 %v481
    %2281 = vmatprep.subr.bf16.mxu0 0
    %2282 = vmatpush1.bf16.msra.mxu0 %v482
    %2283 = vmatprep.subr.bf16.mxu0 0
    %2284 = vmatpush1.bf16.msra.mxu0 %v483
    %2285 = vmatprep.subr.bf16.mxu0 0
    %2286 = vmatpush1.bf16.msra.mxu0 %v484
    %2287 = vmatprep.subr.bf16.mxu0 0
    %2288 = vmatpush1.bf16.msra.mxu0 %v485
    %2289 = vmatprep.subr.bf16.mxu0 0
    %2290 = vmatpush1.bf16.msra.mxu0 %v486
    %2291 = vmatprep.subr.bf16.mxu0 0
    %2292 = vmatpush1.bf16.msra.mxu0 %v487
    %2293 = vmatprep.subr.bf16.mxu0 0
    %2294 = vmatpush1.bf16.msra.mxu0 %v488
    %2295 = vmatprep.subr.bf16.mxu0 0
    %2296 = vmatpush1.bf16.msra.mxu0 %v489
    %2297 = vmatprep.subr.bf16.mxu0 0
    %2298 = vmatpush1.bf16.msra.mxu0 %v490
    %2299 = vmatprep.subr.bf16.mxu0 0
    %2300 = vmatpush1.bf16.msra.mxu0 %v491
    %2301 = vmatprep.subr.bf16.mxu0 0
    %2302 = vmatpush1.bf16.msra.mxu0 %v492
    %2303 = vmatprep.subr.bf16.mxu0 0
    %2304 = vmatpush1.bf16.msra.mxu0 %v493
    %2305 = vmatprep.subr.bf16.mxu0 0
    %2306 = vmatpush1.bf16.msra.mxu0 %v494
    %2307 = vmatprep.mubr.bf16.mxu0 %v2268
    %2308 = vmatmul.mubr.bf16.gmra.mrb[0].mxu0 %v2267
    %v2309 = vpop.f32.mrb[0].mxu0
    %v2310 = vadd.f32 0.0, %v2309
    %v2311 = vpop.f32.mrb[0].mxu0
    %v2312 = vpop.f32.mrb[0].mxu0
    %v2313 = vpop.f32.mrb[0].mxu0
    %2314 = vdwg.mxu0
    %2315 = vmatprep.subr.bf16.mxu0 0
    %2316 = vmatpush1.bf16.msra.mxu0 %v495
    %2317 = vmatprep.subr.bf16.mxu0 0
    %2318 = vmatpush1.bf16.msra.mxu0 %v496
    %2319 = vmatprep.subr.bf16.mxu0 0
    %2320 = vmatpush1.bf16.msra.mxu0 %v497
    %2321 = vmatprep.subr.bf16.mxu0 0
    %2322 = vmatpush1.bf16.msra.mxu0 %v498
    %2323 = vmatprep.subr.bf16.mxu0 0
    %2324 = vmatpush1.bf16.msra.mxu0 %v499
    %2325 = vmatprep.subr.bf16.mxu0 0
    %2326 = vmatpush1.bf16.msra.mxu0 %v500
    %2327 = vmatprep.subr.bf16.mxu0 0
    %2328 = vmatpush1.bf16.msra.mxu0 %v501
    %2329 = vmatprep.subr.bf16.mxu0 0
    %2330 = vmatpush1.bf16.msra.mxu0 %v502
    %2331 = vmatprep.subr.bf16.mxu0 0
    %2332 = vmatpush1.bf16.msra.mxu0 %v503
    %2333 = vmatprep.subr.bf16.mxu0 0
    %2334 = vmatpush1.bf16.msra.mxu0 %v504
    %2335 = vmatprep.subr.bf16.mxu0 0
    %2336 = vmatpush1.bf16.msra.mxu0 %v505
    %2337 = vmatprep.subr.bf16.mxu0 0
    %2338 = vmatpush1.bf16.msra.mxu0 %v506
    %2339 = vmatprep.subr.bf16.mxu0 0
    %2340 = vmatpush1.bf16.msra.mxu0 %v507
    %2341 = vmatprep.subr.bf16.mxu0 0
    %2342 = vmatpush1.bf16.msra.mxu0 %v508
    %2343 = vmatprep.subr.bf16.mxu0 0
    %2344 = vmatpush1.bf16.msra.mxu0 %v509
    %2345 = vmatprep.subr.bf16.mxu0 0
    %2346 = vmatpush1.bf16.msra.mxu0 %v510
    %2347 = vmatprep.mubr.bf16.mxu0 %v2270
    %2348 = vmatmul.mubr.bf16.gmra.mrb[0].mxu0 %v2269
    %v2349 = vpop.f32.mrb[0].mxu0
    %v2350 = vadd.f32 %v2310, %v2349
    %v2351 = vpop.f32.mrb[0].mxu0
    %v2352 = vpop.f32.mrb[0].mxu0
    %v2353 = vpop.f32.mrb[0].mxu0
    %2354 = vdwg.mxu0
    %2355 = vmatprep.subr.bf16.mxu0 0
    %2356 = vmatpush1.bf16.msra.mxu0 %v511
    %2357 = vmatprep.subr.bf16.mxu0 0
    %2358 = vmatpush1.bf16.msra.mxu0 %v512
    %2359 = vmatprep.subr.bf16.mxu0 0
    %2360 = vmatpush1.bf16.msra.mxu0 %v513
    %2361 = vmatprep.subr.bf16.mxu0 0
    %2362 = vmatpush1.bf16.msra.mxu0 %v514
    %2363 = vmatprep.subr.bf16.mxu0 0
    %2364 = vmatpush1.bf16.msra.mxu0 %v515
    %2365 = vmatprep.subr.bf16.mxu0 0
    %2366 = vmatpush1.bf16.msra.mxu0 %v516
    %2367 = vmatprep.subr.bf16.mxu0 0
    %2368 = vmatpush1.bf16.msra.mxu0 %v517
    %2369 = vmatprep.subr.bf16.mxu0 0
    %2370 = vmatpush1.bf16.msra.mxu0 %v518
    %2371 = vmatprep.subr.bf16.mxu0 0
    %2372 = vmatpush1.bf16.msra.mxu0 %v519
    %2373 = vmatprep.subr.bf16.mxu0 0
    %2374 = vmatpush1.bf16.msra.mxu0 %v520
    %2375 = vmatprep.subr.bf16.mxu0 0
    %2376 = vmatpush1.bf16.msra.mxu0 %v521
    %2377 = vmatprep.subr.bf16.mxu0 0
    %2378 = vmatpush1.bf16.msra.mxu0 %v522
    %2379 = vmatprep.subr.bf16.mxu0 0
    %2380 = vmatpush1.bf16.msra.mxu0 %v523
    %2381 = vmatprep.subr.bf16.mxu0 0
    %2382 = vmatpush1.bf16.msra.mxu0 %v524
    %2383 = vmatprep.subr.bf16.mxu0 0
    %2384 = vmatpush1.bf16.msra.mxu0 %v525
    %2385 = vmatprep.subr.bf16.mxu0 0
    %2386 = vmatpush1.bf16.msra.mxu0 %v526
    %2387 = vmatprep.mubr.bf16.mxu0 %v2272
    %2388 = vmatmul.mubr.bf16.gmra.mrb[0].mxu0 %v2271
    %v2389 = vpop.f32.mrb[0].mxu0
    %v2390 = vadd.f32 %v2350, %v2389
    %v2391 = vpop.f32.mrb[0].mxu0
    %v2392 = vpop.f32.mrb[0].mxu0
    %v2393 = vpop.f32.mrb[0].mxu0
    %2394 = vdwg.mxu0
    %2395 = vmatprep.subr.bf16.mxu0 0
    %2396 = vmatpush1.bf16.msra.mxu0 %v527
    %2397 = vmatprep.subr.bf16.mxu0 0
    %2398 = vmatpush1.bf16.msra.mxu0 %v528
    %2399 = vmatprep.subr.bf16.mxu0 0
    %2400 = vmatpush1.bf16.msra.mxu0 %v529
    %2401 = vmatprep.subr.bf16.mxu0 0
    %2402 = vmatpush1.bf16.msra.mxu0 %v530
    %2403 = vmatprep.subr.bf16.mxu0 0
    %2404 = vmatpush1.bf16.msra.mxu0 %v531
    %2405 = vmatprep.subr.bf16.mxu0 0
    %2406 = vmatpush1.bf16.msra.mxu0 %v532
    %2407 = vmatprep.subr.bf16.mxu0 0
    %2408 = vmatpush1.bf16.msra.mxu0 %v533
    %2409 = vmatprep.subr.bf16.mxu0 0
    %2410 = vmatpush1.bf16.msra.mxu0 %v534
    %2411 = vmatprep.subr.bf16.mxu0 0
    %2412 = vmatpush1.bf16.msra.mxu0 %v535
    %2413 = vmatprep.subr.bf16.mxu0 0
    %2414 = vmatpush1.bf16.msra.mxu0 %v536
    %2415 = vmatprep.subr.bf16.mxu0 0
    %2416 = vmatpush1.bf16.msra.mxu0 %v537
    %2417 = vmatprep.subr.bf16.mxu0 0
    %2418 = vmatpush1.bf16.msra.mxu0 %v538
    %2419 = vmatprep.subr.bf16.mxu0 0
    %2420 = vmatpush1.bf16.msra.mxu0 %v539
    %2421 = vmatprep.subr.bf16.mxu0 0
    %2422 = vmatpush1.bf16.msra.mxu0 %v540
    %2423 = vmatprep.subr.bf16.mxu0 0
    %2424 = vmatpush1.bf16.msra.mxu0 %v541
    %2425 = vmatprep.subr.bf16.mxu0 0
    %2426 = vmatpush1.bf16.msra.mxu0 %v542
    %2427 = vmatprep.mubr.bf16.mxu0 %v2274
    %2428 = vmatmul.mubr.bf16.gmra.mrb[0].mxu0 %v2273
    %v2429 = vpop.f32.mrb[0].mxu0
    %v2430 = vadd.f32 %v2390, %v2429
    %v2431 = vpop.f32.mrb[0].mxu0
    %v2432 = vpop.f32.mrb[0].mxu0
    %v2433 = vpop.f32.mrb[0].mxu0
    %2434 = vdwg.mxu0
    %v2435 = vpack.c.bf16 %v2430, %v2430
    %v2436 = vld [vmem:[%s2 + $0x140] sm:$0xff]
    %v2437 = vld [vmem:[%s2 + $0x148] sm:$0xff]
    %v2438 = vld [vmem:[%s2 + $0x150] sm:$0xff]
    %v2439 = vld [vmem:[%s2 + $0x158] sm:$0xff]
    %v2440 = vld [vmem:[%s2 + $0x160] sm:$0xff]
    %v2441 = vld [vmem:[%s2 + $0x168] sm:$0xff]
    %v2442 = vld [vmem:[%s2 + $0x170] sm:$0xff]
    %v2443 = vld [vmem:[%s2 + $0x178] sm:$0xff]
    %v2452 = vunpack.c.l.b16 %v2436
    %v2453 = vunpack.c.h.b16 %v2436
    %v2454 = vunpack.c.l.b16 %v2437
    %v2455 = vunpack.c.h.b16 %v2437
    %v2456 = vunpack.c.l.b16 %v2438
    %v2457 = vunpack.c.h.b16 %v2438
    %v2458 = vunpack.c.l.b16 %v2439
    %v2459 = vunpack.c.h.b16 %v2439
    %v2460 = vunpack.c.l.b16 %v2440
    %v2461 = vunpack.c.h.b16 %v2440
    %v2462 = vunpack.c.l.b16 %v2441
    %v2463 = vunpack.c.h.b16 %v2441
    %v2464 = vunpack.c.l.b16 %v2442
    %v2465 = vunpack.c.h.b16 %v2442
    %v2466 = vunpack.c.l.b16 %v2443
    %v2467 = vunpack.c.h.b16 %v2443
    %v2468 = vpack.c.b16 %v2456, %v2452
    %v2469 = vpack.c.b16 %v2457, %v2453
    %v2470 = vpack.c.b16 %v2458, %v2454
    %v2471 = vpack.c.b16 %v2459, %v2455
    %v2472 = vpack.c.b16 %v2464, %v2460
    %v2473 = vpack.c.b16 %v2465, %v2461
    %v2474 = vpack.c.b16 %v2466, %v2462
    %v2475 = vpack.c.b16 %v2467, %v2463
    %v2485 = vsel %vm1022, %v2435, 0
    %2487 = vmatprep.subr.bf16.mxu0 %v2469
    %2488 = vmatpush1.bf16.msra.mxu0 %v2468
    %2489 = vmatprep.subr.bf16.mxu0 %v2473
    %2490 = vmatpush1.bf16.msra.mxu0 %v2472
    %2491 = vmatprep.subr.bf16.mxu0 0
    %2492 = vmatpush1.bf16.msra.mxu0 0
    %2493 = vmatprep.subr.bf16.mxu0 0
    %2494 = vmatpush1.bf16.msra.mxu0 0
    %2495 = vmatprep.subr.bf16.mxu0 0
    %2496 = vmatpush1.bf16.msra.mxu0 0
    %2497 = vmatprep.subr.bf16.mxu0 0
    %2498 = vmatpush1.bf16.msra.mxu0 0
    %2499 = vmatprep.subr.bf16.mxu0 0
    %2500 = vmatpush1.bf16.msra.mxu0 0
    %2501 = vmatprep.subr.bf16.mxu0 0
    %2502 = vmatpush1.bf16.msra.mxu0 0
    %2503 = vmatprep.subr.bf16.mxu0 0
    %2504 = vmatpush1.bf16.msra.mxu0 0
    %2505 = vmatprep.subr.bf16.mxu0 0
    %2506 = vmatpush1.bf16.msra.mxu0 0
    %2507 = vmatprep.subr.bf16.mxu0 0
    %2508 = vmatpush1.bf16.msra.mxu0 0
    %2509 = vmatprep.subr.bf16.mxu0 0
    %2510 = vmatpush1.bf16.msra.mxu0 0
    %2511 = vmatprep.subr.bf16.mxu0 0
    %2512 = vmatpush1.bf16.msra.mxu0 0
    %2513 = vmatprep.subr.bf16.mxu0 0
    %2514 = vmatpush1.bf16.msra.mxu0 0
    %2515 = vmatprep.subr.bf16.mxu0 0
    %2516 = vmatpush1.bf16.msra.mxu0 0
    %2517 = vmatprep.subr.bf16.mxu0 0
    %2518 = vmatpush1.bf16.msra.mxu0 0
    %2519 = vmatprep.mubr.bf16.mxu0 0
    %2520 = vmatmul.mubr.bf16.gmra.mrb[0].mxu0 %v2485
    %v2521 = vpop.f32.mrb[0].mxu0
    %v2522 = vadd.f32 0.0, %v2521
    %v2523 = vpop.f32.mrb[0].mxu0
    %v2524 = vadd.f32 0.0, %v2523
    %v2525 = vpop.f32.mrb[0].mxu0
    %v2526 = vpop.f32.mrb[0].mxu0
    %2527 = vdwg.mxu0
    %2528 = vmatprep.subr.bf16.mxu0 %v2471
    %2529 = vmatpush1.bf16.msra.mxu0 %v2470
    %2530 = vmatprep.subr.bf16.mxu0 %v2475
    %2531 = vmatpush1.bf16.msra.mxu0 %v2474
    %2532 = vmatprep.subr.bf16.mxu0 0
    %2533 = vmatpush1.bf16.msra.mxu0 0
    %2534 = vmatprep.subr.bf16.mxu0 0
    %2535 = vmatpush1.bf16.msra.mxu0 0
    %2536 = vmatprep.subr.bf16.mxu0 0
    %2537 = vmatpush1.bf16.msra.mxu0 0
    %2538 = vmatprep.subr.bf16.mxu0 0
    %2539 = vmatpush1.bf16.msra.mxu0 0
    %2540 = vmatprep.subr.bf16.mxu0 0
    %2541 = vmatpush1.bf16.msra.mxu0 0
    %2542 = vmatprep.subr.bf16.mxu0 0
    %2543 = vmatpush1.bf16.msra.mxu0 0
    %2544 = vmatprep.subr.bf16.mxu0 0
    %2545 = vmatpush1.bf16.msra.mxu0 0
    %2546 = vmatprep.subr.bf16.mxu0 0
    %2547 = vmatpush1.bf16.msra.mxu0 0
    %2548 = vmatprep.subr.bf16.mxu0 0
    %2549 = vmatpush1.bf16.msra.mxu0 0
    %2550 = vmatprep.subr.bf16.mxu0 0
    %2551 = vmatpush1.bf16.msra.mxu0 0
    %2552 = vmatprep.subr.bf16.mxu0 0
    %2553 = vmatpush1.bf16.msra.mxu0 0
    %2554 = vmatprep.subr.bf16.mxu0 0
    %2555 = vmatpush1.bf16.msra.mxu0 0
    %2556 = vmatprep.subr.bf16.mxu0 0
    %2557 = vmatpush1.bf16.msra.mxu0 0
    %2558 = vmatprep.subr.bf16.mxu0 0
    %2559 = vmatpush1.bf16.msra.mxu0 0
    %2560 = vmatprep.mubr.bf16.mxu0 0
    %2561 = vmatmul.mubr.bf16.gmra.mrb[0].mxu0 %v2485
    %v2562 = vpop.f32.mrb[0].mxu0
    %v2563 = vadd.f32 0.0, %v2562
    %v2564 = vpop.f32.mrb[0].mxu0
    %v2565 = vadd.f32 0.0, %v2564
    %v2566 = vpop.f32.mrb[0].mxu0
    %v2567 = vpop.f32.mrb[0].mxu0
    %2568 = vdwg.mxu0
    %v2569 = vadd.f32 %v2234, %v2522
    %v2570 = vadd.f32 %v2235, %v2524
    %v2571 = vadd.f32 %v2236, %v2563
    %v2572 = vadd.f32 %v2237, %v2565
    %s2573 = scalar_lea.vmem %s0, 48
    %v2574 = vld [vmem:[%s2573] sm:$0xff]
    %2575 = vset.pattern.permute.xlu0 0
    %2576 = vperm.xlu0 %2575, %v2574
    %v2577 = vpop.permute.xlu0 %2576
    %vm2578 = vcmp.eq.s32.totalorder %v179, %v2577
    %vm2579 = vcmp.eq.s32.totalorder %v180, %v2577
    %vm2580 = vcmp.eq.s32.totalorder %v181, %v2577
    %vm2581 = vcmp.eq.s32.totalorder %v182, %v2577
    %vm2582 = vcmp.eq.s32.totalorder %v183, %v2577
    %vm2583 = vcmp.eq.s32.totalorder %v184, %v2577
    %vm2584 = vcmp.eq.s32.totalorder %v185, %v2577
    %vm2585 = vcmp.eq.s32.totalorder %v186, %v2577
    %v2586 = vsel %vm2578, 1, 0
    %v2587 = vsel %vm2579, 1, 0
    %v2588 = vsel %vm2580, 1, 0
    %v2589 = vsel %vm2581, 1, 0
    %v2590 = vsel %vm2582, 1, 0
    %v2591 = vsel %vm2583, 1, 0
    %v2592 = vsel %vm2584, 1, 0
    %v2593 = vsel %vm2585, 1, 0
    %v2594 = vcvt.s32.f32 %v2586
    %v2595 = vcvt.s32.f32 %v2587
    %v2596 = vcvt.s32.f32 %v2588
    %v2597 = vcvt.s32.f32 %v2589
    %v2598 = vcvt.s32.f32 %v2590
    %v2599 = vcvt.s32.f32 %v2591
    %v2600 = vcvt.s32.f32 %v2592
    %v2601 = vcvt.s32.f32 %v2593
    %v2602 = vpack.c.bf16 %v2594, %v2594
    %v2603 = vpack.c.bf16 %v2595, %v2595
    %v2604 = vpack.c.bf16 %v2596, %v2596
    %v2605 = vpack.c.bf16 %v2597, %v2597
    %v2606 = vpack.c.bf16 %v2598, %v2598
    %v2607 = vpack.c.bf16 %v2599, %v2599
    %v2608 = vpack.c.bf16 %v2600, %v2600
    %v2609 = vpack.c.bf16 %v2601, %v2601
    %2610 = vmatprep.subr.bf16.mxu0 0
    %2611 = vmatpush1.bf16.msra.mxu0 %v479
    %2612 = vmatprep.subr.bf16.mxu0 0
    %2613 = vmatpush1.bf16.msra.mxu0 %v480
    %2614 = vmatprep.subr.bf16.mxu0 0
    %2615 = vmatpush1.bf16.msra.mxu0 %v481
    %2616 = vmatprep.subr.bf16.mxu0 0
    %2617 = vmatpush1.bf16.msra.mxu0 %v482
    %2618 = vmatprep.subr.bf16.mxu0 0
    %2619 = vmatpush1.bf16.msra.mxu0 %v483
    %2620 = vmatprep.subr.bf16.mxu0 0
    %2621 = vmatpush1.bf16.msra.mxu0 %v484
    %2622 = vmatprep.subr.bf16.mxu0 0
    %2623 = vmatpush1.bf16.msra.mxu0 %v485
    %2624 = vmatprep.subr.bf16.mxu0 0
    %2625 = vmatpush1.bf16.msra.mxu0 %v486
    %2626 = vmatprep.subr.bf16.mxu0 0
    %2627 = vmatpush1.bf16.msra.mxu0 %v487
    %2628 = vmatprep.subr.bf16.mxu0 0
    %2629 = vmatpush1.bf16.msra.mxu0 %v488
    %2630 = vmatprep.subr.bf16.mxu0 0
    %2631 = vmatpush1.bf16.msra.mxu0 %v489
    %2632 = vmatprep.subr.bf16.mxu0 0
    %2633 = vmatpush1.bf16.msra.mxu0 %v490
    %2634 = vmatprep.subr.bf16.mxu0 0
    %2635 = vmatpush1.bf16.msra.mxu0 %v491
    %2636 = vmatprep.subr.bf16.mxu0 0
    %2637 = vmatpush1.bf16.msra.mxu0 %v492
    %2638 = vmatprep.subr.bf16.mxu0 0
    %2639 = vmatpush1.bf16.msra.mxu0 %v493
    %2640 = vmatprep.subr.bf16.mxu0 0
    %2641 = vmatpush1.bf16.msra.mxu0 %v494
    %2642 = vmatprep.mubr.bf16.mxu0 %v2603
    %2643 = vmatmul.mubr.bf16.gmra.mrb[0].mxu0 %v2602
    %v2644 = vpop.f32.mrb[0].mxu0
    %v2645 = vadd.f32 0.0, %v2644
    %v2646 = vpop.f32.mrb[0].mxu0
    %v2647 = vpop.f32.mrb[0].mxu0
    %v2648 = vpop.f32.mrb[0].mxu0
    %2649 = vdwg.mxu0
    %2650 = vmatprep.subr.bf16.mxu0 0
    %2651 = vmatpush1.bf16.msra.mxu0 %v495
    %2652 = vmatprep.subr.bf16.mxu0 0
    %2653 = vmatpush1.bf16.msra.mxu0 %v496
    %2654 = vmatprep.subr.bf16.mxu0 0
    %2655 = vmatpush1.bf16.msra.mxu0 %v497
    %2656 = vmatprep.subr.bf16.mxu0 0
    %2657 = vmatpush1.bf16.msra.mxu0 %v498
    %2658 = vmatprep.subr.bf16.mxu0 0
    %2659 = vmatpush1.bf16.msra.mxu0 %v499
    %2660 = vmatprep.subr.bf16.mxu0 0
    %2661 = vmatpush1.bf16.msra.mxu0 %v500
    %2662 = vmatprep.subr.bf16.mxu0 0
    %2663 = vmatpush1.bf16.msra.mxu0 %v501
    %2664 = vmatprep.subr.bf16.mxu0 0
    %2665 = vmatpush1.bf16.msra.mxu0 %v502
    %2666 = vmatprep.subr.bf16.mxu0 0
    %2667 = vmatpush1.bf16.msra.mxu0 %v503
    %2668 = vmatprep.subr.bf16.mxu0 0
    %2669 = vmatpush1.bf16.msra.mxu0 %v504
    %2670 = vmatprep.subr.bf16.mxu0 0
    %2671 = vmatpush1.bf16.msra.mxu0 %v505
    %2672 = vmatprep.subr.bf16.mxu0 0
    %2673 = vmatpush1.bf16.msra.mxu0 %v506
    %2674 = vmatprep.subr.bf16.mxu0 0
    %2675 = vmatpush1.bf16.msra.mxu0 %v507
    %2676 = vmatprep.subr.bf16.mxu0 0
    %2677 = vmatpush1.bf16.msra.mxu0 %v508
    %2678 = vmatprep.subr.bf16.mxu0 0
    %2679 = vmatpush1.bf16.msra.mxu0 %v509
    %2680 = vmatprep.subr.bf16.mxu0 0
    %2681 = vmatpush1.bf16.msra.mxu0 %v510
    %2682 = vmatprep.mubr.bf16.mxu0 %v2605
    %2683 = vmatmul.mubr.bf16.gmra.mrb[0].mxu0 %v2604
    %v2684 = vpop.f32.mrb[0].mxu0
    %v2685 = vadd.f32 %v2645, %v2684
    %v2686 = vpop.f32.mrb[0].mxu0
    %v2687 = vpop.f32.mrb[0].mxu0
    %v2688 = vpop.f32.mrb[0].mxu0
    %2689 = vdwg.mxu0
    %2690 = vmatprep.subr.bf16.mxu0 0
    %2691 = vmatpush1.bf16.msra.mxu0 %v511
    %2692 = vmatprep.subr.bf16.mxu0 0
    %2693 = vmatpush1.bf16.msra.mxu0 %v512
    %2694 = vmatprep.subr.bf16.mxu0 0
    %2695 = vmatpush1.bf16.msra.mxu0 %v513
    %2696 = vmatprep.subr.bf16.mxu0 0
    %2697 = vmatpush1.bf16.msra.mxu0 %v514
    %2698 = vmatprep.subr.bf16.mxu0 0
    %2699 = vmatpush1.bf16.msra.mxu0 %v515
    %2700 = vmatprep.subr.bf16.mxu0 0
    %2701 = vmatpush1.bf16.msra.mxu0 %v516
    %2702 = vmatprep.subr.bf16.mxu0 0
    %2703 = vmatpush1.bf16.msra.mxu0 %v517
    %2704 = vmatprep.subr.bf16.mxu0 0
    %2705 = vmatpush1.bf16.msra.mxu0 %v518
    %2706 = vmatprep.subr.bf16.mxu0 0
    %2707 = vmatpush1.bf16.msra.mxu0 %v519
    %2708 = vmatprep.subr.bf16.mxu0 0
    %2709 = vmatpush1.bf16.msra.mxu0 %v520
    %2710 = vmatprep.subr.bf16.mxu0 0
    %2711 = vmatpush1.bf16.msra.mxu0 %v521
    %2712 = vmatprep.subr.bf16.mxu0 0
    %2713 = vmatpush1.bf16.msra.mxu0 %v522
    %2714 = vmatprep.subr.bf16.mxu0 0
    %2715 = vmatpush1.bf16.msra.mxu0 %v523
    %2716 = vmatprep.subr.bf16.mxu0 0
    %2717 = vmatpush1.bf16.msra.mxu0 %v524
    %2718 = vmatprep.subr.bf16.mxu0 0
    %2719 = vmatpush1.bf16.msra.mxu0 %v525
    %2720 = vmatprep.subr.bf16.mxu0 0
    %2721 = vmatpush1.bf16.msra.mxu0 %v526
    %2722 = vmatprep.mubr.bf16.mxu0 %v2607
    %2723 = vmatmul.mubr.bf16.gmra.mrb[0].mxu0 %v2606
    %v2724 = vpop.f32.mrb[0].mxu0
    %v2725 = vadd.f32 %v2685, %v2724
    %v2726 = vpop.f32.mrb[0].mxu0
    %v2727 = vpop.f32.mrb[0].mxu0
    %v2728 = vpop.f32.mrb[0].mxu0
    %2729 = vdwg.mxu0
    %2730 = vmatprep.subr.bf16.mxu0 0
    %2731 = vmatpush1.bf16.msra.mxu0 %v527
    %2732 = vmatprep.subr.bf16.mxu0 0
    %2733 = vmatpush1.bf16.msra.mxu0 %v528
    %2734 = vmatprep.subr.bf16.mxu0 0
    %2735 = vmatpush1.bf16.msra.mxu0 %v529
    %2736 = vmatprep.subr.bf16.mxu0 0
    %2737 = vmatpush1.bf16.msra.mxu0 %v530
    %2738 = vmatprep.subr.bf16.mxu0 0
    %2739 = vmatpush1.bf16.msra.mxu0 %v531
    %2740 = vmatprep.subr.bf16.mxu0 0
    %2741 = vmatpush1.bf16.msra.mxu0 %v532
    %2742 = vmatprep.subr.bf16.mxu0 0
    %2743 = vmatpush1.bf16.msra.mxu0 %v533
    %2744 = vmatprep.subr.bf16.mxu0 0
    %2745 = vmatpush1.bf16.msra.mxu0 %v534
    %2746 = vmatprep.subr.bf16.mxu0 0
    %2747 = vmatpush1.bf16.msra.mxu0 %v535
    %2748 = vmatprep.subr.bf16.mxu0 0
    %2749 = vmatpush1.bf16.msra.mxu0 %v536
    %2750 = vmatprep.subr.bf16.mxu0 0
    %2751 = vmatpush1.bf16.msra.mxu0 %v537
    %2752 = vmatprep.subr.bf16.mxu0 0
    %2753 = vmatpush1.bf16.msra.mxu0 %v538
    %2754 = vmatprep.subr.bf16.mxu0 0
    %2755 = vmatpush1.bf16.msra.mxu0 %v539
    %2756 = vmatprep.subr.bf16.mxu0 0
    %2757 = vmatpush1.bf16.msra.mxu0 %v540
    %2758 = vmatprep.subr.bf16.mxu0 0
    %2759 = vmatpush1.bf16.msra.mxu0 %v541
    %2760 = vmatprep.subr.bf16.mxu0 0
    %2761 = vmatpush1.bf16.msra.mxu0 %v542
    %2762 = vmatprep.mubr.bf16.mxu0 %v2609
    %2763 = vmatmul.mubr.bf16.gmra.mrb[0].mxu0 %v2608
    %v2764 = vpop.f32.mrb[0].mxu0
    %v2765 = vadd.f32 %v2725, %v2764
    %v2766 = vpop.f32.mrb[0].mxu0
    %v2767 = vpop.f32.mrb[0].mxu0
    %v2768 = vpop.f32.mrb[0].mxu0
    %2769 = vdwg.mxu0
    %v2770 = vpack.c.bf16 %v2765, %v2765
    %v2771 = vld [vmem:[%s2 + $0x180] sm:$0xff]
    %v2772 = vld [vmem:[%s2 + $0x188] sm:$0xff]
    %v2773 = vld [vmem:[%s2 + $0x190] sm:$0xff]
    %v2774 = vld [vmem:[%s2 + $0x198] sm:$0xff]
    %v2775 = vld [vmem:[%s2 + $0x1a0] sm:$0xff]
    %v2776 = vld [vmem:[%s2 + $0x1a8] sm:$0xff]
    %v2777 = vld [vmem:[%s2 + $0x1b0] sm:$0xff]
    %v2778 = vld [vmem:[%s2 + $0x1b8] sm:$0xff]
    %v2787 = vunpack.c.l.b16 %v2771
    %v2788 = vunpack.c.h.b16 %v2771
    %v2789 = vunpack.c.l.b16 %v2772
    %v2790 = vunpack.c.h.b16 %v2772
    %v2791 = vunpack.c.l.b16 %v2773
    %v2792 = vunpack.c.h.b16 %v2773
    %v2793 = vunpack.c.l.b16 %v2774
    %v2794 = vunpack.c.h.b16 %v2774
    %v2795 = vunpack.c.l.b16 %v2775
    %v2796 = vunpack.c.h.b16 %v2775
    %v2797 = vunpack.c.l.b16 %v2776
    %v2798 = vunpack.c.h.b16 %v2776
    %v2799 = vunpack.c.l.b16 %v2777
    %v2800 = vunpack.c.h.b16 %v2777
    %v2801 = vunpack.c.l.b16 %v2778
    %v2802 = vunpack.c.h.b16 %v2778
    %v2803 = vpack.c.b16 %v2791, %v2787
    %v2804 = vpack.c.b16 %v2792, %v2788
    %v2805 = vpack.c.b16 %v2793, %v2789
    %v2806 = vpack.c.b16 %v2794, %v2790
    %v2807 = vpack.c.b16 %v2799, %v2795
    %v2808 = vpack.c.b16 %v2800, %v2796
    %v2809 = vpack.c.b16 %v2801, %v2797
    %v2810 = vpack.c.b16 %v2802, %v2798
    %v2820 = vsel %vm1022, %v2770, 0
    %2822 = vmatprep.subr.bf16.mxu0 %v2804
    %2823 = vmatpush1.bf16.msra.mxu0 %v2803
    %2824 = vmatprep.subr.bf16.mxu0 %v2808
    %2825 = vmatpush1.bf16.msra.mxu0 %v2807
    %2826 = vmatprep.subr.bf16.mxu0 0
    %2827 = vmatpush1.bf16.msra.mxu0 0
    %2828 = vmatprep.subr.bf16.mxu0 0
    %2829 = vmatpush1.bf16.msra.mxu0 0
    %2830 = vmatprep.subr.bf16.mxu0 0
    %2831 = vmatpush1.bf16.msra.mxu0 0
    %2832 = vmatprep.subr.bf16.mxu0 0
    %2833 = vmatpush1.bf16.msra.mxu0 0
    %2834 = vmatprep.subr.bf16.mxu0 0
    %2835 = vmatpush1.bf16.msra.mxu0 0
    %2836 = vmatprep.subr.bf16.mxu0 0
    %2837 = vmatpush1.bf16.msra.mxu0 0
    %2838 = vmatprep.subr.bf16.mxu0 0
    %2839 = vmatpush1.bf16.msra.mxu0 0
    %2840 = vmatprep.subr.bf16.mxu0 0
    %2841 = vmatpush1.bf16.msra.mxu0 0
    %2842 = vmatprep.subr.bf16.mxu0 0
    %2843 = vmatpush1.bf16.msra.mxu0 0
    %2844 = vmatprep.subr.bf16.mxu0 0
    %2845 = vmatpush1.bf16.msra.mxu0 0
    %2846 = vmatprep.subr.bf16.mxu0 0
    %2847 = vmatpush1.bf16.msra.mxu0 0
    %2848 = vmatprep.subr.bf16.mxu0 0
    %2849 = vmatpush1.bf16.msra.mxu0 0
    %2850 = vmatprep.subr.bf16.mxu0 0
    %2851 = vmatpush1.bf16.msra.mxu0 0
    %2852 = vmatprep.subr.bf16.mxu0 0
    %2853 = vmatpush1.bf16.msra.mxu0 0
    %2854 = vmatprep.mubr.bf16.mxu0 0
    %2855 = vmatmul.mubr.bf16.gmra.mrb[0].mxu0 %v2820
    %v2856 = vpop.f32.mrb[0].mxu0
    %v2857 = vadd.f32 0.0, %v2856
    %v2858 = vpop.f32.mrb[0].mxu0
    %v2859 = vadd.f32 0.0, %v2858
    %v2860 = vpop.f32.mrb[0].mxu0
    %v2861 = vpop.f32.mrb[0].mxu0
    %2862 = vdwg.mxu0
    %2863 = vmatprep.subr.bf16.mxu0 %v2806
    %2864 = vmatpush1.bf16.msra.mxu0 %v2805
    %2865 = vmatprep.subr.bf16.mxu0 %v2810
    %2866 = vmatpush1.bf16.msra.mxu0 %v2809
    %2867 = vmatprep.subr.bf16.mxu0 0
    %2868 = vmatpush1.bf16.msra.mxu0 0
    %2869 = vmatprep.subr.bf16.mxu0 0
    %2870 = vmatpush1.bf16.msra.mxu0 0
    %2871 = vmatprep.subr.bf16.mxu0 0
    %2872 = vmatpush1.bf16.msra.mxu0 0
    %2873 = vmatprep.subr.bf16.mxu0 0
    %2874 = vmatpush1.bf16.msra.mxu0 0
    %2875 = vmatprep.subr.bf16.mxu0 0
    %2876 = vmatpush1.bf16.msra.mxu0 0
    %2877 = vmatprep.subr.bf16.mxu0 0
    %2878 = vmatpush1.bf16.msra.mxu0 0
    %2879 = vmatprep.subr.bf16.mxu0 0
    %2880 = vmatpush1.bf16.msra.mxu0 0
    %2881 = vmatprep.subr.bf16.mxu0 0
    %2882 = vmatpush1.bf16.msra.mxu0 0
    %2883 = vmatprep.subr.bf16.mxu0 0
    %2884 = vmatpush1.bf16.msra.mxu0 0
    %2885 = vmatprep.subr.bf16.mxu0 0
    %2886 = vmatpush1.bf16.msra.mxu0 0
    %2887 = vmatprep.subr.bf16.mxu0 0
    %2888 = vmatpush1.bf16.msra.mxu0 0
    %2889 = vmatprep.subr.bf16.mxu0 0
    %2890 = vmatpush1.bf16.msra.mxu0 0
    %2891 = vmatprep.subr.bf16.mxu0 0
    %2892 = vmatpush1.bf16.msra.mxu0 0
    %2893 = vmatprep.subr.bf16.mxu0 0
    %2894 = vmatpush1.bf16.msra.mxu0 0
    %2895 = vmatprep.mubr.bf16.mxu0 0
    %2896 = vmatmul.mubr.bf16.gmra.mrb[0].mxu0 %v2820
    %v2897 = vpop.f32.mrb[0].mxu0
    %v2898 = vadd.f32 0.0, %v2897
    %v2899 = vpop.f32.mrb[0].mxu0
    %v2900 = vadd.f32 0.0, %v2899
    %v2901 = vpop.f32.mrb[0].mxu0
    %v2902 = vpop.f32.mrb[0].mxu0
    %2903 = vdwg.mxu0
    %v2904 = vadd.f32 %v2569, %v2857
    %v2905 = vadd.f32 %v2570, %v2859
    %v2906 = vadd.f32 %v2571, %v2898
    %v2907 = vadd.f32 %v2572, %v2900
    %s2908 = scalar_lea.vmem %s0, 56
    %v2909 = vld [vmem:[%s2908] sm:$0xff]
    %2910 = vset.pattern.permute.xlu0 0
    %2911 = vperm.xlu0 %2910, %v2909
    %v2912 = vpop.permute.xlu0 %2911
    %vm2913 = vcmp.eq.s32.totalorder %v179, %v2912
    %vm2914 = vcmp.eq.s32.totalorder %v180, %v2912
    %vm2915 = vcmp.eq.s32.totalorder %v181, %v2912
    %vm2916 = vcmp.eq.s32.totalorder %v182, %v2912
    %vm2917 = vcmp.eq.s32.totalorder %v183, %v2912
    %vm2918 = vcmp.eq.s32.totalorder %v184, %v2912
    %vm2919 = vcmp.eq.s32.totalorder %v185, %v2912
    %vm2920 = vcmp.eq.s32.totalorder %v186, %v2912
    %v2921 = vsel %vm2913, 1, 0
    %v2922 = vsel %vm2914, 1, 0
    %v2923 = vsel %vm2915, 1, 0
    %v2924 = vsel %vm2916, 1, 0
    %v2925 = vsel %vm2917, 1, 0
    %v2926 = vsel %vm2918, 1, 0
    %v2927 = vsel %vm2919, 1, 0
    %v2928 = vsel %vm2920, 1, 0
    %v2929 = vcvt.s32.f32 %v2921
    %v2930 = vcvt.s32.f32 %v2922
    %v2931 = vcvt.s32.f32 %v2923
    %v2932 = vcvt.s32.f32 %v2924
    %v2933 = vcvt.s32.f32 %v2925
    %v2934 = vcvt.s32.f32 %v2926
    %v2935 = vcvt.s32.f32 %v2927
    %v2936 = vcvt.s32.f32 %v2928
    %v2937 = vpack.c.bf16 %v2929, %v2929
    %v2938 = vpack.c.bf16 %v2930, %v2930
    %v2939 = vpack.c.bf16 %v2931, %v2931
    %v2940 = vpack.c.bf16 %v2932, %v2932
    %v2941 = vpack.c.bf16 %v2933, %v2933
    %v2942 = vpack.c.bf16 %v2934, %v2934
    %v2943 = vpack.c.bf16 %v2935, %v2935
    %v2944 = vpack.c.bf16 %v2936, %v2936
    %2945 = vmatprep.subr.bf16.mxu0 0
    %2946 = vmatpush1.bf16.msra.mxu0 %v479
    %2947 = vmatprep.subr.bf16.mxu0 0
    %2948 = vmatpush1.bf16.msra.mxu0 %v480
    %2949 = vmatprep.subr.bf16.mxu0 0
    %2950 = vmatpush1.bf16.msra.mxu0 %v481
    %2951 = vmatprep.subr.bf16.mxu0 0
    %2952 = vmatpush1.bf16.msra.mxu0 %v482
    %2953 = vmatprep.subr.bf16.mxu0 0
    %2954 = vmatpush1.bf16.msra.mxu0 %v483
    %2955 = vmatprep.subr.bf16.mxu0 0
    %2956 = vmatpush1.bf16.msra.mxu0 %v484
    %2957 = vmatprep.subr.bf16.mxu0 0
    %2958 = vmatpush1.bf16.msra.mxu0 %v485
    %2959 = vmatprep.subr.bf16.mxu0 0
    %2960 = vmatpush1.bf16.msra.mxu0 %v486
    %2961 = vmatprep.subr.bf16.mxu0 0
    %2962 = vmatpush1.bf16.msra.mxu0 %v487
    %2963 = vmatprep.subr.bf16.mxu0 0
    %2964 = vmatpush1.bf16.msra.mxu0 %v488
    %2965 = vmatprep.subr.bf16.mxu0 0
    %2966 = vmatpush1.bf16.msra.mxu0 %v489
    %2967 = vmatprep.subr.bf16.mxu0 0
    %2968 = vmatpush1.bf16.msra.mxu0 %v490
    %2969 = vmatprep.subr.bf16.mxu0 0
    %2970 = vmatpush1.bf16.msra.mxu0 %v491
    %2971 = vmatprep.subr.bf16.mxu0 0
    %2972 = vmatpush1.bf16.msra.mxu0 %v492
    %2973 = vmatprep.subr.bf16.mxu0 0
    %2974 = vmatpush1.bf16.msra.mxu0 %v493
    %2975 = vmatprep.subr.bf16.mxu0 0
    %2976 = vmatpush1.bf16.msra.mxu0 %v494
    %2977 = vmatprep.mubr.bf16.mxu0 %v2938
    %2978 = vmatmul.mubr.bf16.gmra.mrb[0].mxu0 %v2937
    %v2979 = vpop.f32.mrb[0].mxu0
    %v2980 = vadd.f32 0.0, %v2979
    %v2981 = vpop.f32.mrb[0].mxu0
    %v2982 = vpop.f32.mrb[0].mxu0
    %v2983 = vpop.f32.mrb[0].mxu0
    %2984 = vdwg.mxu0
    %2985 = vmatprep.subr.bf16.mxu0 0
    %2986 = vmatpush1.bf16.msra.mxu0 %v495
    %2987 = vmatprep.subr.bf16.mxu0 0
    %2988 = vmatpush1.bf16.msra.mxu0 %v496
    %2989 = vmatprep.subr.bf16.mxu0 0
    %2990 = vmatpush1.bf16.msra.mxu0 %v497
    %2991 = vmatprep.subr.bf16.mxu0 0
    %2992 = vmatpush1.bf16.msra.mxu0 %v498
    %2993 = vmatprep.subr.bf16.mxu0 0
    %2994 = vmatpush1.bf16.msra.mxu0 %v499
    %2995 = vmatprep.subr.bf16.mxu0 0
    %2996 = vmatpush1.bf16.msra.mxu0 %v500
    %2997 = vmatprep.subr.bf16.mxu0 0
    %2998 = vmatpush1.bf16.msra.mxu0 %v501
    %2999 = vmatprep.subr.bf16.mxu0 0
    %3000 = vmatpush1.bf16.msra.mxu0 %v502
    %3001 = vmatprep.subr.bf16.mxu0 0
    %3002 = vmatpush1.bf16.msra.mxu0 %v503
    %3003 = vmatprep.subr.bf16.mxu0 0
    %3004 = vmatpush1.bf16.msra.mxu0 %v504
    %3005 = vmatprep.subr.bf16.mxu0 0
    %3006 = vmatpush1.bf16.msra.mxu0 %v505
    %3007 = vmatprep.subr.bf16.mxu0 0
    %3008 = vmatpush1.bf16.msra.mxu0 %v506
    %3009 = vmatprep.subr.bf16.mxu0 0
    %3010 = vmatpush1.bf16.msra.mxu0 %v507
    %3011 = vmatprep.subr.bf16.mxu0 0
    %3012 = vmatpush1.bf16.msra.mxu0 %v508
    %3013 = vmatprep.subr.bf16.mxu0 0
    %3014 = vmatpush1.bf16.msra.mxu0 %v509
    %3015 = vmatprep.subr.bf16.mxu0 0
    %3016 = vmatpush1.bf16.msra.mxu0 %v510
    %3017 = vmatprep.mubr.bf16.mxu0 %v2940
    %3018 = vmatmul.mubr.bf16.gmra.mrb[0].mxu0 %v2939
    %v3019 = vpop.f32.mrb[0].mxu0
    %v3020 = vadd.f32 %v2980, %v3019
    %v3021 = vpop.f32.mrb[0].mxu0
    %v3022 = vpop.f32.mrb[0].mxu0
    %v3023 = vpop.f32.mrb[0].mxu0
    %3024 = vdwg.mxu0
    %3025 = vmatprep.subr.bf16.mxu0 0
    %3026 = vmatpush1.bf16.msra.mxu0 %v511
    %3027 = vmatprep.subr.bf16.mxu0 0
    %3028 = vmatpush1.bf16.msra.mxu0 %v512
    %3029 = vmatprep.subr.bf16.mxu0 0
    %3030 = vmatpush1.bf16.msra.mxu0 %v513
    %3031 = vmatprep.subr.bf16.mxu0 0
    %3032 = vmatpush1.bf16.msra.mxu0 %v514
    %3033 = vmatprep.subr.bf16.mxu0 0
    %3034 = vmatpush1.bf16.msra.mxu0 %v515
    %3035 = vmatprep.subr.bf16.mxu0 0
    %3036 = vmatpush1.bf16.msra.mxu0 %v516
    %3037 = vmatprep.subr.bf16.mxu0 0
    %3038 = vmatpush1.bf16.msra.mxu0 %v517
    %3039 = vmatprep.subr.bf16.mxu0 0
    %3040 = vmatpush1.bf16.msra.mxu0 %v518
    %3041 = vmatprep.subr.bf16.mxu0 0
    %3042 = vmatpush1.bf16.msra.mxu0 %v519
    %3043 = vmatprep.subr.bf16.mxu0 0
    %3044 = vmatpush1.bf16.msra.mxu0 %v520
    %3045 = vmatprep.subr.bf16.mxu0 0
    %3046 = vmatpush1.bf16.msra.mxu0 %v521
    %3047 = vmatprep.subr.bf16.mxu0 0
    %3048 = vmatpush1.bf16.msra.mxu0 %v522
    %3049 = vmatprep.subr.bf16.mxu0 0
    %3050 = vmatpush1.bf16.msra.mxu0 %v523
    %3051 = vmatprep.subr.bf16.mxu0 0
    %3052 = vmatpush1.bf16.msra.mxu0 %v524
    %3053 = vmatprep.subr.bf16.mxu0 0
    %3054 = vmatpush1.bf16.msra.mxu0 %v525
    %3055 = vmatprep.subr.bf16.mxu0 0
    %3056 = vmatpush1.bf16.msra.mxu0 %v526
    %3057 = vmatprep.mubr.bf16.mxu0 %v2942
    %3058 = vmatmul.mubr.bf16.gmra.mrb[0].mxu0 %v2941
    %v3059 = vpop.f32.mrb[0].mxu0
    %v3060 = vadd.f32 %v3020, %v3059
    %v3061 = vpop.f32.mrb[0].mxu0
    %v3062 = vpop.f32.mrb[0].mxu0
    %v3063 = vpop.f32.mrb[0].mxu0
    %3064 = vdwg.mxu0
    %3065 = vmatprep.subr.bf16.mxu0 0
    %3066 = vmatpush1.bf16.msra.mxu0 %v527
    %3067 = vmatprep.subr.bf16.mxu0 0
    %3068 = vmatpush1.bf16.msra.mxu0 %v528
    %3069 = vmatprep.subr.bf16.mxu0 0
    %3070 = vmatpush1.bf16.msra.mxu0 %v529
    %3071 = vmatprep.subr.bf16.mxu0 0
    %3072 = vmatpush1.bf16.msra.mxu0 %v530
    %3073 = vmatprep.subr.bf16.mxu0 0
    %3074 = vmatpush1.bf16.msra.mxu0 %v531
    %3075 = vmatprep.subr.bf16.mxu0 0
    %3076 = vmatpush1.bf16.msra.mxu0 %v532
    %3077 = vmatprep.subr.bf16.mxu0 0
    %3078 = vmatpush1.bf16.msra.mxu0 %v533
    %3079 = vmatprep.subr.bf16.mxu0 0
    %3080 = vmatpush1.bf16.msra.mxu0 %v534
    %3081 = vmatprep.subr.bf16.mxu0 0
    %3082 = vmatpush1.bf16.msra.mxu0 %v535
    %3083 = vmatprep.subr.bf16.mxu0 0
    %3084 = vmatpush1.bf16.msra.mxu0 %v536
    %3085 = vmatprep.subr.bf16.mxu0 0
    %3086 = vmatpush1.bf16.msra.mxu0 %v537
    %3087 = vmatprep.subr.bf16.mxu0 0
    %3088 = vmatpush1.bf16.msra.mxu0 %v538
    %3089 = vmatprep.subr.bf16.mxu0 0
    %3090 = vmatpush1.bf16.msra.mxu0 %v539
    %3091 = vmatprep.subr.bf16.mxu0 0
    %3092 = vmatpush1.bf16.msra.mxu0 %v540
    %3093 = vmatprep.subr.bf16.mxu0 0
    %3094 = vmatpush1.bf16.msra.mxu0 %v541
    %3095 = vmatprep.subr.bf16.mxu0 0
    %3096 = vmatpush1.bf16.msra.mxu0 %v542
    %3097 = vmatprep.mubr.bf16.mxu0 %v2944
    %3098 = vmatmul.mubr.bf16.gmra.mrb[0].mxu0 %v2943
    %v3099 = vpop.f32.mrb[0].mxu0
    %v3100 = vadd.f32 %v3060, %v3099
    %v3101 = vpop.f32.mrb[0].mxu0
    %v3102 = vpop.f32.mrb[0].mxu0
    %v3103 = vpop.f32.mrb[0].mxu0
    %3104 = vdwg.mxu0
    %v3105 = vpack.c.bf16 %v3100, %v3100
    %v3106 = vld [vmem:[%s2 + $0x1c0] sm:$0xff]
    %v3107 = vld [vmem:[%s2 + $0x1c8] sm:$0xff]
    %v3108 = vld [vmem:[%s2 + $0x1d0] sm:$0xff]
    %v3109 = vld [vmem:[%s2 + $0x1d8] sm:$0xff]
    %v3110 = vld [vmem:[%s2 + $0x1e0] sm:$0xff]
    %v3111 = vld [vmem:[%s2 + $0x1e8] sm:$0xff]
    %v3112 = vld [vmem:[%s2 + $0x1f0] sm:$0xff]
    %v3113 = vld [vmem:[%s2 + $0x1f8] sm:$0xff]
    %v3122 = vunpack.c.l.b16 %v3106
    %v3123 = vunpack.c.h.b16 %v3106
    %v3124 = vunpack.c.l.b16 %v3107
    %v3125 = vunpack.c.h.b16 %v3107
    %v3126 = vunpack.c.l.b16 %v3108
    %v3127 = vunpack.c.h.b16 %v3108
    %v3128 = vunpack.c.l.b16 %v3109
    %v3129 = vunpack.c.h.b16 %v3109
    %v3130 = vunpack.c.l.b16 %v3110
    %v3131 = vunpack.c.h.b16 %v3110
    %v3132 = vunpack.c.l.b16 %v3111
    %v3133 = vunpack.c.h.b16 %v3111
    %v3134 = vunpack.c.l.b16 %v3112
    %v3135 = vunpack.c.h.b16 %v3112
    %v3136 = vunpack.c.l.b16 %v3113
    %v3137 = vunpack.c.h.b16 %v3113
    %v3138 = vpack.c.b16 %v3126, %v3122
    %v3139 = vpack.c.b16 %v3127, %v3123
    %v3140 = vpack.c.b16 %v3128, %v3124
    %v3141 = vpack.c.b16 %v3129, %v3125
    %v3142 = vpack.c.b16 %v3134, %v3130
    %v3143 = vpack.c.b16 %v3135, %v3131
    %v3144 = vpack.c.b16 %v3136, %v3132
    %v3145 = vpack.c.b16 %v3137, %v3133
    %v3155 = vsel %vm1022, %v3105, 0
    %3157 = vmatprep.subr.bf16.mxu0 %v3139
    %3158 = vmatpush1.bf16.msra.mxu0 %v3138
    %3159 = vmatprep.subr.bf16.mxu0 %v3143
    %3160 = vmatpush1.bf16.msra.mxu0 %v3142
    %3161 = vmatprep.subr.bf16.mxu0 0
    %3162 = vmatpush1.bf16.msra.mxu0 0
    %3163 = vmatprep.subr.bf16.mxu0 0
    %3164 = vmatpush1.bf16.msra.mxu0 0
    %3165 = vmatprep.subr.bf16.mxu0 0
    %3166 = vmatpush1.bf16.msra.mxu0 0
    %3167 = vmatprep.subr.bf16.mxu0 0
    %3168 = vmatpush1.bf16.msra.mxu0 0
    %3169 = vmatprep.subr.bf16.mxu0 0
    %3170 = vmatpush1.bf16.msra.mxu0 0
    %3171 = vmatprep.subr.bf16.mxu0 0
    %3172 = vmatpush1.bf16.msra.mxu0 0
    %3173 = vmatprep.subr.bf16.mxu0 0
    %3174 = vmatpush1.bf16.msra.mxu0 0
    %3175 = vmatprep.subr.bf16.mxu0 0
    %3176 = vmatpush1.bf16.msra.mxu0 0
    %3177 = vmatprep.subr.bf16.mxu0 0
    %3178 = vmatpush1.bf16.msra.mxu0 0
    %3179 = vmatprep.subr.bf16.mxu0 0
    %3180 = vmatpush1.bf16.msra.mxu0 0
    %3181 = vmatprep.subr.bf16.mxu0 0
    %3182 = vmatpush1.bf16.msra.mxu0 0
    %3183 = vmatprep.subr.bf16.mxu0 0
    %3184 = vmatpush1.bf16.msra.mxu0 0
    %3185 = vmatprep.subr.bf16.mxu0 0
    %3186 = vmatpush1.bf16.msra.mxu0 0
    %3187 = vmatprep.subr.bf16.mxu0 0
    %3188 = vmatpush1.bf16.msra.mxu0 0
    %3189 = vmatprep.mubr.bf16.mxu0 0
    %3190 = vmatmul.mubr.bf16.gmra.mrb[0].mxu0 %v3155
    %v3191 = vpop.f32.mrb[0].mxu0
    %v3192 = vadd.f32 0.0, %v3191
    %v3193 = vpop.f32.mrb[0].mxu0
    %v3194 = vadd.f32 0.0, %v3193
    %v3195 = vpop.f32.mrb[0].mxu0
    %v3196 = vpop.f32.mrb[0].mxu0
    %3197 = vdwg.mxu0
    %3198 = vmatprep.subr.bf16.mxu0 %v3141
    %3199 = vmatpush1.bf16.msra.mxu0 %v3140
    %3200 = vmatprep.subr.bf16.mxu0 %v3145
    %3201 = vmatpush1.bf16.msra.mxu0 %v3144
    %3202 = vmatprep.subr.bf16.mxu0 0
    %3203 = vmatpush1.bf16.msra.mxu0 0
    %3204 = vmatprep.subr.bf16.mxu0 0
    %3205 = vmatpush1.bf16.msra.mxu0 0
    %3206 = vmatprep.subr.bf16.mxu0 0
    %3207 = vmatpush1.bf16.msra.mxu0 0
    %3208 = vmatprep.subr.bf16.mxu0 0
    %3209 = vmatpush1.bf16.msra.mxu0 0
    %3210 = vmatprep.subr.bf16.mxu0 0
    %3211 = vmatpush1.bf16.msra.mxu0 0
    %3212 = vmatprep.subr.bf16.mxu0 0
    %3213 = vmatpush1.bf16.msra.mxu0 0
    %3214 = vmatprep.subr.bf16.mxu0 0
    %3215 = vmatpush1.bf16.msra.mxu0 0
    %3216 = vmatprep.subr.bf16.mxu0 0
    %3217 = vmatpush1.bf16.msra.mxu0 0
    %3218 = vmatprep.subr.bf16.mxu0 0
    %3219 = vmatpush1.bf16.msra.mxu0 0
    %3220 = vmatprep.subr.bf16.mxu0 0
    %3221 = vmatpush1.bf16.msra.mxu0 0
    %3222 = vmatprep.subr.bf16.mxu0 0
    %3223 = vmatpush1.bf16.msra.mxu0 0
    %3224 = vmatprep.subr.bf16.mxu0 0
    %3225 = vmatpush1.bf16.msra.mxu0 0
    %3226 = vmatprep.subr.bf16.mxu0 0
    %3227 = vmatpush1.bf16.msra.mxu0 0
    %3228 = vmatprep.subr.bf16.mxu0 0
    %3229 = vmatpush1.bf16.msra.mxu0 0
    %3230 = vmatprep.mubr.bf16.mxu0 0
    %3231 = vmatmul.mubr.bf16.gmra.mrb[0].mxu0 %v3155
    %v3232 = vpop.f32.mrb[0].mxu0
    %v3233 = vadd.f32 0.0, %v3232
    %v3234 = vpop.f32.mrb[0].mxu0
    %v3235 = vadd.f32 0.0, %v3234
    %v3236 = vpop.f32.mrb[0].mxu0
    %v3237 = vpop.f32.mrb[0].mxu0
    %3238 = vdwg.mxu0
    %v3239 = vadd.f32 %v2904, %v3192
    %v3240 = vadd.f32 %v2905, %v3194
    %v3241 = vadd.f32 %v2906, %v3233
    %v3242 = vadd.f32 %v2907, %v3235
    %v3243 = vld [vmem:[%s3] sm:$0xf]
    %v3245 = vlaneseq
    %v3246 = vshrl.u32 %v3245, 7
    %v3247 = vsub.s32 0, %v3246
    %v3248 = vrot.slane %v3243, %v3247
    %v3249 = vlaneseq
    %v3250 = vshrl.u32 %v3249, 7
    %v3251 = vsub.s32 1, %v3250
    %v3252 = vrot.slane %v3243, %v3251
    %v3253 = vlaneseq
    %v3254 = vshrl.u32 %v3253, 7
    %v3255 = vsub.s32 2, %v3254
    %v3256 = vrot.slane %v3243, %v3255
    %v3257 = vlaneseq
    %v3258 = vshrl.u32 %v3257, 7
    %v3259 = vsub.s32 3, %v3258
    %v3260 = vrot.slane %v3243, %v3259
    %v3265 = vadd.f32 %v3239, %v3248
    %v3266 = vadd.f32 %v3240, %v3252
    %v3267 = vadd.f32 %v3241, %v3256
    %v3268 = vadd.f32 %v3242, %v3260
    %v3269 = vmax.f32 %v3265, 0.0
    %v3270 = vmax.f32 %v3266, 0.0
    %v3271 = vmax.f32 %v3267, 0.0
    %v3272 = vmax.f32 %v3268, 0.0
    %v3273 = vpack.c.bf16 %v3269, %v3269
    %v3274 = vpack.c.bf16 %v3270, %v3270
    %v3275 = vpack.c.bf16 %v3271, %v3271
    %v3276 = vpack.c.bf16 %v3272, %v3272
    %v3277 = vld [vmem:[#allocation2] sm:$0xff]
    %v3278 = vld [vmem:[#allocation2 + $0x8] sm:$0xff]
    %v3279 = vld [vmem:[#allocation2 + $0x10] sm:$0xff]
    %v3280 = vld [vmem:[#allocation2 + $0x18] sm:$0xff]
    %v3281 = vld [vmem:[#allocation2 + $0x20] sm:$0xff]
    %v3282 = vld [vmem:[#allocation2 + $0x28] sm:$0xff]
    %v3283 = vld [vmem:[#allocation2 + $0x30] sm:$0xff]
    %v3284 = vld [vmem:[#allocation2 + $0x38] sm:$0xff]
    %v3285 = vld [vmem:[#allocation2 + $0x40] sm:$0xff]
    %v3286 = vld [vmem:[#allocation2 + $0x48] sm:$0xff]
    %v3287 = vld [vmem:[#allocation2 + $0x50] sm:$0xff]
    %v3288 = vld [vmem:[#allocation2 + $0x58] sm:$0xff]
    %v3289 = vld [vmem:[#allocation2 + $0x60] sm:$0xff]
    %v3290 = vld [vmem:[#allocation2 + $0x68] sm:$0xff]
    %v3291 = vld [vmem:[#allocation2 + $0x70] sm:$0xff]
    %v3292 = vld [vmem:[#allocation2 + $0x78] sm:$0xff]
    %v3293 = vld [vmem:[#allocation2 + $0x80] sm:$0xff]
    %v3294 = vld [vmem:[#allocation2 + $0x88] sm:$0xff]
    %v3295 = vld [vmem:[#allocation2 + $0x90] sm:$0xff]
    %v3296 = vld [vmem:[#allocation2 + $0x98] sm:$0xff]
    %v3297 = vld [vmem:[#allocation2 + $0xa0] sm:$0xff]
    %v3298 = vld [vmem:[#allocation2 + $0xa8] sm:$0xff]
    %v3299 = vld [vmem:[#allocation2 + $0xb0] sm:$0xff]
    %v3300 = vld [vmem:[#allocation2 + $0xb8] sm:$0xff]
    %v3301 = vld [vmem:[#allocation2 + $0xc0] sm:$0xff]
    %v3302 = vld [vmem:[#allocation2 + $0xc8] sm:$0xff]
    %v3303 = vld [vmem:[#allocation2 + $0xd0] sm:$0xff]
    %v3304 = vld [vmem:[#allocation2 + $0xd8] sm:$0xff]
    %v3305 = vld [vmem:[#allocation2 + $0xe0] sm:$0xff]
    %v3306 = vld [vmem:[#allocation2 + $0xe8] sm:$0xff]
    %v3307 = vld [vmem:[#allocation2 + $0xf0] sm:$0xff]
    %v3308 = vld [vmem:[#allocation2 + $0xf8] sm:$0xff]
    %v3309 = vld [vmem:[#allocation2 + $0x100] sm:$0xff]
    %v3310 = vld [vmem:[#allocation2 + $0x108] sm:$0xff]
    %v3311 = vld [vmem:[#allocation2 + $0x110] sm:$0xff]
    %v3312 = vld [vmem:[#allocation2 + $0x118] sm:$0xff]
    %v3313 = vld [vmem:[#allocation2 + $0x120] sm:$0xff]
    %v3314 = vld [vmem:[#allocation2 + $0x128] sm:$0xff]
    %v3315 = vld [vmem:[#allocation2 + $0x130] sm:$0xff]
    %v3316 = vld [vmem:[#allocation2 + $0x138] sm:$0xff]
    %v3317 = vld [vmem:[#allocation2 + $0x140] sm:$0xff]
    %v3318 = vld [vmem:[#allocation2 + $0x148] sm:$0xff]
    %v3319 = vld [vmem:[#allocation2 + $0x150] sm:$0xff]
    %v3320 = vld [vmem:[#allocation2 + $0x158] sm:$0xff]
    %v3321 = vld [vmem:[#allocation2 + $0x160] sm:$0xff]
    %v3322 = vld [vmem:[#allocation2 + $0x168] sm:$0xff]
    %v3323 = vld [vmem:[#allocation2 + $0x170] sm:$0xff]
    %v3324 = vld [vmem:[#allocation2 + $0x178] sm:$0xff]
    %v3325 = vld [vmem:[#allocation2 + $0x180] sm:$0xff]
    %v3326 = vld [vmem:[#allocation2 + $0x188] sm:$0xff]
    %v3327 = vld [vmem:[#allocation2 + $0x190] sm:$0xff]
    %v3328 = vld [vmem:[#allocation2 + $0x198] sm:$0xff]
    %v3329 = vld [vmem:[#allocation2 + $0x1a0] sm:$0xff]
    %v3330 = vld [vmem:[#allocation2 + $0x1a8] sm:$0xff]
    %v3331 = vld [vmem:[#allocation2 + $0x1b0] sm:$0xff]
    %v3332 = vld [vmem:[#allocation2 + $0x1b8] sm:$0xff]
    %v3333 = vld [vmem:[#allocation2 + $0x1c0] sm:$0xff]
    %v3334 = vld [vmem:[#allocation2 + $0x1c8] sm:$0xff]
    %v3335 = vld [vmem:[#allocation2 + $0x1d0] sm:$0xff]
    %v3336 = vld [vmem:[#allocation2 + $0x1d8] sm:$0xff]
    %v3337 = vld [vmem:[#allocation2 + $0x1e0] sm:$0xff]
    %v3338 = vld [vmem:[#allocation2 + $0x1e8] sm:$0xff]
    %v3339 = vld [vmem:[#allocation2 + $0x1f0] sm:$0xff]
    %v3340 = vld [vmem:[#allocation2 + $0x1f8] sm:$0xff]
    %v3341 = vld [vmem:[%s5] sm:$0x3]
    %v3343 = vlaneseq
    %v3344 = vshrl.u32 %v3343, 7
    %v3345 = vsub.s32 0, %v3344
    %v3346 = vrot.slane %v3341, %v3345
    %v3347 = vlaneseq
    %v3348 = vshrl.u32 %v3347, 7
    %v3349 = vsub.s32 1, %v3348
    %v3350 = vrot.slane %v3341, %v3349
    %v3417 = vunpack.c.l.b16 %v3277
    %v3418 = vunpack.c.h.b16 %v3277
    %v3419 = vunpack.c.l.b16 %v3278
    %v3420 = vunpack.c.h.b16 %v3278
    %v3421 = vunpack.c.l.b16 %v3279
    %v3422 = vunpack.c.h.b16 %v3279
    %v3423 = vunpack.c.l.b16 %v3280
    %v3424 = vunpack.c.h.b16 %v3280
    %v3425 = vunpack.c.l.b16 %v3281
    %v3426 = vunpack.c.h.b16 %v3281
    %v3427 = vunpack.c.l.b16 %v3282
    %v3428 = vunpack.c.h.b16 %v3282
    %v3429 = vunpack.c.l.b16 %v3283
    %v3430 = vunpack.c.h.b16 %v3283
    %v3431 = vunpack.c.l.b16 %v3284
    %v3432 = vunpack.c.h.b16 %v3284
    %v3433 = vunpack.c.l.b16 %v3285
    %v3434 = vunpack.c.h.b16 %v3285
    %v3435 = vunpack.c.l.b16 %v3286
    %v3436 = vunpack.c.h.b16 %v3286
    %v3437 = vunpack.c.l.b16 %v3287
    %v3438 = vunpack.c.h.b16 %v3287
    %v3439 = vunpack.c.l.b16 %v3288
    %v3440 = vunpack.c.h.b16 %v3288
    %v3441 = vunpack.c.l.b16 %v3289
    %v3442 = vunpack.c.h.b16 %v3289
    %v3443 = vunpack.c.l.b16 %v3290
    %v3444 = vunpack.c.h.b16 %v3290
    %v3445 = vunpack.c.l.b16 %v3291
    %v3446 = vunpack.c.h.b16 %v3291
    %v3447 = vunpack.c.l.b16 %v3292
    %v3448 = vunpack.c.h.b16 %v3292
    %v3449 = vunpack.c.l.b16 %v3293
    %v3450 = vunpack.c.h.b16 %v3293
    %v3451 = vunpack.c.l.b16 %v3294
    %v3452 = vunpack.c.h.b16 %v3294
    %v3453 = vunpack.c.l.b16 %v3295
    %v3454 = vunpack.c.h.b16 %v3295
    %v3455 = vunpack.c.l.b16 %v3296
    %v3456 = vunpack.c.h.b16 %v3296
    %v3457 = vunpack.c.l.b16 %v3297
    %v3458 = vunpack.c.h.b16 %v3297
    %v3459 = vunpack.c.l.b16 %v3298
    %v3460 = vunpack.c.h.b16 %v3298
    %v3461 = vunpack.c.l.b16 %v3299
    %v3462 = vunpack.c.h.b16 %v3299
    %v3463 = vunpack.c.l.b16 %v3300
    %v3464 = vunpack.c.h.b16 %v3300
    %v3465 = vunpack.c.l.b16 %v3301
    %v3466 = vunpack.c.h.b16 %v3301
    %v3467 = vunpack.c.l.b16 %v3302
    %v3468 = vunpack.c.h.b16 %v3302
    %v3469 = vunpack.c.l.b16 %v3303
    %v3470 = vunpack.c.h.b16 %v3303
    %v3471 = vunpack.c.l.b16 %v3304
    %v3472 = vunpack.c.h.b16 %v3304
    %v3473 = vunpack.c.l.b16 %v3305
    %v3474 = vunpack.c.h.b16 %v3305
    %v3475 = vunpack.c.l.b16 %v3306
    %v3476 = vunpack.c.h.b16 %v3306
    %v3477 = vunpack.c.l.b16 %v3307
    %v3478 = vunpack.c.h.b16 %v3307
    %v3479 = vunpack.c.l.b16 %v3308
    %v3480 = vunpack.c.h.b16 %v3308
    %v3481 = vunpack.c.l.b16 %v3309
    %v3482 = vunpack.c.h.b16 %v3309
    %v3483 = vunpack.c.l.b16 %v3310
    %v3484 = vunpack.c.h.b16 %v3310
    %v3485 = vunpack.c.l.b16 %v3311
    %v3486 = vunpack.c.h.b16 %v3311
    %v3487 = vunpack.c.l.b16 %v3312
    %v3488 = vunpack.c.h.b16 %v3312
    %v3489 = vunpack.c.l.b16 %v3313
    %v3490 = vunpack.c.h.b16 %v3313
    %v3491 = vunpack.c.l.b16 %v3314
    %v3492 = vunpack.c.h.b16 %v3314
    %v3493 = vunpack.c.l.b16 %v3315
    %v3494 = vunpack.c.h.b16 %v3315
    %v3495 = vunpack.c.l.b16 %v3316
    %v3496 = vunpack.c.h.b16 %v3316
    %v3497 = vunpack.c.l.b16 %v3317
    %v3498 = vunpack.c.h.b16 %v3317
    %v3499 = vunpack.c.l.b16 %v3318
    %v3500 = vunpack.c.h.b16 %v3318
    %v3501 = vunpack.c.l.b16 %v3319
    %v3502 = vunpack.c.h.b16 %v3319
    %v3503 = vunpack.c.l.b16 %v3320
    %v3504 = vunpack.c.h.b16 %v3320
    %v3505 = vunpack.c.l.b16 %v3321
    %v3506 = vunpack.c.h.b16 %v3321
    %v3507 = vunpack.c.l.b16 %v3322
    %v3508 = vunpack.c.h.b16 %v3322
    %v3509 = vunpack.c.l.b16 %v3323
    %v3510 = vunpack.c.h.b16 %v3323
    %v3511 = vunpack.c.l.b16 %v3324
    %v3512 = vunpack.c.h.b16 %v3324
    %v3513 = vunpack.c.l.b16 %v3325
    %v3514 = vunpack.c.h.b16 %v3325
    %v3515 = vunpack.c.l.b16 %v3326
    %v3516 = vunpack.c.h.b16 %v3326
    %v3517 = vunpack.c.l.b16 %v3327
    %v3518 = vunpack.c.h.b16 %v3327
    %v3519 = vunpack.c.l.b16 %v3328
    %v3520 = vunpack.c.h.b16 %v3328
    %v3521 = vunpack.c.l.b16 %v3329
    %v3522 = vunpack.c.h.b16 %v3329
    %v3523 = vunpack.c.l.b16 %v3330
    %v3524 = vunpack.c.h.b16 %v3330
    %v3525 = vunpack.c.l.b16 %v3331
    %v3526 = vunpack.c.h.b16 %v3331
    %v3527 = vunpack.c.l.b16 %v3332
    %v3528 = vunpack.c.h.b16 %v3332
    %v3529 = vunpack.c.l.b16 %v3333
    %v3530 = vunpack.c.h.b16 %v3333
    %v3531 = vunpack.c.l.b16 %v3334
    %v3532 = vunpack.c.h.b16 %v3334
    %v3533 = vunpack.c.l.b16 %v3335
    %v3534 = vunpack.c.h.b16 %v3335
    %v3535 = vunpack.c.l.b16 %v3336
    %v3536 = vunpack.c.h.b16 %v3336
    %v3537 = vunpack.c.l.b16 %v3337
    %v3538 = vunpack.c.h.b16 %v3337
    %v3539 = vunpack.c.l.b16 %v3338
    %v3540 = vunpack.c.h.b16 %v3338
    %v3541 = vunpack.c.l.b16 %v3339
    %v3542 = vunpack.c.h.b16 %v3339
    %v3543 = vunpack.c.l.b16 %v3340
    %v3544 = vunpack.c.h.b16 %v3340
    %v3545 = vpack.c.b16 %v3419, %v3417
    %v3546 = vpack.c.b16 %v3420, %v3418
    %v3547 = vpack.c.b16 %v3423, %v3421
    %v3548 = vpack.c.b16 %v3424, %v3422
    %v3549 = vpack.c.b16 %v3427, %v3425
    %v3550 = vpack.c.b16 %v3428, %v3426
    %v3551 = vpack.c.b16 %v3431, %v3429
    %v3552 = vpack.c.b16 %v3432, %v3430
    %v3553 = vpack.c.b16 %v3435, %v3433
    %v3554 = vpack.c.b16 %v3436, %v3434
    %v3555 = vpack.c.b16 %v3439, %v3437
    %v3556 = vpack.c.b16 %v3440, %v3438
    %v3557 = vpack.c.b16 %v3443, %v3441
    %v3558 = vpack.c.b16 %v3444, %v3442
    %v3559 = vpack.c.b16 %v3447, %v3445
    %v3560 = vpack.c.b16 %v3448, %v3446
    %v3561 = vpack.c.b16 %v3451, %v3449
    %v3562 = vpack.c.b16 %v3452, %v3450
    %v3563 = vpack.c.b16 %v3455, %v3453
    %v3564 = vpack.c.b16 %v3456, %v3454
    %v3565 = vpack.c.b16 %v3459, %v3457
    %v3566 = vpack.c.b16 %v3460, %v3458
    %v3567 = vpack.c.b16 %v3463, %v3461
    %v3568 = vpack.c.b16 %v3464, %v3462
    %v3569 = vpack.c.b16 %v3467, %v3465
    %v3570 = vpack.c.b16 %v3468, %v3466
    %v3571 = vpack.c.b16 %v3471, %v3469
    %v3572 = vpack.c.b16 %v3472, %v3470
    %v3573 = vpack.c.b16 %v3475, %v3473
    %v3574 = vpack.c.b16 %v3476, %v3474
    %v3575 = vpack.c.b16 %v3479, %v3477
    %v3576 = vpack.c.b16 %v3480, %v3478
    %v3577 = vpack.c.b16 %v3483, %v3481
    %v3578 = vpack.c.b16 %v3484, %v3482
    %v3579 = vpack.c.b16 %v3487, %v3485
    %v3580 = vpack.c.b16 %v3488, %v3486
    %v3581 = vpack.c.b16 %v3491, %v3489
    %v3582 = vpack.c.b16 %v3492, %v3490
    %v3583 = vpack.c.b16 %v3495, %v3493
    %v3584 = vpack.c.b16 %v3496, %v3494
    %v3585 = vpack.c.b16 %v3499, %v3497
    %v3586 = vpack.c.b16 %v3500, %v3498
    %v3587 = vpack.c.b16 %v3503, %v3501
    %v3588 = vpack.c.b16 %v3504, %v3502
    %v3589 = vpack.c.b16 %v3507, %v3505
    %v3590 = vpack.c.b16 %v3508, %v3506
    %v3591 = vpack.c.b16 %v3511, %v3509
    %v3592 = vpack.c.b16 %v3512, %v3510
    %v3593 = vpack.c.b16 %v3515, %v3513
    %v3594 = vpack.c.b16 %v3516, %v3514
    %v3595 = vpack.c.b16 %v3519, %v3517
    %v3596 = vpack.c.b16 %v3520, %v3518
    %v3597 = vpack.c.b16 %v3523, %v3521
    %v3598 = vpack.c.b16 %v3524, %v3522
    %v3599 = vpack.c.b16 %v3527, %v3525
    %v3600 = vpack.c.b16 %v3528, %v3526
    %v3601 = vpack.c.b16 %v3531, %v3529
    %v3602 = vpack.c.b16 %v3532, %v3530
    %v3603 = vpack.c.b16 %v3535, %v3533
    %v3604 = vpack.c.b16 %v3536, %v3534
    %v3605 = vpack.c.b16 %v3539, %v3537
    %v3606 = vpack.c.b16 %v3540, %v3538
    %v3607 = vpack.c.b16 %v3543, %v3541
    %v3608 = vpack.c.b16 %v3544, %v3542
    %3673 = vmatprep.subr.bf16.mxu0 %v3546
    %3674 = vmatpush1.bf16.msra.mxu0 %v3545
    %3675 = vmatprep.subr.bf16.mxu0 %v3548
    %3676 = vmatpush1.bf16.msra.mxu0 %v3547
    %3677 = vmatprep.subr.bf16.mxu0 %v3550
    %3678 = vmatpush1.bf16.msra.mxu0 %v3549
    %3679 = vmatprep.subr.bf16.mxu0 %v3552
    %3680 = vmatpush1.bf16.msra.mxu0 %v3551
    %3681 = vmatprep.subr.bf16.mxu0 %v3554
    %3682 = vmatpush1.bf16.msra.mxu0 %v3553
    %3683 = vmatprep.subr.bf16.mxu0 %v3556
    %3684 = vmatpush1.bf16.msra.mxu0 %v3555
    %3685 = vmatprep.subr.bf16.mxu0 %v3558
    %3686 = vmatpush1.bf16.msra.mxu0 %v3557
    %3687 = vmatprep.subr.bf16.mxu0 %v3560
    %3688 = vmatpush1.bf16.msra.mxu0 %v3559
    %3689 = vmatprep.subr.bf16.mxu0 %v3562
    %3690 = vmatpush1.bf16.msra.mxu0 %v3561
    %3691 = vmatprep.subr.bf16.mxu0 %v3564
    %3692 = vmatpush1.bf16.msra.mxu0 %v3563
    %3693 = vmatprep.subr.bf16.mxu0 %v3566
    %3694 = vmatpush1.bf16.msra.mxu0 %v3565
    %3695 = vmatprep.subr.bf16.mxu0 %v3568
    %3696 = vmatpush1.bf16.msra.mxu0 %v3567
    %3697 = vmatprep.subr.bf16.mxu0 %v3570
    %3698 = vmatpush1.bf16.msra.mxu0 %v3569
    %3699 = vmatprep.subr.bf16.mxu0 %v3572
    %3700 = vmatpush1.bf16.msra.mxu0 %v3571
    %3701 = vmatprep.subr.bf16.mxu0 %v3574
    %3702 = vmatpush1.bf16.msra.mxu0 %v3573
    %3703 = vmatprep.subr.bf16.mxu0 %v3576
    %3704 = vmatpush1.bf16.msra.mxu0 %v3575
    %3705 = vmatprep.mubr.bf16.mxu0 %v3274
    %3706 = vmatmul.mubr.bf16.gmra.mrb[0].mxu0 %v3273
    %v3707 = vpop.f32.mrb[0].mxu0
    %v3708 = vadd.f32 %v3346, %v3707
    %v3709 = vpop.f32.mrb[0].mxu0
    %v3710 = vadd.f32 %v3350, %v3709
    %v3711 = vpop.f32.mrb[0].mxu0
    %v3712 = vpop.f32.mrb[0].mxu0
    %3713 = vdwg.mxu0
    %3714 = vmatprep.subr.bf16.mxu0 %v3578
    %3715 = vmatpush1.bf16.msra.mxu0 %v3577
    %3716 = vmatprep.subr.bf16.mxu0 %v3580
    %3717 = vmatpush1.bf16.msra.mxu0 %v3579
    %3718 = vmatprep.subr.bf16.mxu0 %v3582
    %3719 = vmatpush1.bf16.msra.mxu0 %v3581
    %3720 = vmatprep.subr.bf16.mxu0 %v3584
    %3721 = vmatpush1.bf16.msra.mxu0 %v3583
    %3722 = vmatprep.subr.bf16.mxu0 %v3586
    %3723 = vmatpush1.bf16.msra.mxu0 %v3585
    %3724 = vmatprep.subr.bf16.mxu0 %v3588
    %3725 = vmatpush1.bf16.msra.mxu0 %v3587
    %3726 = vmatprep.subr.bf16.mxu0 %v3590
    %3727 = vmatpush1.bf16.msra.mxu0 %v3589
    %3728 = vmatprep.subr.bf16.mxu0 %v3592
    %3729 = vmatpush1.bf16.msra.mxu0 %v3591
    %3730 = vmatprep.subr.bf16.mxu0 %v3594
    %3731 = vmatpush1.bf16.msra.mxu0 %v3593
    %3732 = vmatprep.subr.bf16.mxu0 %v3596
    %3733 = vmatpush1.bf16.msra.mxu0 %v3595
    %3734 = vmatprep.subr.bf16.mxu0 %v3598
    %3735 = vmatpush1.bf16.msra.mxu0 %v3597
    %3736 = vmatprep.subr.bf16.mxu0 %v3600
    %3737 = vmatpush1.bf16.msra.mxu0 %v3599
    %3738 = vmatprep.subr.bf16.mxu0 %v3602
    %3739 = vmatpush1.bf16.msra.mxu0 %v3601
    %3740 = vmatprep.subr.bf16.mxu0 %v3604
    %3741 = vmatpush1.bf16.msra.mxu0 %v3603
    %3742 = vmatprep.subr.bf16.mxu0 %v3606
    %3743 = vmatpush1.bf16.msra.mxu0 %v3605
    %3744 = vmatprep.subr.bf16.mxu0 %v3608
    %3745 = vmatpush1.bf16.msra.mxu0 %v3607
    %3746 = vmatprep.mubr.bf16.mxu0 %v3276
    %3747 = vmatmul.mubr.bf16.gmra.mrb[0].mxu0 %v3275
    %v3748 = vpop.f32.mrb[0].mxu0
    %v3749 = vadd.f32 %v3708, %v3748
    %v3750 = vpop.f32.mrb[0].mxu0
    %v3751 = vadd.f32 %v3710, %v3750
    %v3752 = vpop.f32.mrb[0].mxu0
    %v3753 = vpop.f32.mrb[0].mxu0
    %3754 = vdwg.mxu0
    %v3755 = vmax.f32 %v3749, 0.0
    %v3756 = vmax.f32 %v3751, 0.0
    %v3757 = vpack.c.bf16 %v3755, %v3755
    %v3758 = vpack.c.bf16 %v3756, %v3756
    %v3759 = vld [vmem:[%s6] sm:$0xf]
    %v3760 = vld [vmem:[%s6 + $0x4] sm:$0xf]
    %v3761 = vld [vmem:[%s6 + $0x8] sm:$0xf]
    %v3762 = vld [vmem:[%s6 + $0xc] sm:$0xf]
    %v3763 = vld [vmem:[%s6 + $0x10] sm:$0xf]
    %v3764 = vld [vmem:[%s6 + $0x14] sm:$0xf]
    %v3765 = vld [vmem:[%s6 + $0x18] sm:$0xf]
    %v3766 = vld [vmem:[%s6 + $0x1c] sm:$0xf]
    %v3767 = vld [vmem:[%s6 + $0x20] sm:$0xf]
    %v3768 = vld [vmem:[%s6 + $0x24] sm:$0xf]
    %v3769 = vld [vmem:[%s6 + $0x28] sm:$0xf]
    %v3770 = vld [vmem:[%s6 + $0x2c] sm:$0xf]
    %v3771 = vld [vmem:[%s6 + $0x30] sm:$0xf]
    %v3772 = vld [vmem:[%s6 + $0x34] sm:$0xf]
    %v3773 = vld [vmem:[%s6 + $0x38] sm:$0xf]
    %v3774 = vld [vmem:[%s6 + $0x3c] sm:$0xf]
    %v3775 = vld [vmem:[%s6 + $0x40] sm:$0xf]
    %v3776 = vld [vmem:[%s6 + $0x44] sm:$0xf]
    %v3777 = vld [vmem:[%s6 + $0x48] sm:$0xf]
    %v3778 = vld [vmem:[%s6 + $0x4c] sm:$0xf]
    %v3779 = vld [vmem:[%s6 + $0x50] sm:$0xf]
    %v3780 = vld [vmem:[%s6 + $0x54] sm:$0xf]
    %v3781 = vld [vmem:[%s6 + $0x58] sm:$0xf]
    %v3782 = vld [vmem:[%s6 + $0x5c] sm:$0xf]
    %v3783 = vld [vmem:[%s6 + $0x60] sm:$0xf]
    %v3784 = vld [vmem:[%s6 + $0x64] sm:$0xf]
    %v3785 = vld [vmem:[%s6 + $0x68] sm:$0xf]
    %v3786 = vld [vmem:[%s6 + $0x6c] sm:$0xf]
    %v3787 = vld [vmem:[%s6 + $0x70] sm:$0xf]
    %v3788 = vld [vmem:[%s6 + $0x74] sm:$0xf]
    %v3789 = vld [vmem:[%s6 + $0x78] sm:$0xf]
    %v3790 = vld [vmem:[%s6 + $0x7c] sm:$0xf]
    %v3791 = vld [vmem:[%s7] sm:$0x1]
    %v3793 = vlaneseq
    %v3794 = vshrl.u32 %v3793, 7
    %v3795 = vsub.s32 0, %v3794
    %v3796 = vrot.slane %v3791, %v3795
    %v3830 = vunpack.c.l.b16 %v3759
    %v3831 = vunpack.c.l.b16 %v3760
    %v3832 = vunpack.c.l.b16 %v3761
    %v3833 = vunpack.c.l.b16 %v3762
    %v3834 = vunpack.c.l.b16 %v3763
    %v3835 = vunpack.c.l.b16 %v3764
    %v3836 = vunpack.c.l.b16 %v3765
    %v3837 = vunpack.c.l.b16 %v3766
    %v3838 = vunpack.c.l.b16 %v3767
    %v3839 = vunpack.c.l.b16 %v3768
    %v3840 = vunpack.c.l.b16 %v3769
    %v3841 = vunpack.c.l.b16 %v3770
    %v3842 = vunpack.c.l.b16 %v3771
    %v3843 = vunpack.c.l.b16 %v3772
    %v3844 = vunpack.c.l.b16 %v3773
    %v3845 = vunpack.c.l.b16 %v3774
    %v3846 = vunpack.c.l.b16 %v3775
    %v3847 = vunpack.c.l.b16 %v3776
    %v3848 = vunpack.c.l.b16 %v3777
    %v3849 = vunpack.c.l.b16 %v3778
    %v3850 = vunpack.c.l.b16 %v3779
    %v3851 = vunpack.c.l.b16 %v3780
    %v3852 = vunpack.c.l.b16 %v3781
    %v3853 = vunpack.c.l.b16 %v3782
    %v3854 = vunpack.c.l.b16 %v3783
    %v3855 = vunpack.c.l.b16 %v3784
    %v3856 = vunpack.c.l.b16 %v3785
    %v3857 = vunpack.c.l.b16 %v3786
    %v3858 = vunpack.c.l.b16 %v3787
    %v3859 = vunpack.c.l.b16 %v3788
    %v3860 = vunpack.c.l.b16 %v3789
    %v3861 = vunpack.c.l.b16 %v3790
    %v3862 = vpack.c.b16 %v3831, %v3830
    %v3863 = vpack.c.b16 %v3833, %v3832
    %v3864 = vpack.c.b16 %v3835, %v3834
    %v3865 = vpack.c.b16 %v3837, %v3836
    %v3866 = vpack.c.b16 %v3839, %v3838
    %v3867 = vpack.c.b16 %v3841, %v3840
    %v3868 = vpack.c.b16 %v3843, %v3842
    %v3869 = vpack.c.b16 %v3845, %v3844
    %v3870 = vpack.c.b16 %v3847, %v3846
    %v3871 = vpack.c.b16 %v3849, %v3848
    %v3872 = vpack.c.b16 %v3851, %v3850
    %v3873 = vpack.c.b16 %v3853, %v3852
    %v3874 = vpack.c.b16 %v3855, %v3854
    %v3875 = vpack.c.b16 %v3857, %v3856
    %v3876 = vpack.c.b16 %v3859, %v3858
    %v3877 = vpack.c.b16 %v3861, %v3860
    %3894 = vmatprep.subr.bf16.mxu0 0
    %3895 = vmatpush1.bf16.msra.mxu0 %v3862
    %3896 = vmatprep.subr.bf16.mxu0 0
    %3897 = vmatpush1.bf16.msra.mxu0 %v3863
    %3898 = vmatprep.subr.bf16.mxu0 0
    %3899 = vmatpush1.bf16.msra.mxu0 %v3864
    %3900 = vmatprep.subr.bf16.mxu0 0
    %3901 = vmatpush1.bf16.msra.mxu0 %v3865
    %3902 = vmatprep.subr.bf16.mxu0 0
    %3903 = vmatpush1.bf16.msra.mxu0 %v3866
    %3904 = vmatprep.subr.bf16.mxu0 0
    %3905 = vmatpush1.bf16.msra.mxu0 %v3867
    %3906 = vmatprep.subr.bf16.mxu0 0
    %3907 = vmatpush1.bf16.msra.mxu0 %v3868
    %3908 = vmatprep.subr.bf16.mxu0 0
    %3909 = vmatpush1.bf16.msra.mxu0 %v3869
    %3910 = vmatprep.subr.bf16.mxu0 0
    %3911 = vmatpush1.bf16.msra.mxu0 %v3870
    %3912 = vmatprep.subr.bf16.mxu0 0
    %3913 = vmatpush1.bf16.msra.mxu0 %v3871
    %3914 = vmatprep.subr.bf16.mxu0 0
    %3915 = vmatpush1.bf16.msra.mxu0 %v3872
    %3916 = vmatprep.subr.bf16.mxu0 0
    %3917 = vmatpush1.bf16.msra.mxu0 %v3873
    %3918 = vmatprep.subr.bf16.mxu0 0
    %3919 = vmatpush1.bf16.msra.mxu0 %v3874
    %3920 = vmatprep.subr.bf16.mxu0 0
    %3921 = vmatpush1.bf16.msra.mxu0 %v3875
    %3922 = vmatprep.subr.bf16.mxu0 0
    %3923 = vmatpush1.bf16.msra.mxu0 %v3876
    %3924 = vmatprep.subr.bf16.mxu0 0
    %3925 = vmatpush1.bf16.msra.mxu0 %v3877
    %3926 = vmatprep.mubr.bf16.mxu0 %v3758
    %3927 = vmatmul.mubr.bf16.gmra.mrb[0].mxu0 %v3757
    %v3928 = vpop.f32.mrb[0].mxu0
    %v3929 = vadd.f32 %v3796, %v3928
    %v3930 = vpop.f32.mrb[0].mxu0
    %v3931 = vpop.f32.mrb[0].mxu0
    %v3932 = vpop.f32.mrb[0].mxu0
    %3933 = vdwg.mxu0
    %v3934 = vmax.f32 %v3929, 0.0
    %v3935 = vpack.c.bf16 %v3934, %v3934
    %v3936 = vld [vmem:[%s8] sm:$0xf]
    %v3937 = vld [vmem:[%s8 + $0x4] sm:$0xf]
    %v3938 = vld [vmem:[%s8 + $0x8] sm:$0xf]
    %v3939 = vld [vmem:[%s8 + $0xc] sm:$0xf]
    %v3940 = vld [vmem:[%s8 + $0x10] sm:$0xf]
    %v3941 = vld [vmem:[%s8 + $0x14] sm:$0xf]
    %v3942 = vld [vmem:[%s8 + $0x18] sm:$0xf]
    %v3943 = vld [vmem:[%s8 + $0x1c] sm:$0xf]
    %v3944 = vld [vmem:[%s8 + $0x20] sm:$0xf]
    %v3945 = vld [vmem:[%s8 + $0x24] sm:$0xf]
    %v3946 = vld [vmem:[%s8 + $0x28] sm:$0xf]
    %v3947 = vld [vmem:[%s8 + $0x2c] sm:$0xf]
    %v3948 = vld [vmem:[%s8 + $0x30] sm:$0xf]
    %v3949 = vld [vmem:[%s8 + $0x34] sm:$0xf]
    %v3950 = vld [vmem:[%s8 + $0x38] sm:$0xf]
    %v3951 = vld [vmem:[%s8 + $0x3c] sm:$0xf]
    %v3952 = vld [vmem:[%s9] sm:$0x1]
    %v3954 = vlaneseq
    %v3955 = vshrl.u32 %v3954, 7
    %v3956 = vsub.s32 0, %v3955
    %v3957 = vrot.slane %v3952, %v3956
    %v3975 = vunpack.c.l.b16 %v3936
    %v3976 = vunpack.c.l.b16 %v3937
    %v3977 = vunpack.c.l.b16 %v3938
    %v3978 = vunpack.c.l.b16 %v3939
    %v3979 = vunpack.c.l.b16 %v3940
    %v3980 = vunpack.c.l.b16 %v3941
    %v3981 = vunpack.c.l.b16 %v3942
    %v3982 = vunpack.c.l.b16 %v3943
    %v3983 = vunpack.c.l.b16 %v3944
    %v3984 = vunpack.c.l.b16 %v3945
    %v3985 = vunpack.c.l.b16 %v3946
    %v3986 = vunpack.c.l.b16 %v3947
    %v3987 = vunpack.c.l.b16 %v3948
    %v3988 = vunpack.c.l.b16 %v3949
    %v3989 = vunpack.c.l.b16 %v3950
    %v3990 = vunpack.c.l.b16 %v3951
    %v3991 = vpack.c.b16 %v3976, %v3975
    %v3992 = vpack.c.b16 %v3978, %v3977
    %v3993 = vpack.c.b16 %v3980, %v3979
    %v3994 = vpack.c.b16 %v3982, %v3981
    %v3995 = vpack.c.b16 %v3984, %v3983
    %v3996 = vpack.c.b16 %v3986, %v3985
    %v3997 = vpack.c.b16 %v3988, %v3987
    %v3998 = vpack.c.b16 %v3990, %v3989
    %4007 = vmatprep.subr.bf16.mxu0 0
    %4008 = vmatpush1.bf16.msra.mxu0 %v3991
    %4009 = vmatprep.subr.bf16.mxu0 0
    %4010 = vmatpush1.bf16.msra.mxu0 %v3992
    %4011 = vmatprep.subr.bf16.mxu0 0
    %4012 = vmatpush1.bf16.msra.mxu0 %v3993
    %4013 = vmatprep.subr.bf16.mxu0 0
    %4014 = vmatpush1.bf16.msra.mxu0 %v3994
    %4015 = vmatprep.subr.bf16.mxu0 0
    %4016 = vmatpush1.bf16.msra.mxu0 %v3995
    %4017 = vmatprep.subr.bf16.mxu0 0
    %4018 = vmatpush1.bf16.msra.mxu0 %v3996
    %4019 = vmatprep.subr.bf16.mxu0 0
    %4020 = vmatpush1.bf16.msra.mxu0 %v3997
    %4021 = vmatprep.subr.bf16.mxu0 0
    %4022 = vmatpush1.bf16.msra.mxu0 %v3998
    %4023 = vmatprep.subr.bf16.mxu0 0
    %4024 = vmatpush1.bf16.msra.mxu0 0
    %4025 = vmatprep.subr.bf16.mxu0 0
    %4026 = vmatpush1.bf16.msra.mxu0 0
    %4027 = vmatprep.subr.bf16.mxu0 0
    %4028 = vmatpush1.bf16.msra.mxu0 0
    %4029 = vmatprep.subr.bf16.mxu0 0
    %4030 = vmatpush1.bf16.msra.mxu0 0
    %4031 = vmatprep.subr.bf16.mxu0 0
    %4032 = vmatpush1.bf16.msra.mxu0 0
    %4033 = vmatprep.subr.bf16.mxu0 0
    %4034 = vmatpush1.bf16.msra.mxu0 0
    %4035 = vmatprep.subr.bf16.mxu0 0
    %4036 = vmatpush1.bf16.msra.mxu0 0
    %4037 = vmatprep.subr.bf16.mxu0 0
    %4038 = vmatpush1.bf16.msra.mxu0 0
    %4039 = vmatprep.mubr.bf16.mxu0 0
    %4040 = vmatmul.mubr.bf16.gmra.mrb[0].mxu0 %v3935
    %v4041 = vpop.f32.mrb[0].mxu0
    %v4042 = vadd.f32 %v3957, %v4041
    %v4043 = vpop.f32.mrb[0].mxu0
    %v4044 = vpop.f32.mrb[0].mxu0
    %v4045 = vpop.f32.mrb[0].mxu0
    %4046 = vdwg.mxu0
    %4047 = vst [vmem:[%s10] sm:$0xff] %v4042
    // Predicated region
    $region46: #{mlp_classifier_forward.1} parent=1 // pred_check
      _
    $region47: #{mlp_classifier_forward.1} parent=1 // pred_check_branch
      %4049 = sbr.rel (0) target = $region49
    $region48: #{mlp_classifier_forward.1} parent=1 // pred_region
      _
    $region49: #{mlp_classifier_forward.1} parent=1 // pred_fallthru
      _
    // Predicated region
    $region50: #{mlp_classifier_forward.1} parent=1 // pred_check
      _
    $region51: #{mlp_classifier_forward.1} parent=1 // pred_check_branch
      %4051 = sbr.rel (0) target = $region53
    $region52: #{mlp_classifier_forward.1} parent=1 // pred_region
      _
    $region53: #{mlp_classifier_forward.1} parent=1 // pred_fallthru
      _
    %4052 = vsyncpa [#allocation3], 1

</llo_original>
